<compile_context>
chip_gen: v5e
topology: v5e:2x2
jax: 0.10.0
libtpu: 0.0.40
codegen_flags: <defaults>
</compile_context>

<pallas_src>
import jax
import jax.numpy as jnp
from jax import lax
from jax.experimental import pallas as pl
from jax.experimental.pallas import tpu as pltpu


def conv3x3_merged_kernel(x_ref, w_ref, b_ref, o_ref):
    # x_ref: (M, Kp)       bf16 pre-shifted im2row LHS (M = N*H, Kp = pad128(3*(W+2)*Cin))
    # w_ref: (Kp, W*Cout)  bf16 merged banded weights
    # b_ref: (1, W*Cout)   f32 bias tiled per output column (col = w*Cout + co)
    # o_ref: (M, W*Cout)   f32 lane-dense output slab
    acc = jnp.dot(x_ref[...], w_ref[...], preferred_element_type=jnp.float32)
    o_ref[...] = (acc + b_ref[...]).astype(o_ref.dtype)


def build_merged_banded_weights(w_oihw, W, k_align=128, dtype=jnp.bfloat16):
    """Merged banded weight matrix for the 3x3 'same' conv.

    B[dy*(W+2)*Cin + a*Cin + ci, w*Cout + co] = w[co, ci, dy, a-w]
    for 0 <= a-w <= 2, else 0.  Built ONCE (outside the per-call jit graph).
    """
    w_t = jnp.transpose(w_oihw, (2, 3, 1, 0)).astype(jnp.float32)  # (3, 3, Cin, Cout)
    bands = []
    for dy in range(3):
        acc = None
        for dx in range(3):
            # shift_eye[a, w] == 1  iff  a == w + dx
            shift_eye = jnp.eye(W + 2, W, k=-dx, dtype=jnp.float32)
            term = jnp.kron(shift_eye, w_t[dy, dx])  # ((W+2)*Cin, W*Cout)
            acc = term if acc is None else acc + term
        bands.append(acc)
    wb = jnp.concatenate(bands, axis=0)              # (3*(W+2)*Cin, W*Cout)
    k = wb.shape[0]
    kp = ((k + k_align - 1) // k_align) * k_align    # pad K to multiple of 128
    wb = jnp.pad(wb, ((0, kp - k), (0, 0)))
    return wb.astype(dtype)


def _build_shifted_lhs(x_nchw, kp, dtype):
    """Pre-shifted im2row LHS: (N*H, Kp) with lanes [row h+0 | row h+1 | row h+2]."""
    N, Cin, H, W = x_nchw.shape
    x_nhwc = jnp.transpose(x_nchw, (0, 2, 3, 1)).astype(dtype)   # (N, H, W, Cin)
    x_pad = jnp.pad(x_nhwc, ((0, 0), (1, 1), (1, 1), (0, 0)))    # (N, H+2, W+2, Cin)
    x_rows = x_pad.reshape(N, H + 2, (W + 2) * Cin)              # (N, H+2, 576)
    x_shift = jnp.concatenate(
        [x_rows[:, 0:H], x_rows[:, 1:H + 1], x_rows[:, 2:H + 2]], axis=-1)
    x_lhs = x_shift.reshape(N * H, 3 * (W + 2) * Cin)            # (N*H, 1728)
    k = x_lhs.shape[1]
    if kp > k:
        x_lhs = jnp.pad(x_lhs, ((0, 0), (0, kp - k)))            # (N*H, 1792)
    return x_lhs


def model_forward(x_nchw, wb_merged, bias_tiled):
    """Reproduces Model.forward: conv3x3 'same' -> transpose(2,3) -> transpose(1,2).

    wb_merged and bias_tiled are precomputed constants (built once, not per call).
    """
    N, Cin, H, W = x_nchw.shape
    kp, wcout = wb_merged.shape
    Cout = wcout // W
    M = N * H

    x_lhs = _build_shifted_lhs(x_nchw, kp, wb_merged.dtype)      # (M, Kp)

    y = pl.pallas_call(
        conv3x3_merged_kernel,
        out_shape=jax.ShapeDtypeStruct((M, wcout), jnp.float32),
        grid_spec=pltpu.PrefetchScalarGridSpec(
            num_scalar_prefetch=0,
            grid=(1,),                                           # single step: N folded into M
            in_specs=[
                pl.BlockSpec((M, kp), lambda i: (0, 0)),
                pl.BlockSpec((kp, wcout), lambda i: (0, 0)),
                pl.BlockSpec((1, wcout), lambda i: (0, 0)),
            ],
            out_specs=pl.BlockSpec((M, wcout), lambda i: (0, 0)),
        ),
        compiler_params=pltpu.CompilerParams(
            dimension_semantics=("arbitrary",),
            allow_input_fusion=[True, False, False],             # fuse activation glue if profitable
        ),
    )(x_lhs, wb_merged, bias_tiled)

    y4 = y.reshape(N, H, W, Cout)                                # free split of the lane axis
    # out[n, w, c, h] = conv_nchw[n, c, h, w] = y4[n, h, w, c]
    return jnp.transpose(y4, (0, 2, 3, 1))                       # (N, W, Cout, H)
    # TODO(synk): .contiguous() in the PyTorch module is a layout no-op in JAX.


if __name__ == "__main__":
    # Small shapes consistent with Conv2d(32, 32, 3): Cin must be 32.
    N, C, H, W = 2, 32, 16, 16
    Cout = 32

    key = jax.random.PRNGKey(0)
    kx, kw, kb = jax.random.split(key, 3)

    x = jax.random.normal(kx, (N, C, H, W), dtype=jnp.float32)
    fan_in = C * 3 * 3
    bound = 1.0 / (fan_in ** 0.5)
    w = jax.random.uniform(kw, (Cout, C, 3, 3), jnp.float32, -bound, bound)
    b = jax.random.uniform(kb, (Cout,), jnp.float32, -bound, bound)

    # --- One-time parameter preparation (cached outside the per-call jit) ---
    wb_merged = build_merged_banded_weights(w, W)                    # (1792, 512) bf16
    bias_tiled = jnp.tile(b, W).reshape(1, W * Cout).astype(jnp.float32)  # (1, 512)
    wb_merged, bias_tiled = jax.block_until_ready((wb_merged, bias_tiled))

    fwd = jax.jit(model_forward)
    out = jax.block_until_ready(fwd(x, wb_merged, bias_tiled))
    assert out.shape == (N, W, Cout, H), out.shape

    # Reference check against XLA conv (same semantics as PyTorch Conv2d).
    ref_nchw = lax.conv_general_dilated(
        x, w, window_strides=(1, 1), padding=((1, 1), (1, 1)),
        dimension_numbers=("NCHW", "OIHW", "NCHW")) + b[None, :, None, None]
    ref = jnp.transpose(ref_nchw, (0, 3, 1, 2))                      # (N, W, C, H)

    # bf16 weights + activations with f32 accumulation -> relaxed tolerance.
    max_err = float(jnp.max(jnp.abs(out - ref)))
    assert jnp.allclose(out, ref, atol=2e-2, rtol=2e-2), max_err

    print("KERNEL_OK")
</pallas_src>

<mosaic_0001>
module attributes {stable_mosaic.version = 11 : i64} {
  func.func @conv3x3_merged_kernel(%arg0: i32, %arg1: memref<32x1792xbf16, #tpu.memory_space<vmem>>, %arg2: memref<1792x512xbf16, #tpu.memory_space<vmem>>, %arg3: memref<1x512xf32, #tpu.memory_space<vmem>>, %arg4: memref<32x512xf32, #tpu.memory_space<vmem>>) attributes {dimension_semantics = [#tpu.dimension_semantics<arbitrary>], iteration_bounds = array<i64: 1>, scalar_prefetch = 0 : i64, scratch_operands = 0 : i64, tpu.core_type = #tpu.core_type<tc>, window_params = [{pipeline_mode = #tpu.pipeline_mode<synchronous>, transform_indices = @transform_0, window_bounds = array<i64: 32, 1792>}, {pipeline_mode = #tpu.pipeline_mode<synchronous>, transform_indices = @transform_1, window_bounds = array<i64: 1792, 512>}, {pipeline_mode = #tpu.pipeline_mode<synchronous>, transform_indices = @transform_2, window_bounds = array<i64: 1, 512>}, {pipeline_mode = #tpu.pipeline_mode<synchronous>, transform_indices = @transform_3, window_bounds = array<i64: 32, 512>}]} {
    %c0 = arith.constant 0 : index
    %c0_0 = arith.constant 0 : index
    %0 = vector.load %arg1[%c0, %c0_0] : memref<32x1792xbf16, #tpu.memory_space<vmem>>, vector<32x1792xbf16>
    %c0_1 = arith.constant 0 : index
    %c0_2 = arith.constant 0 : index
    %1 = vector.load %arg2[%c0_1, %c0_2] : memref<1792x512xbf16, #tpu.memory_space<vmem>>, vector<1792x512xbf16>
    %cst = arith.constant dense<0.000000e+00> : vector<32x512xf32>
    %2 = tpu.matmul %0, %1, %cst {dimension_numbers = #tpu.dot_dimension_numbers<[1], [0], [0], [1], [0, 0, 1, 1], [], []>} : vector<32x1792xbf16>, vector<1792x512xbf16>, vector<32x512xf32> -> vector<32x512xf32>
    %c0_3 = arith.constant 0 : index
    %c0_4 = arith.constant 0 : index
    %3 = vector.load %arg3[%c0_3, %c0_4] : memref<1x512xf32, #tpu.memory_space<vmem>>, vector<1x512xf32>
    %4 = vector.broadcast %3 : vector<1x512xf32> to vector<32x512xf32>
    %5 = arith.addf %2, %4 : vector<32x512xf32>
    %c0_5 = arith.constant 0 : index
    %c0_6 = arith.constant 0 : index
    %6 = vector.load %arg4[%c0_5, %c0_6] : memref<32x512xf32, #tpu.memory_space<vmem>>, vector<32x512xf32>
    tpu.vector_store %arg4[%c0_5, %c0_6], %5 {strides = array<i32>} : memref<32x512xf32, #tpu.memory_space<vmem>>, vector<32x512xf32>,
    return
  }
  func.func @transform_0(%arg0: i32) -> (i32, i32) {
    %c0_i32 = arith.constant 0 : i32
    %c0_i32_0 = arith.constant 0 : i32
    %c0_i32_1 = arith.constant 0 : i32
    return %c0_i32, %c0_i32_0 : i32, i32
  }
  func.func @transform_1(%arg0: i32) -> (i32, i32) {
    %c0_i32 = arith.constant 0 : i32
    %c0_i32_0 = arith.constant 0 : i32
    %c0_i32_1 = arith.constant 0 : i32
    return %c0_i32, %c0_i32_0 : i32, i32
  }
  func.func @transform_2(%arg0: i32) -> (i32, i32) {
    %c0_i32 = arith.constant 0 : i32
    %c0_i32_0 = arith.constant 0 : i32
    %c0_i32_1 = arith.constant 0 : i32
    return %c0_i32, %c0_i32_0 : i32, i32
  }
  func.func @transform_3(%arg0: i32) -> (i32, i32) {
    %c0_i32 = arith.constant 0 : i32
    %c0_i32_0 = arith.constant 0 : i32
    %c0_i32_1 = arith.constant 0 : i32
    return %c0_i32, %c0_i32_0 : i32, i32
  }
}

</mosaic_0001>

<llo_original>
// kernel: model_forward.2
$region0: #{model_forward.2}
  #allocation0 [shape = 'u32[]', space=smem, size = 0x4, offset = 0x4, fixed_abs, tag = 'smem constant byte address 0x4 - core index']
  #allocation1 [shape = 'u32[72,128]{1,0:T(1,128)}', space=vmem, size = 0x9000, scoped, tag = 'internal scratch']
  #allocation2 [shape = 'u32[2048]{0}', space=vmem, size = 0x2000, scoped, tag = 'scoped memory for model_forward.2']
  #allocation3 [shape = 'u32[2048]{0}', space=vmem, size = 0x2000, scoped, tag = 'scoped memory for model_forward.2']
  #allocation4 [shape = 'u32[2048]{0}', space=vmem, size = 0x2000, scoped, tag = 'scoped memory for model_forward.2']
  #allocation5 [shape = 'u32[2048]{0}', space=vmem, size = 0x2000, scoped, tag = 'scoped memory for model_forward.2']
  #allocation6 [shape = 'u32[2048]{0}', space=vmem, size = 0x2000, scoped, tag = 'scoped memory for model_forward.2']
  %s0 = inlined_call_operand.vmem [shape: bf16[1792,512], index: 0, kind: input, shape index: {}]
  %s1 = inlined_call_operand.vmem [shape: f32[1,512], index: 1, kind: input, shape index: {}]
  %s2 = inlined_call_operand.vmem [shape: bf16[32,1728], index: 2, kind: input, shape index: {}]
  %s3 = inlined_call_operand.<no memory space> [shape: bf16[], index: 3, kind: input, shape index: {}]
  %s4 = inlined_call_operand.vmem [shape: f32[32,512], index: 4, kind: output, shape index: {}]
  %s5 = sld [smem:[#allocation0]]
  $region22: #{model_forward.2} parent=0
    _
  %s7 = ssub.s32 1, %s5
  %s8 = scalar_select 0, %s7, %s5
  %v9 = vstv %s3
  %v10 = vunpack.i.l.bf16 %v9
  %v12 = vunpack.i.h.bf16 %v9
  $region1: #{model_forward.2} parent=0
    #allocation7 [shape = 'u8[114688]{0}', space=vmem, size = 0x1c000, dematerialized = true, scoped, tag = 'FusionAdapter Buffer %fusion.1 = bf16[32,1792]{1,0:T(8,128)(2,1)} fusion(%param_2.1, %param_3), kind=kLoop, calls=%fused_computation.3.clone, metadata={op_name="jit(model_forward)/jit(_pad)/pad" stack_frame_id=17}']
    // Predicated region
    $region2: #{model_forward.2} parent=1 // pred_check
      _
    $region3: #{model_forward.2} parent=1 // pred_check_branch
      %15 = sbr.rel (0) target = $region5
    $region4: #{model_forward.2} parent=1 // pred_region
      _
    $region5: #{model_forward.2} parent=1 // pred_fallthru
      _
    // Predicated region
    $region6: #{model_forward.2} parent=1 // pred_check
      _
    $region7: #{model_forward.2} parent=1 // pred_check_branch
      %17 = sbr.rel (0) target = $region9
    $region8: #{model_forward.2} parent=1 // pred_region
      _
    $region9: #{model_forward.2} parent=1 // pred_fallthru
      _
    // Predicated region
    $region10: #{model_forward.2} parent=1 // pred_check
      _
    $region11: #{model_forward.2} parent=1 // pred_check_branch
      %19 = sbr.rel (0) target = $region13
    $region12: #{model_forward.2} parent=1 // pred_region
      _
    $region13: #{model_forward.2} parent=1 // pred_fallthru
      _
    %v20 = vld [vmem:[%s2] sm:$0xf]
    %v21 = vunpack.c.l.bf16 %v20
    %v22 = vunpack.c.h.bf16 %v20
    %v23 = vlaneseq
    %v24 = vand.u32 %v23, 127
    %vm26 = vcmp.lt.s32.totalorder %v24, 1728
    %v27 = vsel %vm26, %v21, %v10
    %v28 = vpack.c.bf16 0.0, %v27
    %s30 = ssub.s32 16, 1
    %31 = vst [vmem:[#allocation7] sm:%s30] %v28
    %s32 = scalar_lea.vmem %s2, 4
    %v33 = vld [vmem:[%s32] sm:$0xf]
    %v34 = vunpack.c.l.bf16 %v33
    %v35 = vunpack.c.h.bf16 %v33
    %v36 = vlaneseq
    %v37 = vand.u32 %v36, 127
    %v38 = vadd.s32 %v37, 128
    %vm39 = vcmp.lt.s32.totalorder %v38, 1728
    %v40 = vsel %vm39, %v34, %v10
    %s41 = scalar_lea.vmem [#allocation7], 4
    %v42 = vpack.c.bf16 0.0, %v40
    %s44 = ssub.s32 16, 1
    %45 = vst [vmem:[%s41] sm:%s44] %v42
    %s46 = scalar_lea.vmem %s2, 8
    %v47 = vld [vmem:[%s46] sm:$0xf]
    %v48 = vunpack.c.l.bf16 %v47
    %v49 = vunpack.c.h.bf16 %v47
    %v50 = vlaneseq
    %v51 = vand.u32 %v50, 127
    %v52 = vadd.s32 %v51, 256
    %vm53 = vcmp.lt.s32.totalorder %v52, 1728
    %v54 = vsel %vm53, %v48, %v10
    %s55 = scalar_lea.vmem [#allocation7], 8
    %v56 = vpack.c.bf16 0.0, %v54
    %s58 = ssub.s32 16, 1
    %59 = vst [vmem:[%s55] sm:%s58] %v56
    %s60 = scalar_lea.vmem %s2, 12
    %v61 = vld [vmem:[%s60] sm:$0xf]
    %v62 = vunpack.c.l.bf16 %v61
    %v63 = vunpack.c.h.bf16 %v61
    %v64 = vlaneseq
    %v65 = vand.u32 %v64, 127
    %v66 = vadd.s32 %v65, 384
    %vm67 = vcmp.lt.s32.totalorder %v66, 1728
    %v68 = vsel %vm67, %v62, %v10
    %s69 = scalar_lea.vmem [#allocation7], 12
    %v70 = vpack.c.bf16 0.0, %v68
    %s72 = ssub.s32 16, 1
    %73 = vst [vmem:[%s69] sm:%s72] %v70
    %s74 = scalar_lea.vmem %s2, 16
    %v75 = vld [vmem:[%s74] sm:$0xf]
    %v76 = vunpack.c.l.bf16 %v75
    %v77 = vunpack.c.h.bf16 %v75
    %v78 = vlaneseq
    %v79 = vand.u32 %v78, 127
    %v80 = vadd.s32 %v79, 512
    %vm81 = vcmp.lt.s32.totalorder %v80, 1728
    %v82 = vsel %vm81, %v76, %v10
    %s83 = scalar_lea.vmem [#allocation7], 16
    %v84 = vpack.c.bf16 0.0, %v82
    %s86 = ssub.s32 16, 1
    %87 = vst [vmem:[%s83] sm:%s86] %v84
    %s88 = scalar_lea.vmem %s2, 20
    %v89 = vld [vmem:[%s88] sm:$0xf]
    %v90 = vunpack.c.l.bf16 %v89
    %v91 = vunpack.c.h.bf16 %v89
    %v92 = vlaneseq
    %v93 = vand.u32 %v92, 127
    %v94 = vadd.s32 %v93, 640
    %vm95 = vcmp.lt.s32.totalorder %v94, 1728
    %v96 = vsel %vm95, %v90, %v10
    %s97 = scalar_lea.vmem [#allocation7], 20
    %v98 = vpack.c.bf16 0.0, %v96
    %s100 = ssub.s32 16, 1
    %101 = vst [vmem:[%s97] sm:%s100] %v98
    %s102 = scalar_lea.vmem %s2, 24
    %v103 = vld [vmem:[%s102] sm:$0xf]
    %v104 = vunpack.c.l.bf16 %v103
    %v105 = vunpack.c.h.bf16 %v103
    %v106 = vlaneseq
    %v107 = vand.u32 %v106, 127
    %v108 = vadd.s32 %v107, 768
    %vm109 = vcmp.lt.s32.totalorder %v108, 1728
    %v110 = vsel %vm109, %v104, %v10
    %s111 = scalar_lea.vmem [#allocation7], 24
    %v112 = vpack.c.bf16 0.0, %v110
    %s114 = ssub.s32 16, 1
    %115 = vst [vmem:[%s111] sm:%s114] %v112
    %s116 = scalar_lea.vmem %s2, 28
    %v117 = vld [vmem:[%s116] sm:$0xf]
    %v118 = vunpack.c.l.bf16 %v117
    %v119 = vunpack.c.h.bf16 %v117
    %v120 = vlaneseq
    %v121 = vand.u32 %v120, 127
    %v122 = vadd.s32 %v121, 896
    %vm123 = vcmp.lt.s32.totalorder %v122, 1728
    %v124 = vsel %vm123, %v118, %v10
    %s125 = scalar_lea.vmem [#allocation7], 28
    %v126 = vpack.c.bf16 0.0, %v124
    %s128 = ssub.s32 16, 1
    %129 = vst [vmem:[%s125] sm:%s128] %v126
    %s130 = scalar_lea.vmem %s2, 32
    %v131 = vld [vmem:[%s130] sm:$0xf]
    %v132 = vunpack.c.l.bf16 %v131
    %v133 = vunpack.c.h.bf16 %v131
    %v134 = vlaneseq
    %v135 = vand.u32 %v134, 127
    %v136 = vadd.s32 %v135, 1024
    %vm137 = vcmp.lt.s32.totalorder %v136, 1728
    %v138 = vsel %vm137, %v132, %v10
    %s139 = scalar_lea.vmem [#allocation7], 32
    %v140 = vpack.c.bf16 0.0, %v138
    %s142 = ssub.s32 16, 1
    %143 = vst [vmem:[%s139] sm:%s142] %v140
    %s144 = scalar_lea.vmem %s2, 36
    %v145 = vld [vmem:[%s144] sm:$0xf]
    %v146 = vunpack.c.l.bf16 %v145
    %v147 = vunpack.c.h.bf16 %v145
    %v148 = vlaneseq
    %v149 = vand.u32 %v148, 127
    %v150 = vadd.s32 %v149, 1152
    %vm151 = vcmp.lt.s32.totalorder %v150, 1728
    %v152 = vsel %vm151, %v146, %v10
    %s153 = scalar_lea.vmem [#allocation7], 36
    %v154 = vpack.c.bf16 0.0, %v152
    %s156 = ssub.s32 16, 1
    %157 = vst [vmem:[%s153] sm:%s156] %v154
    %s158 = scalar_lea.vmem %s2, 40
    %v159 = vld [vmem:[%s158] sm:$0xf]
    %v160 = vunpack.c.l.bf16 %v159
    %v161 = vunpack.c.h.bf16 %v159
    %v162 = vlaneseq
    %v163 = vand.u32 %v162, 127
    %v164 = vadd.s32 %v163, 1280
    %vm165 = vcmp.lt.s32.totalorder %v164, 1728
    %v166 = vsel %vm165, %v160, %v10
    %s167 = scalar_lea.vmem [#allocation7], 40
    %v168 = vpack.c.bf16 0.0, %v166
    %s170 = ssub.s32 16, 1
    %171 = vst [vmem:[%s167] sm:%s170] %v168
    %s172 = scalar_lea.vmem %s2, 44
    %v173 = vld [vmem:[%s172] sm:$0xf]
    %v174 = vunpack.c.l.bf16 %v173
    %v175 = vunpack.c.h.bf16 %v173
    %v176 = vlaneseq
    %v177 = vand.u32 %v176, 127
    %v178 = vadd.s32 %v177, 1408
    %vm179 = vcmp.lt.s32.totalorder %v178, 1728
    %v180 = vsel %vm179, %v174, %v10
    %s181 = scalar_lea.vmem [#allocation7], 44
    %v182 = vpack.c.bf16 0.0, %v180
    %s184 = ssub.s32 16, 1
    %185 = vst [vmem:[%s181] sm:%s184] %v182
    %s186 = scalar_lea.vmem %s2, 48
    %v187 = vld [vmem:[%s186] sm:$0xf]
    %v188 = vunpack.c.l.bf16 %v187
    %v189 = vunpack.c.h.bf16 %v187
    %v190 = vlaneseq
    %v191 = vand.u32 %v190, 127
    %v192 = vadd.s32 %v191, 1536
    %vm193 = vcmp.lt.s32.totalorder %v192, 1728
    %v194 = vsel %vm193, %v188, %v10
    %s195 = scalar_lea.vmem [#allocation7], 48
    %v196 = vpack.c.bf16 0.0, %v194
    %s198 = ssub.s32 16, 1
    %199 = vst [vmem:[%s195] sm:%s198] %v196
    %s200 = scalar_lea.vmem %s2, 52
    %s202 = sor.u32 255, 127
    %s203 = sand.u32 %s202, 85
    %s204 = sshrl.u32 %s203, 1
    %s205 = sor.u32 %s203, %s204
    %s206 = sand.u32 51, %s205
    %s207 = sshrl.u32 %s206, 2
    %s208 = sor.u32 %s206, %s207
    %s209 = sand.u32 15, %s208
    %v210 = vld [vmem:[%s200] sm:%s209]
    %v211 = vunpack.c.l.bf16 %v210
    %v212 = vunpack.c.h.bf16 %v210
    %v213 = vlaneseq
    %v214 = vand.u32 %v213, 127
    %v215 = vadd.s32 %v214, 1664
    %vm216 = vcmp.lt.s32.totalorder %v215, 1728
    %v217 = vsel %vm216, %v211, %v10
    %s218 = scalar_lea.vmem [#allocation7], 52
    %v219 = vpack.c.bf16 0.0, %v217
    %s221 = ssub.s32 16, 1
    %222 = vst [vmem:[%s218] sm:%s221] %v219
    %s223 = scalar_lea.vmem %s2, 56
    %v224 = vld [vmem:[%s223] sm:$0xf]
    %v225 = vunpack.c.l.bf16 %v224
    %v226 = vunpack.c.h.bf16 %v224
    %v227 = vlaneseq
    %v228 = vand.u32 %v227, 127
    %vm230 = vcmp.lt.s32.totalorder %v228, 1728
    %v231 = vsel %vm230, %v225, %v10
    %s232 = scalar_lea.vmem [#allocation7], 56
    %v233 = vpack.c.bf16 0.0, %v231
    %s235 = ssub.s32 16, 1
    %236 = vst [vmem:[%s232] sm:%s235] %v233
    %s237 = scalar_lea.vmem %s2, 60
    %v238 = vld [vmem:[%s237] sm:$0xf]
    %v239 = vunpack.c.l.bf16 %v238
    %v240 = vunpack.c.h.bf16 %v238
    %v241 = vlaneseq
    %v242 = vand.u32 %v241, 127
    %v243 = vadd.s32 %v242, 128
    %vm244 = vcmp.lt.s32.totalorder %v243, 1728
    %v245 = vsel %vm244, %v239, %v10
    %s246 = scalar_lea.vmem [#allocation7], 60
    %v247 = vpack.c.bf16 0.0, %v245
    %s249 = ssub.s32 16, 1
    %250 = vst [vmem:[%s246] sm:%s249] %v247
    %s251 = scalar_lea.vmem %s2, 64
    %v252 = vld [vmem:[%s251] sm:$0xf]
    %v253 = vunpack.c.l.bf16 %v252
    %v254 = vunpack.c.h.bf16 %v252
    %v255 = vlaneseq
    %v256 = vand.u32 %v255, 127
    %v257 = vadd.s32 %v256, 256
    %vm258 = vcmp.lt.s32.totalorder %v257, 1728
    %v259 = vsel %vm258, %v253, %v10
    %s260 = scalar_lea.vmem [#allocation7], 64
    %v261 = vpack.c.bf16 0.0, %v259
    %s263 = ssub.s32 16, 1
    %264 = vst [vmem:[%s260] sm:%s263] %v261
    %s265 = scalar_lea.vmem %s2, 68
    %v266 = vld [vmem:[%s265] sm:$0xf]
    %v267 = vunpack.c.l.bf16 %v266
    %v268 = vunpack.c.h.bf16 %v266
    %v269 = vlaneseq
    %v270 = vand.u32 %v269, 127
    %v271 = vadd.s32 %v270, 384
    %vm272 = vcmp.lt.s32.totalorder %v271, 1728
    %v273 = vsel %vm272, %v267, %v10
    %s274 = scalar_lea.vmem [#allocation7], 68
    %v275 = vpack.c.bf16 0.0, %v273
    %s277 = ssub.s32 16, 1
    %278 = vst [vmem:[%s274] sm:%s277] %v275
    %s279 = scalar_lea.vmem %s2, 72
    %v280 = vld [vmem:[%s279] sm:$0xf]
    %v281 = vunpack.c.l.bf16 %v280
    %v282 = vunpack.c.h.bf16 %v280
    %v283 = vlaneseq
    %v284 = vand.u32 %v283, 127
    %v285 = vadd.s32 %v284, 512
    %vm286 = vcmp.lt.s32.totalorder %v285, 1728
    %v287 = vsel %vm286, %v281, %v10
    %s288 = scalar_lea.vmem [#allocation7], 72
    %v289 = vpack.c.bf16 0.0, %v287
    %s291 = ssub.s32 16, 1
    %292 = vst [vmem:[%s288] sm:%s291] %v289
    %s293 = scalar_lea.vmem %s2, 76
    %v294 = vld [vmem:[%s293] sm:$0xf]
    %v295 = vunpack.c.l.bf16 %v294
    %v296 = vunpack.c.h.bf16 %v294
    %v297 = vlaneseq
    %v298 = vand.u32 %v297, 127
    %v299 = vadd.s32 %v298, 640
    %vm300 = vcmp.lt.s32.totalorder %v299, 1728
    %v301 = vsel %vm300, %v295, %v10
    %s302 = scalar_lea.vmem [#allocation7], 76
    %v303 = vpack.c.bf16 0.0, %v301
    %s305 = ssub.s32 16, 1
    %306 = vst [vmem:[%s302] sm:%s305] %v303
    %s307 = scalar_lea.vmem %s2, 80
    %v308 = vld [vmem:[%s307] sm:$0xf]
    %v309 = vunpack.c.l.bf16 %v308
    %v310 = vunpack.c.h.bf16 %v308
    %v311 = vlaneseq
    %v312 = vand.u32 %v311, 127
    %v313 = vadd.s32 %v312, 768
    %vm314 = vcmp.lt.s32.totalorder %v313, 1728
    %v315 = vsel %vm314, %v309, %v10
    %s316 = scalar_lea.vmem [#allocation7], 80
    %v317 = vpack.c.bf16 0.0, %v315
    %s319 = ssub.s32 16, 1
    %320 = vst [vmem:[%s316] sm:%s319] %v317
    %s321 = scalar_lea.vmem %s2, 84
    %v322 = vld [vmem:[%s321] sm:$0xf]
    %v323 = vunpack.c.l.bf16 %v322
    %v324 = vunpack.c.h.bf16 %v322
    %v325 = vlaneseq
    %v326 = vand.u32 %v325, 127
    %v327 = vadd.s32 %v326, 896
    %vm328 = vcmp.lt.s32.totalorder %v327, 1728
    %v329 = vsel %vm328, %v323, %v10
    %s330 = scalar_lea.vmem [#allocation7], 84
    %v331 = vpack.c.bf16 0.0, %v329
    %s333 = ssub.s32 16, 1
    %334 = vst [vmem:[%s330] sm:%s333] %v331
    %s335 = scalar_lea.vmem %s2, 88
    %v336 = vld [vmem:[%s335] sm:$0xf]
    %v337 = vunpack.c.l.bf16 %v336
    %v338 = vunpack.c.h.bf16 %v336
    %v339 = vlaneseq
    %v340 = vand.u32 %v339, 127
    %v341 = vadd.s32 %v340, 1024
    %vm342 = vcmp.lt.s32.totalorder %v341, 1728
    %v343 = vsel %vm342, %v337, %v10
    %s344 = scalar_lea.vmem [#allocation7], 88
    %v345 = vpack.c.bf16 0.0, %v343
    %s347 = ssub.s32 16, 1
    %348 = vst [vmem:[%s344] sm:%s347] %v345
    %s349 = scalar_lea.vmem %s2, 92
    %v350 = vld [vmem:[%s349] sm:$0xf]
    %v351 = vunpack.c.l.bf16 %v350
    %v352 = vunpack.c.h.bf16 %v350
    %v353 = vlaneseq
    %v354 = vand.u32 %v353, 127
    %v355 = vadd.s32 %v354, 1152
    %vm356 = vcmp.lt.s32.totalorder %v355, 1728
    %v357 = vsel %vm356, %v351, %v10
    %s358 = scalar_lea.vmem [#allocation7], 92
    %v359 = vpack.c.bf16 0.0, %v357
    %s361 = ssub.s32 16, 1
    %362 = vst [vmem:[%s358] sm:%s361] %v359
    %s363 = scalar_lea.vmem %s2, 96
    %v364 = vld [vmem:[%s363] sm:$0xf]
    %v365 = vunpack.c.l.bf16 %v364
    %v366 = vunpack.c.h.bf16 %v364
    %v367 = vlaneseq
    %v368 = vand.u32 %v367, 127
    %v369 = vadd.s32 %v368, 1280
    %vm370 = vcmp.lt.s32.totalorder %v369, 1728
    %v371 = vsel %vm370, %v365, %v10
    %s372 = scalar_lea.vmem [#allocation7], 96
    %v373 = vpack.c.bf16 0.0, %v371
    %s375 = ssub.s32 16, 1
    %376 = vst [vmem:[%s372] sm:%s375] %v373
    %s377 = scalar_lea.vmem %s2, 100
    %v378 = vld [vmem:[%s377] sm:$0xf]
    %v379 = vunpack.c.l.bf16 %v378
    %v380 = vunpack.c.h.bf16 %v378
    %v381 = vlaneseq
    %v382 = vand.u32 %v381, 127
    %v383 = vadd.s32 %v382, 1408
    %vm384 = vcmp.lt.s32.totalorder %v383, 1728
    %v385 = vsel %vm384, %v379, %v10
    %s386 = scalar_lea.vmem [#allocation7], 100
    %v387 = vpack.c.bf16 0.0, %v385
    %s389 = ssub.s32 16, 1
    %390 = vst [vmem:[%s386] sm:%s389] %v387
    %s391 = scalar_lea.vmem %s2, 104
    %v392 = vld [vmem:[%s391] sm:$0xf]
    %v393 = vunpack.c.l.bf16 %v392
    %v394 = vunpack.c.h.bf16 %v392
    %v395 = vlaneseq
    %v396 = vand.u32 %v395, 127
    %v397 = vadd.s32 %v396, 1536
    %vm398 = vcmp.lt.s32.totalorder %v397, 1728
    %v399 = vsel %vm398, %v393, %v10
    %s400 = scalar_lea.vmem [#allocation7], 104
    %v401 = vpack.c.bf16 0.0, %v399
    %s403 = ssub.s32 16, 1
    %404 = vst [vmem:[%s400] sm:%s403] %v401
    %s405 = scalar_lea.vmem %s2, 108
    %s407 = sor.u32 255, 127
    %s408 = sand.u32 %s407, 85
    %s409 = sshrl.u32 %s408, 1
    %s410 = sor.u32 %s408, %s409
    %s411 = sand.u32 51, %s410
    %s412 = sshrl.u32 %s411, 2
    %s413 = sor.u32 %s411, %s412
    %s414 = sand.u32 15, %s413
    %v415 = vld [vmem:[%s405] sm:%s414]
    %v416 = vunpack.c.l.bf16 %v415
    %v417 = vunpack.c.h.bf16 %v415
    %v418 = vlaneseq
    %v419 = vand.u32 %v418, 127
    %v420 = vadd.s32 %v419, 1664
    %vm421 = vcmp.lt.s32.totalorder %v420, 1728
    %v422 = vsel %vm421, %v416, %v10
    %s423 = scalar_lea.vmem [#allocation7], 108
    %v424 = vpack.c.bf16 0.0, %v422
    %s426 = ssub.s32 16, 1
    %427 = vst [vmem:[%s423] sm:%s426] %v424
    %s428 = scalar_lea.vmem %s2, 112
    %v429 = vld [vmem:[%s428] sm:$0xf]
    %v430 = vunpack.c.l.bf16 %v429
    %v431 = vunpack.c.h.bf16 %v429
    %v432 = vlaneseq
    %v433 = vand.u32 %v432, 127
    %vm435 = vcmp.lt.s32.totalorder %v433, 1728
    %v436 = vsel %vm435, %v430, %v10
    %s437 = scalar_lea.vmem [#allocation7], 112
    %v438 = vpack.c.bf16 0.0, %v436
    %s440 = ssub.s32 16, 1
    %441 = vst [vmem:[%s437] sm:%s440] %v438
    %s442 = scalar_lea.vmem %s2, 116
    %v443 = vld [vmem:[%s442] sm:$0xf]
    %v444 = vunpack.c.l.bf16 %v443
    %v445 = vunpack.c.h.bf16 %v443
    %v446 = vlaneseq
    %v447 = vand.u32 %v446, 127
    %v448 = vadd.s32 %v447, 128
    %vm449 = vcmp.lt.s32.totalorder %v448, 1728
    %v450 = vsel %vm449, %v444, %v10
    %s451 = scalar_lea.vmem [#allocation7], 116
    %v452 = vpack.c.bf16 0.0, %v450
    %s454 = ssub.s32 16, 1
    %455 = vst [vmem:[%s451] sm:%s454] %v452
    %s456 = scalar_lea.vmem %s2, 120
    %v457 = vld [vmem:[%s456] sm:$0xf]
    %v458 = vunpack.c.l.bf16 %v457
    %v459 = vunpack.c.h.bf16 %v457
    %v460 = vlaneseq
    %v461 = vand.u32 %v460, 127
    %v462 = vadd.s32 %v461, 256
    %vm463 = vcmp.lt.s32.totalorder %v462, 1728
    %v464 = vsel %vm463, %v458, %v10
    %s465 = scalar_lea.vmem [#allocation7], 120
    %v466 = vpack.c.bf16 0.0, %v464
    %s468 = ssub.s32 16, 1
    %469 = vst [vmem:[%s465] sm:%s468] %v466
    %s470 = scalar_lea.vmem %s2, 124
    %v471 = vld [vmem:[%s470] sm:$0xf]
    %v472 = vunpack.c.l.bf16 %v471
    %v473 = vunpack.c.h.bf16 %v471
    %v474 = vlaneseq
    %v475 = vand.u32 %v474, 127
    %v476 = vadd.s32 %v475, 384
    %vm477 = vcmp.lt.s32.totalorder %v476, 1728
    %v478 = vsel %vm477, %v472, %v10
    %s479 = scalar_lea.vmem [#allocation7], 124
    %v480 = vpack.c.bf16 0.0, %v478
    %s482 = ssub.s32 16, 1
    %483 = vst [vmem:[%s479] sm:%s482] %v480
    %s484 = scalar_lea.vmem %s2, 128
    %v485 = vld [vmem:[%s484] sm:$0xf]
    %v486 = vunpack.c.l.bf16 %v485
    %v487 = vunpack.c.h.bf16 %v485
    %v488 = vlaneseq
    %v489 = vand.u32 %v488, 127
    %v490 = vadd.s32 %v489, 512
    %vm491 = vcmp.lt.s32.totalorder %v490, 1728
    %v492 = vsel %vm491, %v486, %v10
    %s493 = scalar_lea.vmem [#allocation7], 128
    %v494 = vpack.c.bf16 0.0, %v492
    %s496 = ssub.s32 16, 1
    %497 = vst [vmem:[%s493] sm:%s496] %v494
    %s498 = scalar_lea.vmem %s2, 132
    %v499 = vld [vmem:[%s498] sm:$0xf]
    %v500 = vunpack.c.l.bf16 %v499
    %v501 = vunpack.c.h.bf16 %v499
    %v502 = vlaneseq
    %v503 = vand.u32 %v502, 127
    %v504 = vadd.s32 %v503, 640
    %vm505 = vcmp.lt.s32.totalorder %v504, 1728
    %v506 = vsel %vm505, %v500, %v10
    %s507 = scalar_lea.vmem [#allocation7], 132
    %v508 = vpack.c.bf16 0.0, %v506
    %s510 = ssub.s32 16, 1
    %511 = vst [vmem:[%s507] sm:%s510] %v508
    %s512 = scalar_lea.vmem %s2, 136
    %v513 = vld [vmem:[%s512] sm:$0xf]
    %v514 = vunpack.c.l.bf16 %v513
    %v515 = vunpack.c.h.bf16 %v513
    %v516 = vlaneseq
    %v517 = vand.u32 %v516, 127
    %v518 = vadd.s32 %v517, 768
    %vm519 = vcmp.lt.s32.totalorder %v518, 1728
    %v520 = vsel %vm519, %v514, %v10
    %s521 = scalar_lea.vmem [#allocation7], 136
    %v522 = vpack.c.bf16 0.0, %v520
    %s524 = ssub.s32 16, 1
    %525 = vst [vmem:[%s521] sm:%s524] %v522
    %s526 = scalar_lea.vmem %s2, 140
    %v527 = vld [vmem:[%s526] sm:$0xf]
    %v528 = vunpack.c.l.bf16 %v527
    %v529 = vunpack.c.h.bf16 %v527
    %v530 = vlaneseq
    %v531 = vand.u32 %v530, 127
    %v532 = vadd.s32 %v531, 896
    %vm533 = vcmp.lt.s32.totalorder %v532, 1728
    %v534 = vsel %vm533, %v528, %v10
    %s535 = scalar_lea.vmem [#allocation7], 140
    %v536 = vpack.c.bf16 0.0, %v534
    %s538 = ssub.s32 16, 1
    %539 = vst [vmem:[%s535] sm:%s538] %v536
    %s540 = scalar_lea.vmem %s2, 144
    %v541 = vld [vmem:[%s540] sm:$0xf]
    %v542 = vunpack.c.l.bf16 %v541
    %v543 = vunpack.c.h.bf16 %v541
    %v544 = vlaneseq
    %v545 = vand.u32 %v544, 127
    %v546 = vadd.s32 %v545, 1024
    %vm547 = vcmp.lt.s32.totalorder %v546, 1728
    %v548 = vsel %vm547, %v542, %v10
    %s549 = scalar_lea.vmem [#allocation7], 144
    %v550 = vpack.c.bf16 0.0, %v548
    %s552 = ssub.s32 16, 1
    %553 = vst [vmem:[%s549] sm:%s552] %v550
    %s554 = scalar_lea.vmem %s2, 148
    %v555 = vld [vmem:[%s554] sm:$0xf]
    %v556 = vunpack.c.l.bf16 %v555
    %v557 = vunpack.c.h.bf16 %v555
    %v558 = vlaneseq
    %v559 = vand.u32 %v558, 127
    %v560 = vadd.s32 %v559, 1152
    %vm561 = vcmp.lt.s32.totalorder %v560, 1728
    %v562 = vsel %vm561, %v556, %v10
    %s563 = scalar_lea.vmem [#allocation7], 148
    %v564 = vpack.c.bf16 0.0, %v562
    %s566 = ssub.s32 16, 1
    %567 = vst [vmem:[%s563] sm:%s566] %v564
    %s568 = scalar_lea.vmem %s2, 152
    %v569 = vld [vmem:[%s568] sm:$0xf]
    %v570 = vunpack.c.l.bf16 %v569
    %v571 = vunpack.c.h.bf16 %v569
    %v572 = vlaneseq
    %v573 = vand.u32 %v572, 127
    %v574 = vadd.s32 %v573, 1280
    %vm575 = vcmp.lt.s32.totalorder %v574, 1728
    %v576 = vsel %vm575, %v570, %v10
    %s577 = scalar_lea.vmem [#allocation7], 152
    %v578 = vpack.c.bf16 0.0, %v576
    %s580 = ssub.s32 16, 1
    %581 = vst [vmem:[%s577] sm:%s580] %v578
    %s582 = scalar_lea.vmem %s2, 156
    %v583 = vld [vmem:[%s582] sm:$0xf]
    %v584 = vunpack.c.l.bf16 %v583
    %v585 = vunpack.c.h.bf16 %v583
    %v586 = vlaneseq
    %v587 = vand.u32 %v586, 127
    %v588 = vadd.s32 %v587, 1408
    %vm589 = vcmp.lt.s32.totalorder %v588, 1728
    %v590 = vsel %vm589, %v584, %v10
    %s591 = scalar_lea.vmem [#allocation7], 156
    %v592 = vpack.c.bf16 0.0, %v590
    %s594 = ssub.s32 16, 1
    %595 = vst [vmem:[%s591] sm:%s594] %v592
    %s596 = scalar_lea.vmem %s2, 160
    %v597 = vld [vmem:[%s596] sm:$0xf]
    %v598 = vunpack.c.l.bf16 %v597
    %v599 = vunpack.c.h.bf16 %v597
    %v600 = vlaneseq
    %v601 = vand.u32 %v600, 127
    %v602 = vadd.s32 %v601, 1536
    %vm603 = vcmp.lt.s32.totalorder %v602, 1728
    %v604 = vsel %vm603, %v598, %v10
    %s605 = scalar_lea.vmem [#allocation7], 160
    %v606 = vpack.c.bf16 0.0, %v604
    %s608 = ssub.s32 16, 1
    %609 = vst [vmem:[%s605] sm:%s608] %v606
    %s610 = scalar_lea.vmem %s2, 164
    %s612 = sor.u32 255, 127
    %s613 = sand.u32 %s612, 85
    %s614 = sshrl.u32 %s613, 1
    %s615 = sor.u32 %s613, %s614
    %s616 = sand.u32 51, %s615
    %s617 = sshrl.u32 %s616, 2
    %s618 = sor.u32 %s616, %s617
    %s619 = sand.u32 15, %s618
    %v620 = vld [vmem:[%s610] sm:%s619]
    %v621 = vunpack.c.l.bf16 %v620
    %v622 = vunpack.c.h.bf16 %v620
    %v623 = vlaneseq
    %v624 = vand.u32 %v623, 127
    %v625 = vadd.s32 %v624, 1664
    %vm626 = vcmp.lt.s32.totalorder %v625, 1728
    %v627 = vsel %vm626, %v621, %v10
    %s628 = scalar_lea.vmem [#allocation7], 164
    %v629 = vpack.c.bf16 0.0, %v627
    %s631 = ssub.s32 16, 1
    %632 = vst [vmem:[%s628] sm:%s631] %v629
    %s633 = scalar_lea.vmem %s2, 168
    %v634 = vld [vmem:[%s633] sm:$0xf]
    %v635 = vunpack.c.l.bf16 %v634
    %v636 = vunpack.c.h.bf16 %v634
    %v637 = vlaneseq
    %v638 = vand.u32 %v637, 127
    %vm640 = vcmp.lt.s32.totalorder %v638, 1728
    %v641 = vsel %vm640, %v635, %v10
    %s642 = scalar_lea.vmem [#allocation7], 168
    %v643 = vpack.c.bf16 0.0, %v641
    %s645 = ssub.s32 16, 1
    %646 = vst [vmem:[%s642] sm:%s645] %v643
    %s647 = scalar_lea.vmem %s2, 172
    %v648 = vld [vmem:[%s647] sm:$0xf]
    %v649 = vunpack.c.l.bf16 %v648
    %v650 = vunpack.c.h.bf16 %v648
    %v651 = vlaneseq
    %v652 = vand.u32 %v651, 127
    %v653 = vadd.s32 %v652, 128
    %vm654 = vcmp.lt.s32.totalorder %v653, 1728
    %v655 = vsel %vm654, %v649, %v10
    %s656 = scalar_lea.vmem [#allocation7], 172
    %v657 = vpack.c.bf16 0.0, %v655
    %s659 = ssub.s32 16, 1
    %660 = vst [vmem:[%s656] sm:%s659] %v657
    %s661 = scalar_lea.vmem %s2, 176
    %v662 = vld [vmem:[%s661] sm:$0xf]
    %v663 = vunpack.c.l.bf16 %v662
    %v664 = vunpack.c.h.bf16 %v662
    %v665 = vlaneseq
    %v666 = vand.u32 %v665, 127
    %v667 = vadd.s32 %v666, 256
    %vm668 = vcmp.lt.s32.totalorder %v667, 1728
    %v669 = vsel %vm668, %v663, %v10
    %s670 = scalar_lea.vmem [#allocation7], 176
    %v671 = vpack.c.bf16 0.0, %v669
    %s673 = ssub.s32 16, 1
    %674 = vst [vmem:[%s670] sm:%s673] %v671
    %s675 = scalar_lea.vmem %s2, 180
    %v676 = vld [vmem:[%s675] sm:$0xf]
    %v677 = vunpack.c.l.bf16 %v676
    %v678 = vunpack.c.h.bf16 %v676
    %v679 = vlaneseq
    %v680 = vand.u32 %v679, 127
    %v681 = vadd.s32 %v680, 384
    %vm682 = vcmp.lt.s32.totalorder %v681, 1728
    %v683 = vsel %vm682, %v677, %v10
    %s684 = scalar_lea.vmem [#allocation7], 180
    %v685 = vpack.c.bf16 0.0, %v683
    %s687 = ssub.s32 16, 1
    %688 = vst [vmem:[%s684] sm:%s687] %v685
    %s689 = scalar_lea.vmem %s2, 184
    %v690 = vld [vmem:[%s689] sm:$0xf]
    %v691 = vunpack.c.l.bf16 %v690
    %v692 = vunpack.c.h.bf16 %v690
    %v693 = vlaneseq
    %v694 = vand.u32 %v693, 127
    %v695 = vadd.s32 %v694, 512
    %vm696 = vcmp.lt.s32.totalorder %v695, 1728
    %v697 = vsel %vm696, %v691, %v10
    %s698 = scalar_lea.vmem [#allocation7], 184
    %v699 = vpack.c.bf16 0.0, %v697
    %s701 = ssub.s32 16, 1
    %702 = vst [vmem:[%s698] sm:%s701] %v699
    %s703 = scalar_lea.vmem %s2, 188
    %v704 = vld [vmem:[%s703] sm:$0xf]
    %v705 = vunpack.c.l.bf16 %v704
    %v706 = vunpack.c.h.bf16 %v704
    %v707 = vlaneseq
    %v708 = vand.u32 %v707, 127
    %v709 = vadd.s32 %v708, 640
    %vm710 = vcmp.lt.s32.totalorder %v709, 1728
    %v711 = vsel %vm710, %v705, %v10
    %s712 = scalar_lea.vmem [#allocation7], 188
    %v713 = vpack.c.bf16 0.0, %v711
    %s715 = ssub.s32 16, 1
    %716 = vst [vmem:[%s712] sm:%s715] %v713
    %s717 = scalar_lea.vmem %s2, 192
    %v718 = vld [vmem:[%s717] sm:$0xf]
    %v719 = vunpack.c.l.bf16 %v718
    %v720 = vunpack.c.h.bf16 %v718
    %v721 = vlaneseq
    %v722 = vand.u32 %v721, 127
    %v723 = vadd.s32 %v722, 768
    %vm724 = vcmp.lt.s32.totalorder %v723, 1728
    %v725 = vsel %vm724, %v719, %v10
    %s726 = scalar_lea.vmem [#allocation7], 192
    %v727 = vpack.c.bf16 0.0, %v725
    %s729 = ssub.s32 16, 1
    %730 = vst [vmem:[%s726] sm:%s729] %v727
    %s731 = scalar_lea.vmem %s2, 196
    %v732 = vld [vmem:[%s731] sm:$0xf]
    %v733 = vunpack.c.l.bf16 %v732
    %v734 = vunpack.c.h.bf16 %v732
    %v735 = vlaneseq
    %v736 = vand.u32 %v735, 127
    %v737 = vadd.s32 %v736, 896
    %vm738 = vcmp.lt.s32.totalorder %v737, 1728
    %v739 = vsel %vm738, %v733, %v10
    %s740 = scalar_lea.vmem [#allocation7], 196
    %v741 = vpack.c.bf16 0.0, %v739
    %s743 = ssub.s32 16, 1
    %744 = vst [vmem:[%s740] sm:%s743] %v741
    %s745 = scalar_lea.vmem %s2, 200
    %v746 = vld [vmem:[%s745] sm:$0xf]
    %v747 = vunpack.c.l.bf16 %v746
    %v748 = vunpack.c.h.bf16 %v746
    %v749 = vlaneseq
    %v750 = vand.u32 %v749, 127
    %v751 = vadd.s32 %v750, 1024
    %vm752 = vcmp.lt.s32.totalorder %v751, 1728
    %v753 = vsel %vm752, %v747, %v10
    %s754 = scalar_lea.vmem [#allocation7], 200
    %v755 = vpack.c.bf16 0.0, %v753
    %s757 = ssub.s32 16, 1
    %758 = vst [vmem:[%s754] sm:%s757] %v755
    %s759 = scalar_lea.vmem %s2, 204
    %v760 = vld [vmem:[%s759] sm:$0xf]
    %v761 = vunpack.c.l.bf16 %v760
    %v762 = vunpack.c.h.bf16 %v760
    %v763 = vlaneseq
    %v764 = vand.u32 %v763, 127
    %v765 = vadd.s32 %v764, 1152
    %vm766 = vcmp.lt.s32.totalorder %v765, 1728
    %v767 = vsel %vm766, %v761, %v10
    %s768 = scalar_lea.vmem [#allocation7], 204
    %v769 = vpack.c.bf16 0.0, %v767
    %s771 = ssub.s32 16, 1
    %772 = vst [vmem:[%s768] sm:%s771] %v769
    %s773 = scalar_lea.vmem %s2, 208
    %v774 = vld [vmem:[%s773] sm:$0xf]
    %v775 = vunpack.c.l.bf16 %v774
    %v776 = vunpack.c.h.bf16 %v774
    %v777 = vlaneseq
    %v778 = vand.u32 %v777, 127
    %v779 = vadd.s32 %v778, 1280
    %vm780 = vcmp.lt.s32.totalorder %v779, 1728
    %v781 = vsel %vm780, %v775, %v10
    %s782 = scalar_lea.vmem [#allocation7], 208
    %v783 = vpack.c.bf16 0.0, %v781
    %s785 = ssub.s32 16, 1
    %786 = vst [vmem:[%s782] sm:%s785] %v783
    %s787 = scalar_lea.vmem %s2, 212
    %v788 = vld [vmem:[%s787] sm:$0xf]
    %v789 = vunpack.c.l.bf16 %v788
    %v790 = vunpack.c.h.bf16 %v788
    %v791 = vlaneseq
    %v792 = vand.u32 %v791, 127
    %v793 = vadd.s32 %v792, 1408
    %vm794 = vcmp.lt.s32.totalorder %v793, 1728
    %v795 = vsel %vm794, %v789, %v10
    %s796 = scalar_lea.vmem [#allocation7], 212
    %v797 = vpack.c.bf16 0.0, %v795
    %s799 = ssub.s32 16, 1
    %800 = vst [vmem:[%s796] sm:%s799] %v797
    %s801 = scalar_lea.vmem %s2, 216
    %v802 = vld [vmem:[%s801] sm:$0xf]
    %v803 = vunpack.c.l.bf16 %v802
    %v804 = vunpack.c.h.bf16 %v802
    %v805 = vlaneseq
    %v806 = vand.u32 %v805, 127
    %v807 = vadd.s32 %v806, 1536
    %vm808 = vcmp.lt.s32.totalorder %v807, 1728
    %v809 = vsel %vm808, %v803, %v10
    %s810 = scalar_lea.vmem [#allocation7], 216
    %v811 = vpack.c.bf16 0.0, %v809
    %s813 = ssub.s32 16, 1
    %814 = vst [vmem:[%s810] sm:%s813] %v811
    %s815 = scalar_lea.vmem %s2, 220
    %s817 = sor.u32 255, 127
    %s818 = sand.u32 %s817, 85
    %s819 = sshrl.u32 %s818, 1
    %s820 = sor.u32 %s818, %s819
    %s821 = sand.u32 51, %s820
    %s822 = sshrl.u32 %s821, 2
    %s823 = sor.u32 %s821, %s822
    %s824 = sand.u32 15, %s823
    %v825 = vld [vmem:[%s815] sm:%s824]
    %v826 = vunpack.c.l.bf16 %v825
    %v827 = vunpack.c.h.bf16 %v825
    %v828 = vlaneseq
    %v829 = vand.u32 %v828, 127
    %v830 = vadd.s32 %v829, 1664
    %vm831 = vcmp.lt.s32.totalorder %v830, 1728
    %v832 = vsel %vm831, %v826, %v10
    %s833 = scalar_lea.vmem [#allocation7], 220
    %v834 = vpack.c.bf16 0.0, %v832
    %s836 = ssub.s32 16, 1
    %837 = vst [vmem:[%s833] sm:%s836] %v834
    %v838 = vld [vmem:[#allocation7] sm:$0xff]
    %v839 = vld [vmem:[#allocation7 + $0x8] sm:$0xff]
    %v840 = vld [vmem:[#allocation7 + $0x10] sm:$0xff]
    %v841 = vld [vmem:[#allocation7 + $0x18] sm:$0xff]
    %v842 = vld [vmem:[#allocation7 + $0x20] sm:$0xff]
    %v843 = vld [vmem:[#allocation7 + $0x28] sm:$0xff]
    %v844 = vld [vmem:[#allocation7 + $0x30] sm:$0xff]
    %v845 = vld [vmem:[#allocation7 + $0x38] sm:$0xff]
    %v846 = vld [vmem:[#allocation7 + $0x40] sm:$0xff]
    %v847 = vld [vmem:[#allocation7 + $0x48] sm:$0xff]
    %v848 = vld [vmem:[#allocation7 + $0x50] sm:$0xff]
    %v849 = vld [vmem:[#allocation7 + $0x58] sm:$0xff]
    %v850 = vld [vmem:[#allocation7 + $0x60] sm:$0xff]
    %v851 = vld [vmem:[#allocation7 + $0x68] sm:$0xff]
    %v852 = vld [vmem:[#allocation7 + $0x70] sm:$0xff]
    %v853 = vld [vmem:[#allocation7 + $0x78] sm:$0xff]
    %v854 = vld [vmem:[#allocation7 + $0x80] sm:$0xff]
    %v855 = vld [vmem:[#allocation7 + $0x88] sm:$0xff]
    %v856 = vld [vmem:[#allocation7 + $0x90] sm:$0xff]
    %v857 = vld [vmem:[#allocation7 + $0x98] sm:$0xff]
    %v858 = vld [vmem:[#allocation7 + $0xa0] sm:$0xff]
    %v859 = vld [vmem:[#allocation7 + $0xa8] sm:$0xff]
    %v860 = vld [vmem:[#allocation7 + $0xb0] sm:$0xff]
    %v861 = vld [vmem:[#allocation7 + $0xb8] sm:$0xff]
    %v862 = vld [vmem:[#allocation7 + $0xc0] sm:$0xff]
    %v863 = vld [vmem:[#allocation7 + $0xc8] sm:$0xff]
    %v864 = vld [vmem:[#allocation7 + $0xd0] sm:$0xff]
    %v865 = vld [vmem:[#allocation7 + $0xd8] sm:$0xff]
    %v866 = vld [vmem:[%s0] sm:$0xff]
    %v867 = vld [vmem:[%s0 + $0x8] sm:$0xff]
    %v868 = vld [vmem:[%s0 + $0x10] sm:$0xff]
    %v869 = vld [vmem:[%s0 + $0x18] sm:$0xff]
    %v870 = vld [vmem:[%s0 + $0x20] sm:$0xff]
    %v871 = vld [vmem:[%s0 + $0x28] sm:$0xff]
    %v872 = vld [vmem:[%s0 + $0x30] sm:$0xff]
    %v873 = vld [vmem:[%s0 + $0x38] sm:$0xff]
    %v874 = vld [vmem:[%s0 + $0x40] sm:$0xff]
    %v875 = vld [vmem:[%s0 + $0x48] sm:$0xff]
    %v876 = vld [vmem:[%s0 + $0x50] sm:$0xff]
    %v877 = vld [vmem:[%s0 + $0x58] sm:$0xff]
    %v878 = vld [vmem:[%s0 + $0x60] sm:$0xff]
    %v879 = vld [vmem:[%s0 + $0x68] sm:$0xff]
    %v880 = vld [vmem:[%s0 + $0x70] sm:$0xff]
    %v881 = vld [vmem:[%s0 + $0x78] sm:$0xff]
    %v882 = vld [vmem:[%s0 + $0x80] sm:$0xff]
    %v883 = vld [vmem:[%s0 + $0x88] sm:$0xff]
    %v884 = vld [vmem:[%s0 + $0x90] sm:$0xff]
    %v885 = vld [vmem:[%s0 + $0x98] sm:$0xff]
    %v886 = vld [vmem:[%s0 + $0xa0] sm:$0xff]
    %v887 = vld [vmem:[%s0 + $0xa8] sm:$0xff]
    %v888 = vld [vmem:[%s0 + $0xb0] sm:$0xff]
    %v889 = vld [vmem:[%s0 + $0xb8] sm:$0xff]
    %v890 = vld [vmem:[%s0 + $0xc0] sm:$0xff]
    %v891 = vld [vmem:[%s0 + $0xc8] sm:$0xff]
    %v892 = vld [vmem:[%s0 + $0xd0] sm:$0xff]
    %v893 = vld [vmem:[%s0 + $0xd8] sm:$0xff]
    %v894 = vld [vmem:[%s0 + $0xe0] sm:$0xff]
    %v895 = vld [vmem:[%s0 + $0xe8] sm:$0xff]
    %v896 = vld [vmem:[%s0 + $0xf0] sm:$0xff]
    %v897 = vld [vmem:[%s0 + $0xf8] sm:$0xff]
    %v898 = vld [vmem:[%s0 + $0x100] sm:$0xff]
    %v899 = vld [vmem:[%s0 + $0x108] sm:$0xff]
    %v900 = vld [vmem:[%s0 + $0x110] sm:$0xff]
    %v901 = vld [vmem:[%s0 + $0x118] sm:$0xff]
    %v902 = vld [vmem:[%s0 + $0x120] sm:$0xff]
    %v903 = vld [vmem:[%s0 + $0x128] sm:$0xff]
    %v904 = vld [vmem:[%s0 + $0x130] sm:$0xff]
    %v905 = vld [vmem:[%s0 + $0x138] sm:$0xff]
    %v906 = vld [vmem:[%s0 + $0x140] sm:$0xff]
    %v907 = vld [vmem:[%s0 + $0x148] sm:$0xff]
    %v908 = vld [vmem:[%s0 + $0x150] sm:$0xff]
    %v909 = vld [vmem:[%s0 + $0x158] sm:$0xff]
    %v910 = vld [vmem:[%s0 + $0x160] sm:$0xff]
    %v911 = vld [vmem:[%s0 + $0x168] sm:$0xff]
    %v912 = vld [vmem:[%s0 + $0x170] sm:$0xff]
    %v913 = vld [vmem:[%s0 + $0x178] sm:$0xff]
    %v914 = vld [vmem:[%s0 + $0x180] sm:$0xff]
    %v915 = vld [vmem:[%s0 + $0x188] sm:$0xff]
    %v916 = vld [vmem:[%s0 + $0x190] sm:$0xff]
    %v917 = vld [vmem:[%s0 + $0x198] sm:$0xff]
    %v918 = vld [vmem:[%s0 + $0x1a0] sm:$0xff]
    %v919 = vld [vmem:[%s0 + $0x1a8] sm:$0xff]
    %v920 = vld [vmem:[%s0 + $0x1b0] sm:$0xff]
    %v921 = vld [vmem:[%s0 + $0x1b8] sm:$0xff]
    %v922 = vld [vmem:[%s0 + $0x1c0] sm:$0xff]
    %v923 = vld [vmem:[%s0 + $0x1c8] sm:$0xff]
    %v924 = vld [vmem:[%s0 + $0x1d0] sm:$0xff]
    %v925 = vld [vmem:[%s0 + $0x1d8] sm:$0xff]
    %v926 = vld [vmem:[%s0 + $0x1e0] sm:$0xff]
    %v927 = vld [vmem:[%s0 + $0x1e8] sm:$0xff]
    %v928 = vld [vmem:[%s0 + $0x1f0] sm:$0xff]
    %v929 = vld [vmem:[%s0 + $0x1f8] sm:$0xff]
    %v930 = vld [vmem:[%s0 + $0x200] sm:$0xff]
    %v931 = vld [vmem:[%s0 + $0x208] sm:$0xff]
    %v932 = vld [vmem:[%s0 + $0x210] sm:$0xff]
    %v933 = vld [vmem:[%s0 + $0x218] sm:$0xff]
    %v934 = vld [vmem:[%s0 + $0x220] sm:$0xff]
    %v935 = vld [vmem:[%s0 + $0x228] sm:$0xff]
    %v936 = vld [vmem:[%s0 + $0x230] sm:$0xff]
    %v937 = vld [vmem:[%s0 + $0x238] sm:$0xff]
    %v938 = vld [vmem:[%s0 + $0x240] sm:$0xff]
    %v939 = vld [vmem:[%s0 + $0x248] sm:$0xff]
    %v940 = vld [vmem:[%s0 + $0x250] sm:$0xff]
    %v941 = vld [vmem:[%s0 + $0x258] sm:$0xff]
    %v942 = vld [vmem:[%s0 + $0x260] sm:$0xff]
    %v943 = vld [vmem:[%s0 + $0x268] sm:$0xff]
    %v944 = vld [vmem:[%s0 + $0x270] sm:$0xff]
    %v945 = vld [vmem:[%s0 + $0x278] sm:$0xff]
    %v946 = vld [vmem:[%s0 + $0x280] sm:$0xff]
    %v947 = vld [vmem:[%s0 + $0x288] sm:$0xff]
    %v948 = vld [vmem:[%s0 + $0x290] sm:$0xff]
    %v949 = vld [vmem:[%s0 + $0x298] sm:$0xff]
    %v950 = vld [vmem:[%s0 + $0x2a0] sm:$0xff]
    %v951 = vld [vmem:[%s0 + $0x2a8] sm:$0xff]
    %v952 = vld [vmem:[%s0 + $0x2b0] sm:$0xff]
    %v953 = vld [vmem:[%s0 + $0x2b8] sm:$0xff]
    %v954 = vld [vmem:[%s0 + $0x2c0] sm:$0xff]
    %v955 = vld [vmem:[%s0 + $0x2c8] sm:$0xff]
    %v956 = vld [vmem:[%s0 + $0x2d0] sm:$0xff]
    %v957 = vld [vmem:[%s0 + $0x2d8] sm:$0xff]
    %v958 = vld [vmem:[%s0 + $0x2e0] sm:$0xff]
    %v959 = vld [vmem:[%s0 + $0x2e8] sm:$0xff]
    %v960 = vld [vmem:[%s0 + $0x2f0] sm:$0xff]
    %v961 = vld [vmem:[%s0 + $0x2f8] sm:$0xff]
    %v962 = vld [vmem:[%s0 + $0x300] sm:$0xff]
    %v963 = vld [vmem:[%s0 + $0x308] sm:$0xff]
    %v964 = vld [vmem:[%s0 + $0x310] sm:$0xff]
    %v965 = vld [vmem:[%s0 + $0x318] sm:$0xff]
    %v966 = vld [vmem:[%s0 + $0x320] sm:$0xff]
    %v967 = vld [vmem:[%s0 + $0x328] sm:$0xff]
    %v968 = vld [vmem:[%s0 + $0x330] sm:$0xff]
    %v969 = vld [vmem:[%s0 + $0x338] sm:$0xff]
    %v970 = vld [vmem:[%s0 + $0x340] sm:$0xff]
    %v971 = vld [vmem:[%s0 + $0x348] sm:$0xff]
    %v972 = vld [vmem:[%s0 + $0x350] sm:$0xff]
    %v973 = vld [vmem:[%s0 + $0x358] sm:$0xff]
    %v974 = vld [vmem:[%s0 + $0x360] sm:$0xff]
    %v975 = vld [vmem:[%s0 + $0x368] sm:$0xff]
    %v976 = vld [vmem:[%s0 + $0x370] sm:$0xff]
    %v977 = vld [vmem:[%s0 + $0x378] sm:$0xff]
    %v978 = vld [vmem:[%s0 + $0x380] sm:$0xff]
    %v979 = vld [vmem:[%s0 + $0x388] sm:$0xff]
    %v980 = vld [vmem:[%s0 + $0x390] sm:$0xff]
    %v981 = vld [vmem:[%s0 + $0x398] sm:$0xff]
    %v982 = vld [vmem:[%s0 + $0x3a0] sm:$0xff]
    %v983 = vld [vmem:[%s0 + $0x3a8] sm:$0xff]
    %v984 = vld [vmem:[%s0 + $0x3b0] sm:$0xff]
    %v985 = vld [vmem:[%s0 + $0x3b8] sm:$0xff]
    %v986 = vld [vmem:[%s0 + $0x3c0] sm:$0xff]
    %v987 = vld [vmem:[%s0 + $0x3c8] sm:$0xff]
    %v988 = vld [vmem:[%s0 + $0x3d0] sm:$0xff]
    %v989 = vld [vmem:[%s0 + $0x3d8] sm:$0xff]
    %v990 = vld [vmem:[%s0 + $0x3e0] sm:$0xff]
    %v991 = vld [vmem:[%s0 + $0x3e8] sm:$0xff]
    %v992 = vld [vmem:[%s0 + $0x3f0] sm:$0xff]
    %v993 = vld [vmem:[%s0 + $0x3f8] sm:$0xff]
    %v994 = vld [vmem:[%s0 + $0x400] sm:$0xff]
    %v995 = vld [vmem:[%s0 + $0x408] sm:$0xff]
    %v996 = vld [vmem:[%s0 + $0x410] sm:$0xff]
    %v997 = vld [vmem:[%s0 + $0x418] sm:$0xff]
    %v998 = vld [vmem:[%s0 + $0x420] sm:$0xff]
    %v999 = vld [vmem:[%s0 + $0x428] sm:$0xff]
    %v1000 = vld [vmem:[%s0 + $0x430] sm:$0xff]
    %v1001 = vld [vmem:[%s0 + $0x438] sm:$0xff]
    %v1002 = vld [vmem:[%s0 + $0x440] sm:$0xff]
    %v1003 = vld [vmem:[%s0 + $0x448] sm:$0xff]
    %v1004 = vld [vmem:[%s0 + $0x450] sm:$0xff]
    %v1005 = vld [vmem:[%s0 + $0x458] sm:$0xff]
    %v1006 = vld [vmem:[%s0 + $0x460] sm:$0xff]
    %v1007 = vld [vmem:[%s0 + $0x468] sm:$0xff]
    %v1008 = vld [vmem:[%s0 + $0x470] sm:$0xff]
    %v1009 = vld [vmem:[%s0 + $0x478] sm:$0xff]
    %v1010 = vld [vmem:[%s0 + $0x480] sm:$0xff]
    %v1011 = vld [vmem:[%s0 + $0x488] sm:$0xff]
    %v1012 = vld [vmem:[%s0 + $0x490] sm:$0xff]
    %v1013 = vld [vmem:[%s0 + $0x498] sm:$0xff]
    %v1014 = vld [vmem:[%s0 + $0x4a0] sm:$0xff]
    %v1015 = vld [vmem:[%s0 + $0x4a8] sm:$0xff]
    %v1016 = vld [vmem:[%s0 + $0x4b0] sm:$0xff]
    %v1017 = vld [vmem:[%s0 + $0x4b8] sm:$0xff]
    %v1018 = vld [vmem:[%s0 + $0x4c0] sm:$0xff]
    %v1019 = vld [vmem:[%s0 + $0x4c8] sm:$0xff]
    %v1020 = vld [vmem:[%s0 + $0x4d0] sm:$0xff]
    %v1021 = vld [vmem:[%s0 + $0x4d8] sm:$0xff]
    %v1022 = vld [vmem:[%s0 + $0x4e0] sm:$0xff]
    %v1023 = vld [vmem:[%s0 + $0x4e8] sm:$0xff]
    %v1024 = vld [vmem:[%s0 + $0x4f0] sm:$0xff]
    %v1025 = vld [vmem:[%s0 + $0x4f8] sm:$0xff]
    %v1026 = vld [vmem:[%s0 + $0x500] sm:$0xff]
    %v1027 = vld [vmem:[%s0 + $0x508] sm:$0xff]
    %v1028 = vld [vmem:[%s0 + $0x510] sm:$0xff]
    %v1029 = vld [vmem:[%s0 + $0x518] sm:$0xff]
    %v1030 = vld [vmem:[%s0 + $0x520] sm:$0xff]
    %v1031 = vld [vmem:[%s0 + $0x528] sm:$0xff]
    %v1032 = vld [vmem:[%s0 + $0x530] sm:$0xff]
    %v1033 = vld [vmem:[%s0 + $0x538] sm:$0xff]
    %v1034 = vld [vmem:[%s0 + $0x540] sm:$0xff]
    %v1035 = vld [vmem:[%s0 + $0x548] sm:$0xff]
    %v1036 = vld [vmem:[%s0 + $0x550] sm:$0xff]
    %v1037 = vld [vmem:[%s0 + $0x558] sm:$0xff]
    %v1038 = vld [vmem:[%s0 + $0x560] sm:$0xff]
    %v1039 = vld [vmem:[%s0 + $0x568] sm:$0xff]
    %v1040 = vld [vmem:[%s0 + $0x570] sm:$0xff]
    %v1041 = vld [vmem:[%s0 + $0x578] sm:$0xff]
    %v1042 = vld [vmem:[%s0 + $0x580] sm:$0xff]
    %v1043 = vld [vmem:[%s0 + $0x588] sm:$0xff]
    %v1044 = vld [vmem:[%s0 + $0x590] sm:$0xff]
    %v1045 = vld [vmem:[%s0 + $0x598] sm:$0xff]
    %v1046 = vld [vmem:[%s0 + $0x5a0] sm:$0xff]
    %v1047 = vld [vmem:[%s0 + $0x5a8] sm:$0xff]
    %v1048 = vld [vmem:[%s0 + $0x5b0] sm:$0xff]
    %v1049 = vld [vmem:[%s0 + $0x5b8] sm:$0xff]
    %v1050 = vld [vmem:[%s0 + $0x5c0] sm:$0xff]
    %v1051 = vld [vmem:[%s0 + $0x5c8] sm:$0xff]
    %v1052 = vld [vmem:[%s0 + $0x5d0] sm:$0xff]
    %v1053 = vld [vmem:[%s0 + $0x5d8] sm:$0xff]
    %v1054 = vld [vmem:[%s0 + $0x5e0] sm:$0xff]
    %v1055 = vld [vmem:[%s0 + $0x5e8] sm:$0xff]
    %v1056 = vld [vmem:[%s0 + $0x5f0] sm:$0xff]
    %v1057 = vld [vmem:[%s0 + $0x5f8] sm:$0xff]
    %v1058 = vld [vmem:[%s0 + $0x600] sm:$0xff]
    %v1059 = vld [vmem:[%s0 + $0x608] sm:$0xff]
    %v1060 = vld [vmem:[%s0 + $0x610] sm:$0xff]
    %v1061 = vld [vmem:[%s0 + $0x618] sm:$0xff]
    %v1062 = vld [vmem:[%s0 + $0x620] sm:$0xff]
    %v1063 = vld [vmem:[%s0 + $0x628] sm:$0xff]
    %v1064 = vld [vmem:[%s0 + $0x630] sm:$0xff]
    %v1065 = vld [vmem:[%s0 + $0x638] sm:$0xff]
    %v1066 = vld [vmem:[%s0 + $0x640] sm:$0xff]
    %v1067 = vld [vmem:[%s0 + $0x648] sm:$0xff]
    %v1068 = vld [vmem:[%s0 + $0x650] sm:$0xff]
    %v1069 = vld [vmem:[%s0 + $0x658] sm:$0xff]
    %v1070 = vld [vmem:[%s0 + $0x660] sm:$0xff]
    %v1071 = vld [vmem:[%s0 + $0x668] sm:$0xff]
    %v1072 = vld [vmem:[%s0 + $0x670] sm:$0xff]
    %v1073 = vld [vmem:[%s0 + $0x678] sm:$0xff]
    %v1074 = vld [vmem:[%s0 + $0x680] sm:$0xff]
    %v1075 = vld [vmem:[%s0 + $0x688] sm:$0xff]
    %v1076 = vld [vmem:[%s0 + $0x690] sm:$0xff]
    %v1077 = vld [vmem:[%s0 + $0x698] sm:$0xff]
    %v1078 = vld [vmem:[%s0 + $0x6a0] sm:$0xff]
    %v1079 = vld [vmem:[%s0 + $0x6a8] sm:$0xff]
    %v1080 = vld [vmem:[%s0 + $0x6b0] sm:$0xff]
    %v1081 = vld [vmem:[%s0 + $0x6b8] sm:$0xff]
    %v1082 = vld [vmem:[%s0 + $0x6c0] sm:$0xff]
    %v1083 = vld [vmem:[%s0 + $0x6c8] sm:$0xff]
    %v1084 = vld [vmem:[%s0 + $0x6d0] sm:$0xff]
    %v1085 = vld [vmem:[%s0 + $0x6d8] sm:$0xff]
    %v1086 = vld [vmem:[%s0 + $0x6e0] sm:$0xff]
    %v1087 = vld [vmem:[%s0 + $0x6e8] sm:$0xff]
    %v1088 = vld [vmem:[%s0 + $0x6f0] sm:$0xff]
    %v1089 = vld [vmem:[%s0 + $0x6f8] sm:$0xff]
    %v1090 = vld [vmem:[%s0 + $0x700] sm:$0xff]
    %v1091 = vld [vmem:[%s0 + $0x708] sm:$0xff]
    %v1092 = vld [vmem:[%s0 + $0x710] sm:$0xff]
    %v1093 = vld [vmem:[%s0 + $0x718] sm:$0xff]
    %v1094 = vld [vmem:[%s0 + $0x720] sm:$0xff]
    %v1095 = vld [vmem:[%s0 + $0x728] sm:$0xff]
    %v1096 = vld [vmem:[%s0 + $0x730] sm:$0xff]
    %v1097 = vld [vmem:[%s0 + $0x738] sm:$0xff]
    %v1098 = vld [vmem:[%s0 + $0x740] sm:$0xff]
    %v1099 = vld [vmem:[%s0 + $0x748] sm:$0xff]
    %v1100 = vld [vmem:[%s0 + $0x750] sm:$0xff]
    %v1101 = vld [vmem:[%s0 + $0x758] sm:$0xff]
    %v1102 = vld [vmem:[%s0 + $0x760] sm:$0xff]
    %v1103 = vld [vmem:[%s0 + $0x768] sm:$0xff]
    %v1104 = vld [vmem:[%s0 + $0x770] sm:$0xff]
    %v1105 = vld [vmem:[%s0 + $0x778] sm:$0xff]
    %v1106 = vld [vmem:[%s0 + $0x780] sm:$0xff]
    %v1107 = vld [vmem:[%s0 + $0x788] sm:$0xff]
    %v1108 = vld [vmem:[%s0 + $0x790] sm:$0xff]
    %v1109 = vld [vmem:[%s0 + $0x798] sm:$0xff]
    %v1110 = vld [vmem:[%s0 + $0x7a0] sm:$0xff]
    %v1111 = vld [vmem:[%s0 + $0x7a8] sm:$0xff]
    %v1112 = vld [vmem:[%s0 + $0x7b0] sm:$0xff]
    %v1113 = vld [vmem:[%s0 + $0x7b8] sm:$0xff]
    %v1114 = vld [vmem:[%s0 + $0x7c0] sm:$0xff]
    %v1115 = vld [vmem:[%s0 + $0x7c8] sm:$0xff]
    %v1116 = vld [vmem:[%s0 + $0x7d0] sm:$0xff]
    %v1117 = vld [vmem:[%s0 + $0x7d8] sm:$0xff]
    %v1118 = vld [vmem:[%s0 + $0x7e0] sm:$0xff]
    %v1119 = vld [vmem:[%s0 + $0x7e8] sm:$0xff]
    %v1120 = vld [vmem:[%s0 + $0x7f0] sm:$0xff]
    %v1121 = vld [vmem:[%s0 + $0x7f8] sm:$0xff]
    %v1122 = vld [vmem:[%s0 + $0x800] sm:$0xff]
    %v1123 = vld [vmem:[%s0 + $0x808] sm:$0xff]
    %v1124 = vld [vmem:[%s0 + $0x810] sm:$0xff]
    %v1125 = vld [vmem:[%s0 + $0x818] sm:$0xff]
    %v1126 = vld [vmem:[%s0 + $0x820] sm:$0xff]
    %v1127 = vld [vmem:[%s0 + $0x828] sm:$0xff]
    %v1128 = vld [vmem:[%s0 + $0x830] sm:$0xff]
    %v1129 = vld [vmem:[%s0 + $0x838] sm:$0xff]
    %v1130 = vld [vmem:[%s0 + $0x840] sm:$0xff]
    %v1131 = vld [vmem:[%s0 + $0x848] sm:$0xff]
    %v1132 = vld [vmem:[%s0 + $0x850] sm:$0xff]
    %v1133 = vld [vmem:[%s0 + $0x858] sm:$0xff]
    %v1134 = vld [vmem:[%s0 + $0x860] sm:$0xff]
    %v1135 = vld [vmem:[%s0 + $0x868] sm:$0xff]
    %v1136 = vld [vmem:[%s0 + $0x870] sm:$0xff]
    %v1137 = vld [vmem:[%s0 + $0x878] sm:$0xff]
    %v1138 = vld [vmem:[%s0 + $0x880] sm:$0xff]
    %v1139 = vld [vmem:[%s0 + $0x888] sm:$0xff]
    %v1140 = vld [vmem:[%s0 + $0x890] sm:$0xff]
    %v1141 = vld [vmem:[%s0 + $0x898] sm:$0xff]
    %v1142 = vld [vmem:[%s0 + $0x8a0] sm:$0xff]
    %v1143 = vld [vmem:[%s0 + $0x8a8] sm:$0xff]
    %v1144 = vld [vmem:[%s0 + $0x8b0] sm:$0xff]
    %v1145 = vld [vmem:[%s0 + $0x8b8] sm:$0xff]
    %v1146 = vld [vmem:[%s0 + $0x8c0] sm:$0xff]
    %v1147 = vld [vmem:[%s0 + $0x8c8] sm:$0xff]
    %v1148 = vld [vmem:[%s0 + $0x8d0] sm:$0xff]
    %v1149 = vld [vmem:[%s0 + $0x8d8] sm:$0xff]
    %v1150 = vld [vmem:[%s0 + $0x8e0] sm:$0xff]
    %v1151 = vld [vmem:[%s0 + $0x8e8] sm:$0xff]
    %v1152 = vld [vmem:[%s0 + $0x8f0] sm:$0xff]
    %v1153 = vld [vmem:[%s0 + $0x8f8] sm:$0xff]
    %v1154 = vld [vmem:[%s0 + $0x900] sm:$0xff]
    %v1155 = vld [vmem:[%s0 + $0x908] sm:$0xff]
    %v1156 = vld [vmem:[%s0 + $0x910] sm:$0xff]
    %v1157 = vld [vmem:[%s0 + $0x918] sm:$0xff]
    %v1158 = vld [vmem:[%s0 + $0x920] sm:$0xff]
    %v1159 = vld [vmem:[%s0 + $0x928] sm:$0xff]
    %v1160 = vld [vmem:[%s0 + $0x930] sm:$0xff]
    %v1161 = vld [vmem:[%s0 + $0x938] sm:$0xff]
    %v1162 = vld [vmem:[%s0 + $0x940] sm:$0xff]
    %v1163 = vld [vmem:[%s0 + $0x948] sm:$0xff]
    %v1164 = vld [vmem:[%s0 + $0x950] sm:$0xff]
    %v1165 = vld [vmem:[%s0 + $0x958] sm:$0xff]
    %v1166 = vld [vmem:[%s0 + $0x960] sm:$0xff]
    %v1167 = vld [vmem:[%s0 + $0x968] sm:$0xff]
    %v1168 = vld [vmem:[%s0 + $0x970] sm:$0xff]
    %v1169 = vld [vmem:[%s0 + $0x978] sm:$0xff]
    %v1170 = vld [vmem:[%s0 + $0x980] sm:$0xff]
    %v1171 = vld [vmem:[%s0 + $0x988] sm:$0xff]
    %v1172 = vld [vmem:[%s0 + $0x990] sm:$0xff]
    %v1173 = vld [vmem:[%s0 + $0x998] sm:$0xff]
    %v1174 = vld [vmem:[%s0 + $0x9a0] sm:$0xff]
    %v1175 = vld [vmem:[%s0 + $0x9a8] sm:$0xff]
    %v1176 = vld [vmem:[%s0 + $0x9b0] sm:$0xff]
    %v1177 = vld [vmem:[%s0 + $0x9b8] sm:$0xff]
    %v1178 = vld [vmem:[%s0 + $0x9c0] sm:$0xff]
    %v1179 = vld [vmem:[%s0 + $0x9c8] sm:$0xff]
    %v1180 = vld [vmem:[%s0 + $0x9d0] sm:$0xff]
    %v1181 = vld [vmem:[%s0 + $0x9d8] sm:$0xff]
    %v1182 = vld [vmem:[%s0 + $0x9e0] sm:$0xff]
    %v1183 = vld [vmem:[%s0 + $0x9e8] sm:$0xff]
    %v1184 = vld [vmem:[%s0 + $0x9f0] sm:$0xff]
    %v1185 = vld [vmem:[%s0 + $0x9f8] sm:$0xff]
    %v1186 = vld [vmem:[%s0 + $0xa00] sm:$0xff]
    %v1187 = vld [vmem:[%s0 + $0xa08] sm:$0xff]
    %v1188 = vld [vmem:[%s0 + $0xa10] sm:$0xff]
    %v1189 = vld [vmem:[%s0 + $0xa18] sm:$0xff]
    %v1190 = vld [vmem:[%s0 + $0xa20] sm:$0xff]
    %v1191 = vld [vmem:[%s0 + $0xa28] sm:$0xff]
    %v1192 = vld [vmem:[%s0 + $0xa30] sm:$0xff]
    %v1193 = vld [vmem:[%s0 + $0xa38] sm:$0xff]
    %v1194 = vld [vmem:[%s0 + $0xa40] sm:$0xff]
    %v1195 = vld [vmem:[%s0 + $0xa48] sm:$0xff]
    %v1196 = vld [vmem:[%s0 + $0xa50] sm:$0xff]
    %v1197 = vld [vmem:[%s0 + $0xa58] sm:$0xff]
    %v1198 = vld [vmem:[%s0 + $0xa60] sm:$0xff]
    %v1199 = vld [vmem:[%s0 + $0xa68] sm:$0xff]
    %v1200 = vld [vmem:[%s0 + $0xa70] sm:$0xff]
    %v1201 = vld [vmem:[%s0 + $0xa78] sm:$0xff]
    %v1202 = vld [vmem:[%s0 + $0xa80] sm:$0xff]
    %v1203 = vld [vmem:[%s0 + $0xa88] sm:$0xff]
    %v1204 = vld [vmem:[%s0 + $0xa90] sm:$0xff]
    %v1205 = vld [vmem:[%s0 + $0xa98] sm:$0xff]
    %v1206 = vld [vmem:[%s0 + $0xaa0] sm:$0xff]
    %v1207 = vld [vmem:[%s0 + $0xaa8] sm:$0xff]
    %v1208 = vld [vmem:[%s0 + $0xab0] sm:$0xff]
    %v1209 = vld [vmem:[%s0 + $0xab8] sm:$0xff]
    %v1210 = vld [vmem:[%s0 + $0xac0] sm:$0xff]
    %v1211 = vld [vmem:[%s0 + $0xac8] sm:$0xff]
    %v1212 = vld [vmem:[%s0 + $0xad0] sm:$0xff]
    %v1213 = vld [vmem:[%s0 + $0xad8] sm:$0xff]
    %v1214 = vld [vmem:[%s0 + $0xae0] sm:$0xff]
    %v1215 = vld [vmem:[%s0 + $0xae8] sm:$0xff]
    %v1216 = vld [vmem:[%s0 + $0xaf0] sm:$0xff]
    %v1217 = vld [vmem:[%s0 + $0xaf8] sm:$0xff]
    %v1218 = vld [vmem:[%s0 + $0xb00] sm:$0xff]
    %v1219 = vld [vmem:[%s0 + $0xb08] sm:$0xff]
    %v1220 = vld [vmem:[%s0 + $0xb10] sm:$0xff]
    %v1221 = vld [vmem:[%s0 + $0xb18] sm:$0xff]
    %v1222 = vld [vmem:[%s0 + $0xb20] sm:$0xff]
    %v1223 = vld [vmem:[%s0 + $0xb28] sm:$0xff]
    %v1224 = vld [vmem:[%s0 + $0xb30] sm:$0xff]
    %v1225 = vld [vmem:[%s0 + $0xb38] sm:$0xff]
    %v1226 = vld [vmem:[%s0 + $0xb40] sm:$0xff]
    %v1227 = vld [vmem:[%s0 + $0xb48] sm:$0xff]
    %v1228 = vld [vmem:[%s0 + $0xb50] sm:$0xff]
    %v1229 = vld [vmem:[%s0 + $0xb58] sm:$0xff]
    %v1230 = vld [vmem:[%s0 + $0xb60] sm:$0xff]
    %v1231 = vld [vmem:[%s0 + $0xb68] sm:$0xff]
    %v1232 = vld [vmem:[%s0 + $0xb70] sm:$0xff]
    %v1233 = vld [vmem:[%s0 + $0xb78] sm:$0xff]
    %v1234 = vld [vmem:[%s0 + $0xb80] sm:$0xff]
    %v1235 = vld [vmem:[%s0 + $0xb88] sm:$0xff]
    %v1236 = vld [vmem:[%s0 + $0xb90] sm:$0xff]
    %v1237 = vld [vmem:[%s0 + $0xb98] sm:$0xff]
    %v1238 = vld [vmem:[%s0 + $0xba0] sm:$0xff]
    %v1239 = vld [vmem:[%s0 + $0xba8] sm:$0xff]
    %v1240 = vld [vmem:[%s0 + $0xbb0] sm:$0xff]
    %v1241 = vld [vmem:[%s0 + $0xbb8] sm:$0xff]
    %v1242 = vld [vmem:[%s0 + $0xbc0] sm:$0xff]
    %v1243 = vld [vmem:[%s0 + $0xbc8] sm:$0xff]
    %v1244 = vld [vmem:[%s0 + $0xbd0] sm:$0xff]
    %v1245 = vld [vmem:[%s0 + $0xbd8] sm:$0xff]
    %v1246 = vld [vmem:[%s0 + $0xbe0] sm:$0xff]
    %v1247 = vld [vmem:[%s0 + $0xbe8] sm:$0xff]
    %v1248 = vld [vmem:[%s0 + $0xbf0] sm:$0xff]
    %v1249 = vld [vmem:[%s0 + $0xbf8] sm:$0xff]
    %v1250 = vld [vmem:[%s0 + $0xc00] sm:$0xff]
    %v1251 = vld [vmem:[%s0 + $0xc08] sm:$0xff]
    %v1252 = vld [vmem:[%s0 + $0xc10] sm:$0xff]
    %v1253 = vld [vmem:[%s0 + $0xc18] sm:$0xff]
    %v1254 = vld [vmem:[%s0 + $0xc20] sm:$0xff]
    %v1255 = vld [vmem:[%s0 + $0xc28] sm:$0xff]
    %v1256 = vld [vmem:[%s0 + $0xc30] sm:$0xff]
    %v1257 = vld [vmem:[%s0 + $0xc38] sm:$0xff]
    %v1258 = vld [vmem:[%s0 + $0xc40] sm:$0xff]
    %v1259 = vld [vmem:[%s0 + $0xc48] sm:$0xff]
    %v1260 = vld [vmem:[%s0 + $0xc50] sm:$0xff]
    %v1261 = vld [vmem:[%s0 + $0xc58] sm:$0xff]
    %v1262 = vld [vmem:[%s0 + $0xc60] sm:$0xff]
    %v1263 = vld [vmem:[%s0 + $0xc68] sm:$0xff]
    %v1264 = vld [vmem:[%s0 + $0xc70] sm:$0xff]
    %v1265 = vld [vmem:[%s0 + $0xc78] sm:$0xff]
    %v1266 = vld [vmem:[%s0 + $0xc80] sm:$0xff]
    %v1267 = vld [vmem:[%s0 + $0xc88] sm:$0xff]
    %v1268 = vld [vmem:[%s0 + $0xc90] sm:$0xff]
    %v1269 = vld [vmem:[%s0 + $0xc98] sm:$0xff]
    %v1270 = vld [vmem:[%s0 + $0xca0] sm:$0xff]
    %v1271 = vld [vmem:[%s0 + $0xca8] sm:$0xff]
    %v1272 = vld [vmem:[%s0 + $0xcb0] sm:$0xff]
    %v1273 = vld [vmem:[%s0 + $0xcb8] sm:$0xff]
    %v1274 = vld [vmem:[%s0 + $0xcc0] sm:$0xff]
    %v1275 = vld [vmem:[%s0 + $0xcc8] sm:$0xff]
    %v1276 = vld [vmem:[%s0 + $0xcd0] sm:$0xff]
    %v1277 = vld [vmem:[%s0 + $0xcd8] sm:$0xff]
    %v1278 = vld [vmem:[%s0 + $0xce0] sm:$0xff]
    %v1279 = vld [vmem:[%s0 + $0xce8] sm:$0xff]
    %v1280 = vld [vmem:[%s0 + $0xcf0] sm:$0xff]
    %v1281 = vld [vmem:[%s0 + $0xcf8] sm:$0xff]
    %v1282 = vld [vmem:[%s0 + $0xd00] sm:$0xff]
    %v1283 = vld [vmem:[%s0 + $0xd08] sm:$0xff]
    %v1284 = vld [vmem:[%s0 + $0xd10] sm:$0xff]
    %v1285 = vld [vmem:[%s0 + $0xd18] sm:$0xff]
    %v1286 = vld [vmem:[%s0 + $0xd20] sm:$0xff]
    %v1287 = vld [vmem:[%s0 + $0xd28] sm:$0xff]
    %v1288 = vld [vmem:[%s0 + $0xd30] sm:$0xff]
    %v1289 = vld [vmem:[%s0 + $0xd38] sm:$0xff]
    %v1290 = vld [vmem:[%s0 + $0xd40] sm:$0xff]
    %v1291 = vld [vmem:[%s0 + $0xd48] sm:$0xff]
    %v1292 = vld [vmem:[%s0 + $0xd50] sm:$0xff]
    %v1293 = vld [vmem:[%s0 + $0xd58] sm:$0xff]
    %v1294 = vld [vmem:[%s0 + $0xd60] sm:$0xff]
    %v1295 = vld [vmem:[%s0 + $0xd68] sm:$0xff]
    %v1296 = vld [vmem:[%s0 + $0xd70] sm:$0xff]
    %v1297 = vld [vmem:[%s0 + $0xd78] sm:$0xff]
    %v1298 = vld [vmem:[%s0 + $0xd80] sm:$0xff]
    %v1299 = vld [vmem:[%s0 + $0xd88] sm:$0xff]
    %v1300 = vld [vmem:[%s0 + $0xd90] sm:$0xff]
    %v1301 = vld [vmem:[%s0 + $0xd98] sm:$0xff]
    %v1302 = vld [vmem:[%s0 + $0xda0] sm:$0xff]
    %v1303 = vld [vmem:[%s0 + $0xda8] sm:$0xff]
    %v1304 = vld [vmem:[%s0 + $0xdb0] sm:$0xff]
    %v1305 = vld [vmem:[%s0 + $0xdb8] sm:$0xff]
    %v1306 = vld [vmem:[%s0 + $0xdc0] sm:$0xff]
    %v1307 = vld [vmem:[%s0 + $0xdc8] sm:$0xff]
    %v1308 = vld [vmem:[%s0 + $0xdd0] sm:$0xff]
    %v1309 = vld [vmem:[%s0 + $0xdd8] sm:$0xff]
    %v1310 = vld [vmem:[%s0 + $0xde0] sm:$0xff]
    %v1311 = vld [vmem:[%s0 + $0xde8] sm:$0xff]
    %v1312 = vld [vmem:[%s0 + $0xdf0] sm:$0xff]
    %v1313 = vld [vmem:[%s0 + $0xdf8] sm:$0xff]
    %v1314 = vld [vmem:[%s1] sm:$0xf]
    %v1316 = vperm.slane %v1314, 0
    %v1317 = vperm.slane %v1314, 1
    %v1318 = vperm.slane %v1314, 2
    %v1319 = vperm.slane %v1314, 3
    %v1352 = vunpack.c.l.b16 %v838
    %v1353 = vunpack.c.h.b16 %v838
    %v1354 = vunpack.c.l.b16 %v839
    %v1355 = vunpack.c.h.b16 %v839
    %v1356 = vunpack.c.l.b16 %v840
    %v1357 = vunpack.c.h.b16 %v840
    %v1358 = vunpack.c.l.b16 %v841
    %v1359 = vunpack.c.h.b16 %v841
    %v1360 = vunpack.c.l.b16 %v842
    %v1361 = vunpack.c.h.b16 %v842
    %v1362 = vunpack.c.l.b16 %v843
    %v1363 = vunpack.c.h.b16 %v843
    %v1364 = vunpack.c.l.b16 %v844
    %v1365 = vunpack.c.h.b16 %v844
    %v1366 = vunpack.c.l.b16 %v845
    %v1367 = vunpack.c.h.b16 %v845
    %v1368 = vunpack.c.l.b16 %v846
    %v1369 = vunpack.c.h.b16 %v846
    %v1370 = vunpack.c.l.b16 %v847
    %v1371 = vunpack.c.h.b16 %v847
    %v1372 = vunpack.c.l.b16 %v848
    %v1373 = vunpack.c.h.b16 %v848
    %v1374 = vunpack.c.l.b16 %v849
    %v1375 = vunpack.c.h.b16 %v849
    %v1376 = vunpack.c.l.b16 %v850
    %v1377 = vunpack.c.h.b16 %v850
    %v1378 = vunpack.c.l.b16 %v851
    %v1379 = vunpack.c.h.b16 %v851
    %v1380 = vunpack.c.l.b16 %v852
    %v1381 = vunpack.c.h.b16 %v852
    %v1382 = vunpack.c.l.b16 %v853
    %v1383 = vunpack.c.h.b16 %v853
    %v1384 = vunpack.c.l.b16 %v854
    %v1385 = vunpack.c.h.b16 %v854
    %v1386 = vunpack.c.l.b16 %v855
    %v1387 = vunpack.c.h.b16 %v855
    %v1388 = vunpack.c.l.b16 %v856
    %v1389 = vunpack.c.h.b16 %v856
    %v1390 = vunpack.c.l.b16 %v857
    %v1391 = vunpack.c.h.b16 %v857
    %v1392 = vunpack.c.l.b16 %v858
    %v1393 = vunpack.c.h.b16 %v858
    %v1394 = vunpack.c.l.b16 %v859
    %v1395 = vunpack.c.h.b16 %v859
    %v1396 = vunpack.c.l.b16 %v860
    %v1397 = vunpack.c.h.b16 %v860
    %v1398 = vunpack.c.l.b16 %v861
    %v1399 = vunpack.c.h.b16 %v861
    %v1400 = vunpack.c.l.b16 %v862
    %v1401 = vunpack.c.h.b16 %v862
    %v1402 = vunpack.c.l.b16 %v863
    %v1403 = vunpack.c.h.b16 %v863
    %v1404 = vunpack.c.l.b16 %v864
    %v1405 = vunpack.c.h.b16 %v864
    %v1406 = vunpack.c.l.b16 %v865
    %v1407 = vunpack.c.h.b16 %v865
    %v1408 = vpack.c.b16 %v1366, %v1352
    %v1409 = vpack.c.b16 %v1367, %v1353
    %v1410 = vpack.c.b16 %v1368, %v1354
    %v1411 = vpack.c.b16 %v1369, %v1355
    %v1412 = vpack.c.b16 %v1370, %v1356
    %v1413 = vpack.c.b16 %v1371, %v1357
    %v1414 = vpack.c.b16 %v1372, %v1358
    %v1415 = vpack.c.b16 %v1373, %v1359
    %v1416 = vpack.c.b16 %v1374, %v1360
    %v1417 = vpack.c.b16 %v1375, %v1361
    %v1418 = vpack.c.b16 %v1376, %v1362
    %v1419 = vpack.c.b16 %v1377, %v1363
    %v1420 = vpack.c.b16 %v1378, %v1364
    %v1421 = vpack.c.b16 %v1379, %v1365
    %v1422 = vpack.c.b16 %v1394, %v1380
    %v1423 = vpack.c.b16 %v1395, %v1381
    %v1424 = vpack.c.b16 %v1396, %v1382
    %v1425 = vpack.c.b16 %v1397, %v1383
    %v1426 = vpack.c.b16 %v1398, %v1384
    %v1427 = vpack.c.b16 %v1399, %v1385
    %v1428 = vpack.c.b16 %v1400, %v1386
    %v1429 = vpack.c.b16 %v1401, %v1387
    %v1430 = vpack.c.b16 %v1402, %v1388
    %v1431 = vpack.c.b16 %v1403, %v1389
    %v1432 = vpack.c.b16 %v1404, %v1390
    %v1433 = vpack.c.b16 %v1405, %v1391
    %v1434 = vpack.c.b16 %v1406, %v1392
    %v1435 = vpack.c.b16 %v1407, %v1393
    %v1912 = vunpack.c.l.b16 %v866
    %v1913 = vunpack.c.h.b16 %v866
    %v1914 = vunpack.c.l.b16 %v867
    %v1915 = vunpack.c.h.b16 %v867
    %v1916 = vunpack.c.l.b16 %v868
    %v1917 = vunpack.c.h.b16 %v868
    %v1918 = vunpack.c.l.b16 %v869
    %v1919 = vunpack.c.h.b16 %v869
    %v1920 = vunpack.c.l.b16 %v870
    %v1921 = vunpack.c.h.b16 %v870
    %v1922 = vunpack.c.l.b16 %v871
    %v1923 = vunpack.c.h.b16 %v871
    %v1924 = vunpack.c.l.b16 %v872
    %v1925 = vunpack.c.h.b16 %v872
    %v1926 = vunpack.c.l.b16 %v873
    %v1927 = vunpack.c.h.b16 %v873
    %v1928 = vunpack.c.l.b16 %v874
    %v1929 = vunpack.c.h.b16 %v874
    %v1930 = vunpack.c.l.b16 %v875
    %v1931 = vunpack.c.h.b16 %v875
    %v1932 = vunpack.c.l.b16 %v876
    %v1933 = vunpack.c.h.b16 %v876
    %v1934 = vunpack.c.l.b16 %v877
    %v1935 = vunpack.c.h.b16 %v877
    %v1936 = vunpack.c.l.b16 %v878
    %v1937 = vunpack.c.h.b16 %v878
    %v1938 = vunpack.c.l.b16 %v879
    %v1939 = vunpack.c.h.b16 %v879
    %v1940 = vunpack.c.l.b16 %v880
    %v1941 = vunpack.c.h.b16 %v880
    %v1942 = vunpack.c.l.b16 %v881
    %v1943 = vunpack.c.h.b16 %v881
    %v1944 = vunpack.c.l.b16 %v882
    %v1945 = vunpack.c.h.b16 %v882
    %v1946 = vunpack.c.l.b16 %v883
    %v1947 = vunpack.c.h.b16 %v883
    %v1948 = vunpack.c.l.b16 %v884
    %v1949 = vunpack.c.h.b16 %v884
    %v1950 = vunpack.c.l.b16 %v885
    %v1951 = vunpack.c.h.b16 %v885
    %v1952 = vunpack.c.l.b16 %v886
    %v1953 = vunpack.c.h.b16 %v886
    %v1954 = vunpack.c.l.b16 %v887
    %v1955 = vunpack.c.h.b16 %v887
    %v1956 = vunpack.c.l.b16 %v888
    %v1957 = vunpack.c.h.b16 %v888
    %v1958 = vunpack.c.l.b16 %v889
    %v1959 = vunpack.c.h.b16 %v889
    %v1960 = vunpack.c.l.b16 %v890
    %v1961 = vunpack.c.h.b16 %v890
    %v1962 = vunpack.c.l.b16 %v891
    %v1963 = vunpack.c.h.b16 %v891
    %v1964 = vunpack.c.l.b16 %v892
    %v1965 = vunpack.c.h.b16 %v892
    %v1966 = vunpack.c.l.b16 %v893
    %v1967 = vunpack.c.h.b16 %v893
    %v1968 = vunpack.c.l.b16 %v894
    %v1969 = vunpack.c.h.b16 %v894
    %v1970 = vunpack.c.l.b16 %v895
    %v1971 = vunpack.c.h.b16 %v895
    %v1972 = vunpack.c.l.b16 %v896
    %v1973 = vunpack.c.h.b16 %v896
    %v1974 = vunpack.c.l.b16 %v897
    %v1975 = vunpack.c.h.b16 %v897
    %v1976 = vunpack.c.l.b16 %v898
    %v1977 = vunpack.c.h.b16 %v898
    %v1978 = vunpack.c.l.b16 %v899
    %v1979 = vunpack.c.h.b16 %v899
    %v1980 = vunpack.c.l.b16 %v900
    %v1981 = vunpack.c.h.b16 %v900
    %v1982 = vunpack.c.l.b16 %v901
    %v1983 = vunpack.c.h.b16 %v901
    %v1984 = vunpack.c.l.b16 %v902
    %v1985 = vunpack.c.h.b16 %v902
    %v1986 = vunpack.c.l.b16 %v903
    %v1987 = vunpack.c.h.b16 %v903
    %v1988 = vunpack.c.l.b16 %v904
    %v1989 = vunpack.c.h.b16 %v904
    %v1990 = vunpack.c.l.b16 %v905
    %v1991 = vunpack.c.h.b16 %v905
    %v1992 = vunpack.c.l.b16 %v906
    %v1993 = vunpack.c.h.b16 %v906
    %v1994 = vunpack.c.l.b16 %v907
    %v1995 = vunpack.c.h.b16 %v907
    %v1996 = vunpack.c.l.b16 %v908
    %v1997 = vunpack.c.h.b16 %v908
    %v1998 = vunpack.c.l.b16 %v909
    %v1999 = vunpack.c.h.b16 %v909
    %v2000 = vunpack.c.l.b16 %v910
    %v2001 = vunpack.c.h.b16 %v910
    %v2002 = vunpack.c.l.b16 %v911
    %v2003 = vunpack.c.h.b16 %v911
    %v2004 = vunpack.c.l.b16 %v912
    %v2005 = vunpack.c.h.b16 %v912
    %v2006 = vunpack.c.l.b16 %v913
    %v2007 = vunpack.c.h.b16 %v913
    %v2008 = vunpack.c.l.b16 %v914
    %v2009 = vunpack.c.h.b16 %v914
    %v2010 = vunpack.c.l.b16 %v915
    %v2011 = vunpack.c.h.b16 %v915
    %v2012 = vunpack.c.l.b16 %v916
    %v2013 = vunpack.c.h.b16 %v916
    %v2014 = vunpack.c.l.b16 %v917
    %v2015 = vunpack.c.h.b16 %v917
    %v2016 = vunpack.c.l.b16 %v918
    %v2017 = vunpack.c.h.b16 %v918
    %v2018 = vunpack.c.l.b16 %v919
    %v2019 = vunpack.c.h.b16 %v919
    %v2020 = vunpack.c.l.b16 %v920
    %v2021 = vunpack.c.h.b16 %v920
    %v2022 = vunpack.c.l.b16 %v921
    %v2023 = vunpack.c.h.b16 %v921
    %v2024 = vunpack.c.l.b16 %v922
    %v2025 = vunpack.c.h.b16 %v922
    %v2026 = vunpack.c.l.b16 %v923
    %v2027 = vunpack.c.h.b16 %v923
    %v2028 = vunpack.c.l.b16 %v924
    %v2029 = vunpack.c.h.b16 %v924
    %v2030 = vunpack.c.l.b16 %v925
    %v2031 = vunpack.c.h.b16 %v925
    %v2032 = vunpack.c.l.b16 %v926
    %v2033 = vunpack.c.h.b16 %v926
    %v2034 = vunpack.c.l.b16 %v927
    %v2035 = vunpack.c.h.b16 %v927
    %v2036 = vunpack.c.l.b16 %v928
    %v2037 = vunpack.c.h.b16 %v928
    %v2038 = vunpack.c.l.b16 %v929
    %v2039 = vunpack.c.h.b16 %v929
    %v2040 = vunpack.c.l.b16 %v930
    %v2041 = vunpack.c.h.b16 %v930
    %v2042 = vunpack.c.l.b16 %v931
    %v2043 = vunpack.c.h.b16 %v931
    %v2044 = vunpack.c.l.b16 %v932
    %v2045 = vunpack.c.h.b16 %v932
    %v2046 = vunpack.c.l.b16 %v933
    %v2047 = vunpack.c.h.b16 %v933
    %v2048 = vunpack.c.l.b16 %v934
    %v2049 = vunpack.c.h.b16 %v934
    %v2050 = vunpack.c.l.b16 %v935
    %v2051 = vunpack.c.h.b16 %v935
    %v2052 = vunpack.c.l.b16 %v936
    %v2053 = vunpack.c.h.b16 %v936
    %v2054 = vunpack.c.l.b16 %v937
    %v2055 = vunpack.c.h.b16 %v937
    %v2056 = vunpack.c.l.b16 %v938
    %v2057 = vunpack.c.h.b16 %v938
    %v2058 = vunpack.c.l.b16 %v939
    %v2059 = vunpack.c.h.b16 %v939
    %v2060 = vunpack.c.l.b16 %v940
    %v2061 = vunpack.c.h.b16 %v940
    %v2062 = vunpack.c.l.b16 %v941
    %v2063 = vunpack.c.h.b16 %v941
    %v2064 = vunpack.c.l.b16 %v942
    %v2065 = vunpack.c.h.b16 %v942
    %v2066 = vunpack.c.l.b16 %v943
    %v2067 = vunpack.c.h.b16 %v943
    %v2068 = vunpack.c.l.b16 %v944
    %v2069 = vunpack.c.h.b16 %v944
    %v2070 = vunpack.c.l.b16 %v945
    %v2071 = vunpack.c.h.b16 %v945
    %v2072 = vunpack.c.l.b16 %v946
    %v2073 = vunpack.c.h.b16 %v946
    %v2074 = vunpack.c.l.b16 %v947
    %v2075 = vunpack.c.h.b16 %v947
    %v2076 = vunpack.c.l.b16 %v948
    %v2077 = vunpack.c.h.b16 %v948
    %v2078 = vunpack.c.l.b16 %v949
    %v2079 = vunpack.c.h.b16 %v949
    %v2080 = vunpack.c.l.b16 %v950
    %v2081 = vunpack.c.h.b16 %v950
    %v2082 = vunpack.c.l.b16 %v951
    %v2083 = vunpack.c.h.b16 %v951
    %v2084 = vunpack.c.l.b16 %v952
    %v2085 = vunpack.c.h.b16 %v952
    %v2086 = vunpack.c.l.b16 %v953
    %v2087 = vunpack.c.h.b16 %v953
    %v2088 = vunpack.c.l.b16 %v954
    %v2089 = vunpack.c.h.b16 %v954
    %v2090 = vunpack.c.l.b16 %v955
    %v2091 = vunpack.c.h.b16 %v955
    %v2092 = vunpack.c.l.b16 %v956
    %v2093 = vunpack.c.h.b16 %v956
    %v2094 = vunpack.c.l.b16 %v957
    %v2095 = vunpack.c.h.b16 %v957
    %v2096 = vunpack.c.l.b16 %v958
    %v2097 = vunpack.c.h.b16 %v958
    %v2098 = vunpack.c.l.b16 %v959
    %v2099 = vunpack.c.h.b16 %v959
    %v2100 = vunpack.c.l.b16 %v960
    %v2101 = vunpack.c.h.b16 %v960
    %v2102 = vunpack.c.l.b16 %v961
    %v2103 = vunpack.c.h.b16 %v961
    %v2104 = vunpack.c.l.b16 %v962
    %v2105 = vunpack.c.h.b16 %v962
    %v2106 = vunpack.c.l.b16 %v963
    %v2107 = vunpack.c.h.b16 %v963
    %v2108 = vunpack.c.l.b16 %v964
    %v2109 = vunpack.c.h.b16 %v964
    %v2110 = vunpack.c.l.b16 %v965
    %v2111 = vunpack.c.h.b16 %v965
    %v2112 = vunpack.c.l.b16 %v966
    %v2113 = vunpack.c.h.b16 %v966
    %v2114 = vunpack.c.l.b16 %v967
    %v2115 = vunpack.c.h.b16 %v967
    %v2116 = vunpack.c.l.b16 %v968
    %v2117 = vunpack.c.h.b16 %v968
    %v2118 = vunpack.c.l.b16 %v969
    %v2119 = vunpack.c.h.b16 %v969
    %v2120 = vunpack.c.l.b16 %v970
    %v2121 = vunpack.c.h.b16 %v970
    %v2122 = vunpack.c.l.b16 %v971
    %v2123 = vunpack.c.h.b16 %v971
    %v2124 = vunpack.c.l.b16 %v972
    %v2125 = vunpack.c.h.b16 %v972
    %v2126 = vunpack.c.l.b16 %v973
    %v2127 = vunpack.c.h.b16 %v973
    %v2128 = vunpack.c.l.b16 %v974
    %v2129 = vunpack.c.h.b16 %v974
    %v2130 = vunpack.c.l.b16 %v975
    %v2131 = vunpack.c.h.b16 %v975
    %v2132 = vunpack.c.l.b16 %v976
    %v2133 = vunpack.c.h.b16 %v976
    %v2134 = vunpack.c.l.b16 %v977
    %v2135 = vunpack.c.h.b16 %v977
    %v2136 = vunpack.c.l.b16 %v978
    %v2137 = vunpack.c.h.b16 %v978
    %v2138 = vunpack.c.l.b16 %v979
    %v2139 = vunpack.c.h.b16 %v979
    %v2140 = vunpack.c.l.b16 %v980
    %v2141 = vunpack.c.h.b16 %v980
    %v2142 = vunpack.c.l.b16 %v981
    %v2143 = vunpack.c.h.b16 %v981
    %v2144 = vunpack.c.l.b16 %v982
    %v2145 = vunpack.c.h.b16 %v982
    %v2146 = vunpack.c.l.b16 %v983
    %v2147 = vunpack.c.h.b16 %v983
    %v2148 = vunpack.c.l.b16 %v984
    %v2149 = vunpack.c.h.b16 %v984
    %v2150 = vunpack.c.l.b16 %v985
    %v2151 = vunpack.c.h.b16 %v985
    %v2152 = vunpack.c.l.b16 %v986
    %v2153 = vunpack.c.h.b16 %v986
    %v2154 = vunpack.c.l.b16 %v987
    %v2155 = vunpack.c.h.b16 %v987
    %v2156 = vunpack.c.l.b16 %v988
    %v2157 = vunpack.c.h.b16 %v988
    %v2158 = vunpack.c.l.b16 %v989
    %v2159 = vunpack.c.h.b16 %v989
    %v2160 = vunpack.c.l.b16 %v990
    %v2161 = vunpack.c.h.b16 %v990
    %v2162 = vunpack.c.l.b16 %v991
    %v2163 = vunpack.c.h.b16 %v991
    %v2164 = vunpack.c.l.b16 %v992
    %v2165 = vunpack.c.h.b16 %v992
    %v2166 = vunpack.c.l.b16 %v993
    %v2167 = vunpack.c.h.b16 %v993
    %v2168 = vunpack.c.l.b16 %v994
    %v2169 = vunpack.c.h.b16 %v994
    %v2170 = vunpack.c.l.b16 %v995
    %v2171 = vunpack.c.h.b16 %v995
    %v2172 = vunpack.c.l.b16 %v996
    %v2173 = vunpack.c.h.b16 %v996
    %v2174 = vunpack.c.l.b16 %v997
    %v2175 = vunpack.c.h.b16 %v997
    %v2176 = vunpack.c.l.b16 %v998
    %v2177 = vunpack.c.h.b16 %v998
    %v2178 = vunpack.c.l.b16 %v999
    %v2179 = vunpack.c.h.b16 %v999
    %v2180 = vunpack.c.l.b16 %v1000
    %v2181 = vunpack.c.h.b16 %v1000
    %v2182 = vunpack.c.l.b16 %v1001
    %v2183 = vunpack.c.h.b16 %v1001
    %v2184 = vunpack.c.l.b16 %v1002
    %v2185 = vunpack.c.h.b16 %v1002
    %v2186 = vunpack.c.l.b16 %v1003
    %v2187 = vunpack.c.h.b16 %v1003
    %v2188 = vunpack.c.l.b16 %v1004
    %v2189 = vunpack.c.h.b16 %v1004
    %v2190 = vunpack.c.l.b16 %v1005
    %v2191 = vunpack.c.h.b16 %v1005
    %v2192 = vunpack.c.l.b16 %v1006
    %v2193 = vunpack.c.h.b16 %v1006
    %v2194 = vunpack.c.l.b16 %v1007
    %v2195 = vunpack.c.h.b16 %v1007
    %v2196 = vunpack.c.l.b16 %v1008
    %v2197 = vunpack.c.h.b16 %v1008
    %v2198 = vunpack.c.l.b16 %v1009
    %v2199 = vunpack.c.h.b16 %v1009
    %v2200 = vunpack.c.l.b16 %v1010
    %v2201 = vunpack.c.h.b16 %v1010
    %v2202 = vunpack.c.l.b16 %v1011
    %v2203 = vunpack.c.h.b16 %v1011
    %v2204 = vunpack.c.l.b16 %v1012
    %v2205 = vunpack.c.h.b16 %v1012
    %v2206 = vunpack.c.l.b16 %v1013
    %v2207 = vunpack.c.h.b16 %v1013
    %v2208 = vunpack.c.l.b16 %v1014
    %v2209 = vunpack.c.h.b16 %v1014
    %v2210 = vunpack.c.l.b16 %v1015
    %v2211 = vunpack.c.h.b16 %v1015
    %v2212 = vunpack.c.l.b16 %v1016
    %v2213 = vunpack.c.h.b16 %v1016
    %v2214 = vunpack.c.l.b16 %v1017
    %v2215 = vunpack.c.h.b16 %v1017
    %v2216 = vunpack.c.l.b16 %v1018
    %v2217 = vunpack.c.h.b16 %v1018
    %v2218 = vunpack.c.l.b16 %v1019
    %v2219 = vunpack.c.h.b16 %v1019
    %v2220 = vunpack.c.l.b16 %v1020
    %v2221 = vunpack.c.h.b16 %v1020
    %v2222 = vunpack.c.l.b16 %v1021
    %v2223 = vunpack.c.h.b16 %v1021
    %v2224 = vunpack.c.l.b16 %v1022
    %v2225 = vunpack.c.h.b16 %v1022
    %v2226 = vunpack.c.l.b16 %v1023
    %v2227 = vunpack.c.h.b16 %v1023
    %v2228 = vunpack.c.l.b16 %v1024
    %v2229 = vunpack.c.h.b16 %v1024
    %v2230 = vunpack.c.l.b16 %v1025
    %v2231 = vunpack.c.h.b16 %v1025
    %v2232 = vunpack.c.l.b16 %v1026
    %v2233 = vunpack.c.h.b16 %v1026
    %v2234 = vunpack.c.l.b16 %v1027
    %v2235 = vunpack.c.h.b16 %v1027
    %v2236 = vunpack.c.l.b16 %v1028
    %v2237 = vunpack.c.h.b16 %v1028
    %v2238 = vunpack.c.l.b16 %v1029
    %v2239 = vunpack.c.h.b16 %v1029
    %v2240 = vunpack.c.l.b16 %v1030
    %v2241 = vunpack.c.h.b16 %v1030
    %v2242 = vunpack.c.l.b16 %v1031
    %v2243 = vunpack.c.h.b16 %v1031
    %v2244 = vunpack.c.l.b16 %v1032
    %v2245 = vunpack.c.h.b16 %v1032
    %v2246 = vunpack.c.l.b16 %v1033
    %v2247 = vunpack.c.h.b16 %v1033
    %v2248 = vunpack.c.l.b16 %v1034
    %v2249 = vunpack.c.h.b16 %v1034
    %v2250 = vunpack.c.l.b16 %v1035
    %v2251 = vunpack.c.h.b16 %v1035
    %v2252 = vunpack.c.l.b16 %v1036
    %v2253 = vunpack.c.h.b16 %v1036
    %v2254 = vunpack.c.l.b16 %v1037
    %v2255 = vunpack.c.h.b16 %v1037
    %v2256 = vunpack.c.l.b16 %v1038
    %v2257 = vunpack.c.h.b16 %v1038
    %v2258 = vunpack.c.l.b16 %v1039
    %v2259 = vunpack.c.h.b16 %v1039
    %v2260 = vunpack.c.l.b16 %v1040
    %v2261 = vunpack.c.h.b16 %v1040
    %v2262 = vunpack.c.l.b16 %v1041
    %v2263 = vunpack.c.h.b16 %v1041
    %v2264 = vunpack.c.l.b16 %v1042
    %v2265 = vunpack.c.h.b16 %v1042
    %v2266 = vunpack.c.l.b16 %v1043
    %v2267 = vunpack.c.h.b16 %v1043
    %v2268 = vunpack.c.l.b16 %v1044
    %v2269 = vunpack.c.h.b16 %v1044
    %v2270 = vunpack.c.l.b16 %v1045
    %v2271 = vunpack.c.h.b16 %v1045
    %v2272 = vunpack.c.l.b16 %v1046
    %v2273 = vunpack.c.h.b16 %v1046
    %v2274 = vunpack.c.l.b16 %v1047
    %v2275 = vunpack.c.h.b16 %v1047
    %v2276 = vunpack.c.l.b16 %v1048
    %v2277 = vunpack.c.h.b16 %v1048
    %v2278 = vunpack.c.l.b16 %v1049
    %v2279 = vunpack.c.h.b16 %v1049
    %v2280 = vunpack.c.l.b16 %v1050
    %v2281 = vunpack.c.h.b16 %v1050
    %v2282 = vunpack.c.l.b16 %v1051
    %v2283 = vunpack.c.h.b16 %v1051
    %v2284 = vunpack.c.l.b16 %v1052
    %v2285 = vunpack.c.h.b16 %v1052
    %v2286 = vunpack.c.l.b16 %v1053
    %v2287 = vunpack.c.h.b16 %v1053
    %v2288 = vunpack.c.l.b16 %v1054
    %v2289 = vunpack.c.h.b16 %v1054
    %v2290 = vunpack.c.l.b16 %v1055
    %v2291 = vunpack.c.h.b16 %v1055
    %v2292 = vunpack.c.l.b16 %v1056
    %v2293 = vunpack.c.h.b16 %v1056
    %v2294 = vunpack.c.l.b16 %v1057
    %v2295 = vunpack.c.h.b16 %v1057
    %v2296 = vunpack.c.l.b16 %v1058
    %v2297 = vunpack.c.h.b16 %v1058
    %v2298 = vunpack.c.l.b16 %v1059
    %v2299 = vunpack.c.h.b16 %v1059
    %v2300 = vunpack.c.l.b16 %v1060
    %v2301 = vunpack.c.h.b16 %v1060
    %v2302 = vunpack.c.l.b16 %v1061
    %v2303 = vunpack.c.h.b16 %v1061
    %v2304 = vunpack.c.l.b16 %v1062
    %v2305 = vunpack.c.h.b16 %v1062
    %v2306 = vunpack.c.l.b16 %v1063
    %v2307 = vunpack.c.h.b16 %v1063
    %v2308 = vunpack.c.l.b16 %v1064
    %v2309 = vunpack.c.h.b16 %v1064
    %v2310 = vunpack.c.l.b16 %v1065
    %v2311 = vunpack.c.h.b16 %v1065
    %v2312 = vunpack.c.l.b16 %v1066
    %v2313 = vunpack.c.h.b16 %v1066
    %v2314 = vunpack.c.l.b16 %v1067
    %v2315 = vunpack.c.h.b16 %v1067
    %v2316 = vunpack.c.l.b16 %v1068
    %v2317 = vunpack.c.h.b16 %v1068
    %v2318 = vunpack.c.l.b16 %v1069
    %v2319 = vunpack.c.h.b16 %v1069
    %v2320 = vunpack.c.l.b16 %v1070
    %v2321 = vunpack.c.h.b16 %v1070
    %v2322 = vunpack.c.l.b16 %v1071
    %v2323 = vunpack.c.h.b16 %v1071
    %v2324 = vunpack.c.l.b16 %v1072
    %v2325 = vunpack.c.h.b16 %v1072
    %v2326 = vunpack.c.l.b16 %v1073
    %v2327 = vunpack.c.h.b16 %v1073
    %v2328 = vunpack.c.l.b16 %v1074
    %v2329 = vunpack.c.h.b16 %v1074
    %v2330 = vunpack.c.l.b16 %v1075
    %v2331 = vunpack.c.h.b16 %v1075
    %v2332 = vunpack.c.l.b16 %v1076
    %v2333 = vunpack.c.h.b16 %v1076
    %v2334 = vunpack.c.l.b16 %v1077
    %v2335 = vunpack.c.h.b16 %v1077
    %v2336 = vunpack.c.l.b16 %v1078
    %v2337 = vunpack.c.h.b16 %v1078
    %v2338 = vunpack.c.l.b16 %v1079
    %v2339 = vunpack.c.h.b16 %v1079
    %v2340 = vunpack.c.l.b16 %v1080
    %v2341 = vunpack.c.h.b16 %v1080
    %v2342 = vunpack.c.l.b16 %v1081
    %v2343 = vunpack.c.h.b16 %v1081
    %v2344 = vunpack.c.l.b16 %v1082
    %v2345 = vunpack.c.h.b16 %v1082
    %v2346 = vunpack.c.l.b16 %v1083
    %v2347 = vunpack.c.h.b16 %v1083
    %v2348 = vunpack.c.l.b16 %v1084
    %v2349 = vunpack.c.h.b16 %v1084
    %v2350 = vunpack.c.l.b16 %v1085
    %v2351 = vunpack.c.h.b16 %v1085
    %v2352 = vunpack.c.l.b16 %v1086
    %v2353 = vunpack.c.h.b16 %v1086
    %v2354 = vunpack.c.l.b16 %v1087
    %v2355 = vunpack.c.h.b16 %v1087
    %v2356 = vunpack.c.l.b16 %v1088
    %v2357 = vunpack.c.h.b16 %v1088
    %v2358 = vunpack.c.l.b16 %v1089
    %v2359 = vunpack.c.h.b16 %v1089
    %v2360 = vunpack.c.l.b16 %v1090
    %v2361 = vunpack.c.h.b16 %v1090
    %v2362 = vunpack.c.l.b16 %v1091
    %v2363 = vunpack.c.h.b16 %v1091
    %v2364 = vunpack.c.l.b16 %v1092
    %v2365 = vunpack.c.h.b16 %v1092
    %v2366 = vunpack.c.l.b16 %v1093
    %v2367 = vunpack.c.h.b16 %v1093
    %v2368 = vunpack.c.l.b16 %v1094
    %v2369 = vunpack.c.h.b16 %v1094
    %v2370 = vunpack.c.l.b16 %v1095
    %v2371 = vunpack.c.h.b16 %v1095
    %v2372 = vunpack.c.l.b16 %v1096
    %v2373 = vunpack.c.h.b16 %v1096
    %v2374 = vunpack.c.l.b16 %v1097
    %v2375 = vunpack.c.h.b16 %v1097
    %v2376 = vunpack.c.l.b16 %v1098
    %v2377 = vunpack.c.h.b16 %v1098
    %v2378 = vunpack.c.l.b16 %v1099
    %v2379 = vunpack.c.h.b16 %v1099
    %v2380 = vunpack.c.l.b16 %v1100
    %v2381 = vunpack.c.h.b16 %v1100
    %v2382 = vunpack.c.l.b16 %v1101
    %v2383 = vunpack.c.h.b16 %v1101
    %v2384 = vunpack.c.l.b16 %v1102
    %v2385 = vunpack.c.h.b16 %v1102
    %v2386 = vunpack.c.l.b16 %v1103
    %v2387 = vunpack.c.h.b16 %v1103
    %v2388 = vunpack.c.l.b16 %v1104
    %v2389 = vunpack.c.h.b16 %v1104
    %v2390 = vunpack.c.l.b16 %v1105
    %v2391 = vunpack.c.h.b16 %v1105
    %v2392 = vunpack.c.l.b16 %v1106
    %v2393 = vunpack.c.h.b16 %v1106
    %v2394 = vunpack.c.l.b16 %v1107
    %v2395 = vunpack.c.h.b16 %v1107
    %v2396 = vunpack.c.l.b16 %v1108
    %v2397 = vunpack.c.h.b16 %v1108
    %v2398 = vunpack.c.l.b16 %v1109
    %v2399 = vunpack.c.h.b16 %v1109
    %v2400 = vunpack.c.l.b16 %v1110
    %v2401 = vunpack.c.h.b16 %v1110
    %v2402 = vunpack.c.l.b16 %v1111
    %v2403 = vunpack.c.h.b16 %v1111
    %v2404 = vunpack.c.l.b16 %v1112
    %v2405 = vunpack.c.h.b16 %v1112
    %v2406 = vunpack.c.l.b16 %v1113
    %v2407 = vunpack.c.h.b16 %v1113
    %v2408 = vunpack.c.l.b16 %v1114
    %v2409 = vunpack.c.h.b16 %v1114
    %v2410 = vunpack.c.l.b16 %v1115
    %v2411 = vunpack.c.h.b16 %v1115
    %v2412 = vunpack.c.l.b16 %v1116
    %v2413 = vunpack.c.h.b16 %v1116
    %v2414 = vunpack.c.l.b16 %v1117
    %v2415 = vunpack.c.h.b16 %v1117
    %v2416 = vunpack.c.l.b16 %v1118
    %v2417 = vunpack.c.h.b16 %v1118
    %v2418 = vunpack.c.l.b16 %v1119
    %v2419 = vunpack.c.h.b16 %v1119
    %v2420 = vunpack.c.l.b16 %v1120
    %v2421 = vunpack.c.h.b16 %v1120
    %v2422 = vunpack.c.l.b16 %v1121
    %v2423 = vunpack.c.h.b16 %v1121
    %v2424 = vunpack.c.l.b16 %v1122
    %v2425 = vunpack.c.h.b16 %v1122
    %v2426 = vunpack.c.l.b16 %v1123
    %v2427 = vunpack.c.h.b16 %v1123
    %v2428 = vunpack.c.l.b16 %v1124
    %v2429 = vunpack.c.h.b16 %v1124
    %v2430 = vunpack.c.l.b16 %v1125
    %v2431 = vunpack.c.h.b16 %v1125
    %v2432 = vunpack.c.l.b16 %v1126
    %v2433 = vunpack.c.h.b16 %v1126
    %v2434 = vunpack.c.l.b16 %v1127
    %v2435 = vunpack.c.h.b16 %v1127
    %v2436 = vunpack.c.l.b16 %v1128
    %v2437 = vunpack.c.h.b16 %v1128
    %v2438 = vunpack.c.l.b16 %v1129
    %v2439 = vunpack.c.h.b16 %v1129
    %v2440 = vunpack.c.l.b16 %v1130
    %v2441 = vunpack.c.h.b16 %v1130
    %v2442 = vunpack.c.l.b16 %v1131
    %v2443 = vunpack.c.h.b16 %v1131
    %v2444 = vunpack.c.l.b16 %v1132
    %v2445 = vunpack.c.h.b16 %v1132
    %v2446 = vunpack.c.l.b16 %v1133
    %v2447 = vunpack.c.h.b16 %v1133
    %v2448 = vunpack.c.l.b16 %v1134
    %v2449 = vunpack.c.h.b16 %v1134
    %v2450 = vunpack.c.l.b16 %v1135
    %v2451 = vunpack.c.h.b16 %v1135
    %v2452 = vunpack.c.l.b16 %v1136
    %v2453 = vunpack.c.h.b16 %v1136
    %v2454 = vunpack.c.l.b16 %v1137
    %v2455 = vunpack.c.h.b16 %v1137
    %v2456 = vunpack.c.l.b16 %v1138
    %v2457 = vunpack.c.h.b16 %v1138
    %v2458 = vunpack.c.l.b16 %v1139
    %v2459 = vunpack.c.h.b16 %v1139
    %v2460 = vunpack.c.l.b16 %v1140
    %v2461 = vunpack.c.h.b16 %v1140
    %v2462 = vunpack.c.l.b16 %v1141
    %v2463 = vunpack.c.h.b16 %v1141
    %v2464 = vunpack.c.l.b16 %v1142
    %v2465 = vunpack.c.h.b16 %v1142
    %v2466 = vunpack.c.l.b16 %v1143
    %v2467 = vunpack.c.h.b16 %v1143
    %v2468 = vunpack.c.l.b16 %v1144
    %v2469 = vunpack.c.h.b16 %v1144
    %v2470 = vunpack.c.l.b16 %v1145
    %v2471 = vunpack.c.h.b16 %v1145
    %v2472 = vunpack.c.l.b16 %v1146
    %v2473 = vunpack.c.h.b16 %v1146
    %v2474 = vunpack.c.l.b16 %v1147
    %v2475 = vunpack.c.h.b16 %v1147
    %v2476 = vunpack.c.l.b16 %v1148
    %v2477 = vunpack.c.h.b16 %v1148
    %v2478 = vunpack.c.l.b16 %v1149
    %v2479 = vunpack.c.h.b16 %v1149
    %v2480 = vunpack.c.l.b16 %v1150
    %v2481 = vunpack.c.h.b16 %v1150
    %v2482 = vunpack.c.l.b16 %v1151
    %v2483 = vunpack.c.h.b16 %v1151
    %v2484 = vunpack.c.l.b16 %v1152
    %v2485 = vunpack.c.h.b16 %v1152
    %v2486 = vunpack.c.l.b16 %v1153
    %v2487 = vunpack.c.h.b16 %v1153
    %v2488 = vunpack.c.l.b16 %v1154
    %v2489 = vunpack.c.h.b16 %v1154
    %v2490 = vunpack.c.l.b16 %v1155
    %v2491 = vunpack.c.h.b16 %v1155
    %v2492 = vunpack.c.l.b16 %v1156
    %v2493 = vunpack.c.h.b16 %v1156
    %v2494 = vunpack.c.l.b16 %v1157
    %v2495 = vunpack.c.h.b16 %v1157
    %v2496 = vunpack.c.l.b16 %v1158
    %v2497 = vunpack.c.h.b16 %v1158
    %v2498 = vunpack.c.l.b16 %v1159
    %v2499 = vunpack.c.h.b16 %v1159
    %v2500 = vunpack.c.l.b16 %v1160
    %v2501 = vunpack.c.h.b16 %v1160
    %v2502 = vunpack.c.l.b16 %v1161
    %v2503 = vunpack.c.h.b16 %v1161
    %v2504 = vunpack.c.l.b16 %v1162
    %v2505 = vunpack.c.h.b16 %v1162
    %v2506 = vunpack.c.l.b16 %v1163
    %v2507 = vunpack.c.h.b16 %v1163
    %v2508 = vunpack.c.l.b16 %v1164
    %v2509 = vunpack.c.h.b16 %v1164
    %v2510 = vunpack.c.l.b16 %v1165
    %v2511 = vunpack.c.h.b16 %v1165
    %v2512 = vunpack.c.l.b16 %v1166
    %v2513 = vunpack.c.h.b16 %v1166
    %v2514 = vunpack.c.l.b16 %v1167
    %v2515 = vunpack.c.h.b16 %v1167
    %v2516 = vunpack.c.l.b16 %v1168
    %v2517 = vunpack.c.h.b16 %v1168
    %v2518 = vunpack.c.l.b16 %v1169
    %v2519 = vunpack.c.h.b16 %v1169
    %v2520 = vunpack.c.l.b16 %v1170
    %v2521 = vunpack.c.h.b16 %v1170
    %v2522 = vunpack.c.l.b16 %v1171
    %v2523 = vunpack.c.h.b16 %v1171
    %v2524 = vunpack.c.l.b16 %v1172
    %v2525 = vunpack.c.h.b16 %v1172
    %v2526 = vunpack.c.l.b16 %v1173
    %v2527 = vunpack.c.h.b16 %v1173
    %v2528 = vunpack.c.l.b16 %v1174
    %v2529 = vunpack.c.h.b16 %v1174
    %v2530 = vunpack.c.l.b16 %v1175
    %v2531 = vunpack.c.h.b16 %v1175
    %v2532 = vunpack.c.l.b16 %v1176
    %v2533 = vunpack.c.h.b16 %v1176
    %v2534 = vunpack.c.l.b16 %v1177
    %v2535 = vunpack.c.h.b16 %v1177
    %v2536 = vunpack.c.l.b16 %v1178
    %v2537 = vunpack.c.h.b16 %v1178
    %v2538 = vunpack.c.l.b16 %v1179
    %v2539 = vunpack.c.h.b16 %v1179
    %v2540 = vunpack.c.l.b16 %v1180
    %v2541 = vunpack.c.h.b16 %v1180
    %v2542 = vunpack.c.l.b16 %v1181
    %v2543 = vunpack.c.h.b16 %v1181
    %v2544 = vunpack.c.l.b16 %v1182
    %v2545 = vunpack.c.h.b16 %v1182
    %v2546 = vunpack.c.l.b16 %v1183
    %v2547 = vunpack.c.h.b16 %v1183
    %v2548 = vunpack.c.l.b16 %v1184
    %v2549 = vunpack.c.h.b16 %v1184
    %v2550 = vunpack.c.l.b16 %v1185
    %v2551 = vunpack.c.h.b16 %v1185
    %v2552 = vunpack.c.l.b16 %v1186
    %v2553 = vunpack.c.h.b16 %v1186
    %v2554 = vunpack.c.l.b16 %v1187
    %v2555 = vunpack.c.h.b16 %v1187
    %v2556 = vunpack.c.l.b16 %v1188
    %v2557 = vunpack.c.h.b16 %v1188
    %v2558 = vunpack.c.l.b16 %v1189
    %v2559 = vunpack.c.h.b16 %v1189
    %v2560 = vunpack.c.l.b16 %v1190
    %v2561 = vunpack.c.h.b16 %v1190
    %v2562 = vunpack.c.l.b16 %v1191
    %v2563 = vunpack.c.h.b16 %v1191
    %v2564 = vunpack.c.l.b16 %v1192
    %v2565 = vunpack.c.h.b16 %v1192
    %v2566 = vunpack.c.l.b16 %v1193
    %v2567 = vunpack.c.h.b16 %v1193
    %v2568 = vunpack.c.l.b16 %v1194
    %v2569 = vunpack.c.h.b16 %v1194
    %v2570 = vunpack.c.l.b16 %v1195
    %v2571 = vunpack.c.h.b16 %v1195
    %v2572 = vunpack.c.l.b16 %v1196
    %v2573 = vunpack.c.h.b16 %v1196
    %v2574 = vunpack.c.l.b16 %v1197
    %v2575 = vunpack.c.h.b16 %v1197
    %v2576 = vunpack.c.l.b16 %v1198
    %v2577 = vunpack.c.h.b16 %v1198
    %v2578 = vunpack.c.l.b16 %v1199
    %v2579 = vunpack.c.h.b16 %v1199
    %v2580 = vunpack.c.l.b16 %v1200
    %v2581 = vunpack.c.h.b16 %v1200
    %v2582 = vunpack.c.l.b16 %v1201
    %v2583 = vunpack.c.h.b16 %v1201
    %v2584 = vunpack.c.l.b16 %v1202
    %v2585 = vunpack.c.h.b16 %v1202
    %v2586 = vunpack.c.l.b16 %v1203
    %v2587 = vunpack.c.h.b16 %v1203
    %v2588 = vunpack.c.l.b16 %v1204
    %v2589 = vunpack.c.h.b16 %v1204
    %v2590 = vunpack.c.l.b16 %v1205
    %v2591 = vunpack.c.h.b16 %v1205
    %v2592 = vunpack.c.l.b16 %v1206
    %v2593 = vunpack.c.h.b16 %v1206
    %v2594 = vunpack.c.l.b16 %v1207
    %v2595 = vunpack.c.h.b16 %v1207
    %v2596 = vunpack.c.l.b16 %v1208
    %v2597 = vunpack.c.h.b16 %v1208
    %v2598 = vunpack.c.l.b16 %v1209
    %v2599 = vunpack.c.h.b16 %v1209
    %v2600 = vunpack.c.l.b16 %v1210
    %v2601 = vunpack.c.h.b16 %v1210
    %v2602 = vunpack.c.l.b16 %v1211
    %v2603 = vunpack.c.h.b16 %v1211
    %v2604 = vunpack.c.l.b16 %v1212
    %v2605 = vunpack.c.h.b16 %v1212
    %v2606 = vunpack.c.l.b16 %v1213
    %v2607 = vunpack.c.h.b16 %v1213
    %v2608 = vunpack.c.l.b16 %v1214
    %v2609 = vunpack.c.h.b16 %v1214
    %v2610 = vunpack.c.l.b16 %v1215
    %v2611 = vunpack.c.h.b16 %v1215
    %v2612 = vunpack.c.l.b16 %v1216
    %v2613 = vunpack.c.h.b16 %v1216
    %v2614 = vunpack.c.l.b16 %v1217
    %v2615 = vunpack.c.h.b16 %v1217
    %v2616 = vunpack.c.l.b16 %v1218
    %v2617 = vunpack.c.h.b16 %v1218
    %v2618 = vunpack.c.l.b16 %v1219
    %v2619 = vunpack.c.h.b16 %v1219
    %v2620 = vunpack.c.l.b16 %v1220
    %v2621 = vunpack.c.h.b16 %v1220
    %v2622 = vunpack.c.l.b16 %v1221
    %v2623 = vunpack.c.h.b16 %v1221
    %v2624 = vunpack.c.l.b16 %v1222
    %v2625 = vunpack.c.h.b16 %v1222
    %v2626 = vunpack.c.l.b16 %v1223
    %v2627 = vunpack.c.h.b16 %v1223
    %v2628 = vunpack.c.l.b16 %v1224
    %v2629 = vunpack.c.h.b16 %v1224
    %v2630 = vunpack.c.l.b16 %v1225
    %v2631 = vunpack.c.h.b16 %v1225
    %v2632 = vunpack.c.l.b16 %v1226
    %v2633 = vunpack.c.h.b16 %v1226
    %v2634 = vunpack.c.l.b16 %v1227
    %v2635 = vunpack.c.h.b16 %v1227
    %v2636 = vunpack.c.l.b16 %v1228
    %v2637 = vunpack.c.h.b16 %v1228
    %v2638 = vunpack.c.l.b16 %v1229
    %v2639 = vunpack.c.h.b16 %v1229
    %v2640 = vunpack.c.l.b16 %v1230
    %v2641 = vunpack.c.h.b16 %v1230
    %v2642 = vunpack.c.l.b16 %v1231
    %v2643 = vunpack.c.h.b16 %v1231
    %v2644 = vunpack.c.l.b16 %v1232
    %v2645 = vunpack.c.h.b16 %v1232
    %v2646 = vunpack.c.l.b16 %v1233
    %v2647 = vunpack.c.h.b16 %v1233
    %v2648 = vunpack.c.l.b16 %v1234
    %v2649 = vunpack.c.h.b16 %v1234
    %v2650 = vunpack.c.l.b16 %v1235
    %v2651 = vunpack.c.h.b16 %v1235
    %v2652 = vunpack.c.l.b16 %v1236
    %v2653 = vunpack.c.h.b16 %v1236
    %v2654 = vunpack.c.l.b16 %v1237
    %v2655 = vunpack.c.h.b16 %v1237
    %v2656 = vunpack.c.l.b16 %v1238
    %v2657 = vunpack.c.h.b16 %v1238
    %v2658 = vunpack.c.l.b16 %v1239
    %v2659 = vunpack.c.h.b16 %v1239
    %v2660 = vunpack.c.l.b16 %v1240
    %v2661 = vunpack.c.h.b16 %v1240
    %v2662 = vunpack.c.l.b16 %v1241
    %v2663 = vunpack.c.h.b16 %v1241
    %v2664 = vunpack.c.l.b16 %v1242
    %v2665 = vunpack.c.h.b16 %v1242
    %v2666 = vunpack.c.l.b16 %v1243
    %v2667 = vunpack.c.h.b16 %v1243
    %v2668 = vunpack.c.l.b16 %v1244
    %v2669 = vunpack.c.h.b16 %v1244
    %v2670 = vunpack.c.l.b16 %v1245
    %v2671 = vunpack.c.h.b16 %v1245
    %v2672 = vunpack.c.l.b16 %v1246
    %v2673 = vunpack.c.h.b16 %v1246
    %v2674 = vunpack.c.l.b16 %v1247
    %v2675 = vunpack.c.h.b16 %v1247
    %v2676 = vunpack.c.l.b16 %v1248
    %v2677 = vunpack.c.h.b16 %v1248
    %v2678 = vunpack.c.l.b16 %v1249
    %v2679 = vunpack.c.h.b16 %v1249
    %v2680 = vunpack.c.l.b16 %v1250
    %v2681 = vunpack.c.h.b16 %v1250
    %v2682 = vunpack.c.l.b16 %v1251
    %v2683 = vunpack.c.h.b16 %v1251
    %v2684 = vunpack.c.l.b16 %v1252
    %v2685 = vunpack.c.h.b16 %v1252
    %v2686 = vunpack.c.l.b16 %v1253
    %v2687 = vunpack.c.h.b16 %v1253
    %v2688 = vunpack.c.l.b16 %v1254
    %v2689 = vunpack.c.h.b16 %v1254
    %v2690 = vunpack.c.l.b16 %v1255
    %v2691 = vunpack.c.h.b16 %v1255
    %v2692 = vunpack.c.l.b16 %v1256
    %v2693 = vunpack.c.h.b16 %v1256
    %v2694 = vunpack.c.l.b16 %v1257
    %v2695 = vunpack.c.h.b16 %v1257
    %v2696 = vunpack.c.l.b16 %v1258
    %v2697 = vunpack.c.h.b16 %v1258
    %v2698 = vunpack.c.l.b16 %v1259
    %v2699 = vunpack.c.h.b16 %v1259
    %v2700 = vunpack.c.l.b16 %v1260
    %v2701 = vunpack.c.h.b16 %v1260
    %v2702 = vunpack.c.l.b16 %v1261
    %v2703 = vunpack.c.h.b16 %v1261
    %v2704 = vunpack.c.l.b16 %v1262
    %v2705 = vunpack.c.h.b16 %v1262
    %v2706 = vunpack.c.l.b16 %v1263
    %v2707 = vunpack.c.h.b16 %v1263
    %v2708 = vunpack.c.l.b16 %v1264
    %v2709 = vunpack.c.h.b16 %v1264
    %v2710 = vunpack.c.l.b16 %v1265
    %v2711 = vunpack.c.h.b16 %v1265
    %v2712 = vunpack.c.l.b16 %v1266
    %v2713 = vunpack.c.h.b16 %v1266
    %v2714 = vunpack.c.l.b16 %v1267
    %v2715 = vunpack.c.h.b16 %v1267
    %v2716 = vunpack.c.l.b16 %v1268
    %v2717 = vunpack.c.h.b16 %v1268
    %v2718 = vunpack.c.l.b16 %v1269
    %v2719 = vunpack.c.h.b16 %v1269
    %v2720 = vunpack.c.l.b16 %v1270
    %v2721 = vunpack.c.h.b16 %v1270
    %v2722 = vunpack.c.l.b16 %v1271
    %v2723 = vunpack.c.h.b16 %v1271
    %v2724 = vunpack.c.l.b16 %v1272
    %v2725 = vunpack.c.h.b16 %v1272
    %v2726 = vunpack.c.l.b16 %v1273
    %v2727 = vunpack.c.h.b16 %v1273
    %v2728 = vunpack.c.l.b16 %v1274
    %v2729 = vunpack.c.h.b16 %v1274
    %v2730 = vunpack.c.l.b16 %v1275
    %v2731 = vunpack.c.h.b16 %v1275
    %v2732 = vunpack.c.l.b16 %v1276
    %v2733 = vunpack.c.h.b16 %v1276
    %v2734 = vunpack.c.l.b16 %v1277
    %v2735 = vunpack.c.h.b16 %v1277
    %v2736 = vunpack.c.l.b16 %v1278
    %v2737 = vunpack.c.h.b16 %v1278
    %v2738 = vunpack.c.l.b16 %v1279
    %v2739 = vunpack.c.h.b16 %v1279
    %v2740 = vunpack.c.l.b16 %v1280
    %v2741 = vunpack.c.h.b16 %v1280
    %v2742 = vunpack.c.l.b16 %v1281
    %v2743 = vunpack.c.h.b16 %v1281
    %v2744 = vunpack.c.l.b16 %v1282
    %v2745 = vunpack.c.h.b16 %v1282
    %v2746 = vunpack.c.l.b16 %v1283
    %v2747 = vunpack.c.h.b16 %v1283
    %v2748 = vunpack.c.l.b16 %v1284
    %v2749 = vunpack.c.h.b16 %v1284
    %v2750 = vunpack.c.l.b16 %v1285
    %v2751 = vunpack.c.h.b16 %v1285
    %v2752 = vunpack.c.l.b16 %v1286
    %v2753 = vunpack.c.h.b16 %v1286
    %v2754 = vunpack.c.l.b16 %v1287
    %v2755 = vunpack.c.h.b16 %v1287
    %v2756 = vunpack.c.l.b16 %v1288
    %v2757 = vunpack.c.h.b16 %v1288
    %v2758 = vunpack.c.l.b16 %v1289
    %v2759 = vunpack.c.h.b16 %v1289
    %v2760 = vunpack.c.l.b16 %v1290
    %v2761 = vunpack.c.h.b16 %v1290
    %v2762 = vunpack.c.l.b16 %v1291
    %v2763 = vunpack.c.h.b16 %v1291
    %v2764 = vunpack.c.l.b16 %v1292
    %v2765 = vunpack.c.h.b16 %v1292
    %v2766 = vunpack.c.l.b16 %v1293
    %v2767 = vunpack.c.h.b16 %v1293
    %v2768 = vunpack.c.l.b16 %v1294
    %v2769 = vunpack.c.h.b16 %v1294
    %v2770 = vunpack.c.l.b16 %v1295
    %v2771 = vunpack.c.h.b16 %v1295
    %v2772 = vunpack.c.l.b16 %v1296
    %v2773 = vunpack.c.h.b16 %v1296
    %v2774 = vunpack.c.l.b16 %v1297
    %v2775 = vunpack.c.h.b16 %v1297
    %v2776 = vunpack.c.l.b16 %v1298
    %v2777 = vunpack.c.h.b16 %v1298
    %v2778 = vunpack.c.l.b16 %v1299
    %v2779 = vunpack.c.h.b16 %v1299
    %v2780 = vunpack.c.l.b16 %v1300
    %v2781 = vunpack.c.h.b16 %v1300
    %v2782 = vunpack.c.l.b16 %v1301
    %v2783 = vunpack.c.h.b16 %v1301
    %v2784 = vunpack.c.l.b16 %v1302
    %v2785 = vunpack.c.h.b16 %v1302
    %v2786 = vunpack.c.l.b16 %v1303
    %v2787 = vunpack.c.h.b16 %v1303
    %v2788 = vunpack.c.l.b16 %v1304
    %v2789 = vunpack.c.h.b16 %v1304
    %v2790 = vunpack.c.l.b16 %v1305
    %v2791 = vunpack.c.h.b16 %v1305
    %v2792 = vunpack.c.l.b16 %v1306
    %v2793 = vunpack.c.h.b16 %v1306
    %v2794 = vunpack.c.l.b16 %v1307
    %v2795 = vunpack.c.h.b16 %v1307
    %v2796 = vunpack.c.l.b16 %v1308
    %v2797 = vunpack.c.h.b16 %v1308
    %v2798 = vunpack.c.l.b16 %v1309
    %v2799 = vunpack.c.h.b16 %v1309
    %v2800 = vunpack.c.l.b16 %v1310
    %v2801 = vunpack.c.h.b16 %v1310
    %v2802 = vunpack.c.l.b16 %v1311
    %v2803 = vunpack.c.h.b16 %v1311
    %v2804 = vunpack.c.l.b16 %v1312
    %v2805 = vunpack.c.h.b16 %v1312
    %v2806 = vunpack.c.l.b16 %v1313
    %v2807 = vunpack.c.h.b16 %v1313
    %v2808 = vpack.c.b16 %v1916, %v1912
    %v2809 = vpack.c.b16 %v1917, %v1913
    %v2810 = vpack.c.b16 %v1918, %v1914
    %v2811 = vpack.c.b16 %v1919, %v1915
    %v2812 = vpack.c.b16 %v1924, %v1920
    %v2813 = vpack.c.b16 %v1925, %v1921
    %v2814 = vpack.c.b16 %v1926, %v1922
    %v2815 = vpack.c.b16 %v1927, %v1923
    %v2816 = vpack.c.b16 %v1932, %v1928
    %v2817 = vpack.c.b16 %v1933, %v1929
    %v2818 = vpack.c.b16 %v1934, %v1930
    %v2819 = vpack.c.b16 %v1935, %v1931
    %v2820 = vpack.c.b16 %v1940, %v1936
    %v2821 = vpack.c.b16 %v1941, %v1937
    %v2822 = vpack.c.b16 %v1942, %v1938
    %v2823 = vpack.c.b16 %v1943, %v1939
    %v2824 = vpack.c.b16 %v1948, %v1944
    %v2825 = vpack.c.b16 %v1949, %v1945
    %v2826 = vpack.c.b16 %v1950, %v1946
    %v2827 = vpack.c.b16 %v1951, %v1947
    %v2828 = vpack.c.b16 %v1956, %v1952
    %v2829 = vpack.c.b16 %v1957, %v1953
    %v2830 = vpack.c.b16 %v1958, %v1954
    %v2831 = vpack.c.b16 %v1959, %v1955
    %v2832 = vpack.c.b16 %v1964, %v1960
    %v2833 = vpack.c.b16 %v1965, %v1961
    %v2834 = vpack.c.b16 %v1966, %v1962
    %v2835 = vpack.c.b16 %v1967, %v1963
    %v2836 = vpack.c.b16 %v1972, %v1968
    %v2837 = vpack.c.b16 %v1973, %v1969
    %v2838 = vpack.c.b16 %v1974, %v1970
    %v2839 = vpack.c.b16 %v1975, %v1971
    %v2840 = vpack.c.b16 %v1980, %v1976
    %v2841 = vpack.c.b16 %v1981, %v1977
    %v2842 = vpack.c.b16 %v1982, %v1978
    %v2843 = vpack.c.b16 %v1983, %v1979
    %v2844 = vpack.c.b16 %v1988, %v1984
    %v2845 = vpack.c.b16 %v1989, %v1985
    %v2846 = vpack.c.b16 %v1990, %v1986
    %v2847 = vpack.c.b16 %v1991, %v1987
    %v2848 = vpack.c.b16 %v1996, %v1992
    %v2849 = vpack.c.b16 %v1997, %v1993
    %v2850 = vpack.c.b16 %v1998, %v1994
    %v2851 = vpack.c.b16 %v1999, %v1995
    %v2852 = vpack.c.b16 %v2004, %v2000
    %v2853 = vpack.c.b16 %v2005, %v2001
    %v2854 = vpack.c.b16 %v2006, %v2002
    %v2855 = vpack.c.b16 %v2007, %v2003
    %v2856 = vpack.c.b16 %v2012, %v2008
    %v2857 = vpack.c.b16 %v2013, %v2009
    %v2858 = vpack.c.b16 %v2014, %v2010
    %v2859 = vpack.c.b16 %v2015, %v2011
    %v2860 = vpack.c.b16 %v2020, %v2016
    %v2861 = vpack.c.b16 %v2021, %v2017
    %v2862 = vpack.c.b16 %v2022, %v2018
    %v2863 = vpack.c.b16 %v2023, %v2019
    %v2864 = vpack.c.b16 %v2028, %v2024
    %v2865 = vpack.c.b16 %v2029, %v2025
    %v2866 = vpack.c.b16 %v2030, %v2026
    %v2867 = vpack.c.b16 %v2031, %v2027
    %v2868 = vpack.c.b16 %v2036, %v2032
    %v2869 = vpack.c.b16 %v2037, %v2033
    %v2870 = vpack.c.b16 %v2038, %v2034
    %v2871 = vpack.c.b16 %v2039, %v2035
    %v2872 = vpack.c.b16 %v2044, %v2040
    %v2873 = vpack.c.b16 %v2045, %v2041
    %v2874 = vpack.c.b16 %v2046, %v2042
    %v2875 = vpack.c.b16 %v2047, %v2043
    %v2876 = vpack.c.b16 %v2052, %v2048
    %v2877 = vpack.c.b16 %v2053, %v2049
    %v2878 = vpack.c.b16 %v2054, %v2050
    %v2879 = vpack.c.b16 %v2055, %v2051
    %v2880 = vpack.c.b16 %v2060, %v2056
    %v2881 = vpack.c.b16 %v2061, %v2057
    %v2882 = vpack.c.b16 %v2062, %v2058
    %v2883 = vpack.c.b16 %v2063, %v2059
    %v2884 = vpack.c.b16 %v2068, %v2064
    %v2885 = vpack.c.b16 %v2069, %v2065
    %v2886 = vpack.c.b16 %v2070, %v2066
    %v2887 = vpack.c.b16 %v2071, %v2067
    %v2888 = vpack.c.b16 %v2076, %v2072
    %v2889 = vpack.c.b16 %v2077, %v2073
    %v2890 = vpack.c.b16 %v2078, %v2074
    %v2891 = vpack.c.b16 %v2079, %v2075
    %v2892 = vpack.c.b16 %v2084, %v2080
    %v2893 = vpack.c.b16 %v2085, %v2081
    %v2894 = vpack.c.b16 %v2086, %v2082
    %v2895 = vpack.c.b16 %v2087, %v2083
    %v2896 = vpack.c.b16 %v2092, %v2088
    %v2897 = vpack.c.b16 %v2093, %v2089
    %v2898 = vpack.c.b16 %v2094, %v2090
    %v2899 = vpack.c.b16 %v2095, %v2091
    %v2900 = vpack.c.b16 %v2100, %v2096
    %v2901 = vpack.c.b16 %v2101, %v2097
    %v2902 = vpack.c.b16 %v2102, %v2098
    %v2903 = vpack.c.b16 %v2103, %v2099
    %v2904 = vpack.c.b16 %v2108, %v2104
    %v2905 = vpack.c.b16 %v2109, %v2105
    %v2906 = vpack.c.b16 %v2110, %v2106
    %v2907 = vpack.c.b16 %v2111, %v2107
    %v2908 = vpack.c.b16 %v2116, %v2112
    %v2909 = vpack.c.b16 %v2117, %v2113
    %v2910 = vpack.c.b16 %v2118, %v2114
    %v2911 = vpack.c.b16 %v2119, %v2115
    %v2912 = vpack.c.b16 %v2124, %v2120
    %v2913 = vpack.c.b16 %v2125, %v2121
    %v2914 = vpack.c.b16 %v2126, %v2122
    %v2915 = vpack.c.b16 %v2127, %v2123
    %v2916 = vpack.c.b16 %v2132, %v2128
    %v2917 = vpack.c.b16 %v2133, %v2129
    %v2918 = vpack.c.b16 %v2134, %v2130
    %v2919 = vpack.c.b16 %v2135, %v2131
    %v2920 = vpack.c.b16 %v2140, %v2136
    %v2921 = vpack.c.b16 %v2141, %v2137
    %v2922 = vpack.c.b16 %v2142, %v2138
    %v2923 = vpack.c.b16 %v2143, %v2139
    %v2924 = vpack.c.b16 %v2148, %v2144
    %v2925 = vpack.c.b16 %v2149, %v2145
    %v2926 = vpack.c.b16 %v2150, %v2146
    %v2927 = vpack.c.b16 %v2151, %v2147
    %v2928 = vpack.c.b16 %v2156, %v2152
    %v2929 = vpack.c.b16 %v2157, %v2153
    %v2930 = vpack.c.b16 %v2158, %v2154
    %v2931 = vpack.c.b16 %v2159, %v2155
    %v2932 = vpack.c.b16 %v2164, %v2160
    %v2933 = vpack.c.b16 %v2165, %v2161
    %v2934 = vpack.c.b16 %v2166, %v2162
    %v2935 = vpack.c.b16 %v2167, %v2163
    %v2936 = vpack.c.b16 %v2172, %v2168
    %v2937 = vpack.c.b16 %v2173, %v2169
    %v2938 = vpack.c.b16 %v2174, %v2170
    %v2939 = vpack.c.b16 %v2175, %v2171
    %v2940 = vpack.c.b16 %v2180, %v2176
    %v2941 = vpack.c.b16 %v2181, %v2177
    %v2942 = vpack.c.b16 %v2182, %v2178
    %v2943 = vpack.c.b16 %v2183, %v2179
    %v2944 = vpack.c.b16 %v2188, %v2184
    %v2945 = vpack.c.b16 %v2189, %v2185
    %v2946 = vpack.c.b16 %v2190, %v2186
    %v2947 = vpack.c.b16 %v2191, %v2187
    %v2948 = vpack.c.b16 %v2196, %v2192
    %v2949 = vpack.c.b16 %v2197, %v2193
    %v2950 = vpack.c.b16 %v2198, %v2194
    %v2951 = vpack.c.b16 %v2199, %v2195
    %v2952 = vpack.c.b16 %v2204, %v2200
    %v2953 = vpack.c.b16 %v2205, %v2201
    %v2954 = vpack.c.b16 %v2206, %v2202
    %v2955 = vpack.c.b16 %v2207, %v2203
    %v2956 = vpack.c.b16 %v2212, %v2208
    %v2957 = vpack.c.b16 %v2213, %v2209
    %v2958 = vpack.c.b16 %v2214, %v2210
    %v2959 = vpack.c.b16 %v2215, %v2211
    %v2960 = vpack.c.b16 %v2220, %v2216
    %v2961 = vpack.c.b16 %v2221, %v2217
    %v2962 = vpack.c.b16 %v2222, %v2218
    %v2963 = vpack.c.b16 %v2223, %v2219
    %v2964 = vpack.c.b16 %v2228, %v2224
    %v2965 = vpack.c.b16 %v2229, %v2225
    %v2966 = vpack.c.b16 %v2230, %v2226
    %v2967 = vpack.c.b16 %v2231, %v2227
    %v2968 = vpack.c.b16 %v2236, %v2232
    %v2969 = vpack.c.b16 %v2237, %v2233
    %v2970 = vpack.c.b16 %v2238, %v2234
    %v2971 = vpack.c.b16 %v2239, %v2235
    %v2972 = vpack.c.b16 %v2244, %v2240
    %v2973 = vpack.c.b16 %v2245, %v2241
    %v2974 = vpack.c.b16 %v2246, %v2242
    %v2975 = vpack.c.b16 %v2247, %v2243
    %v2976 = vpack.c.b16 %v2252, %v2248
    %v2977 = vpack.c.b16 %v2253, %v2249
    %v2978 = vpack.c.b16 %v2254, %v2250
    %v2979 = vpack.c.b16 %v2255, %v2251
    %v2980 = vpack.c.b16 %v2260, %v2256
    %v2981 = vpack.c.b16 %v2261, %v2257
    %v2982 = vpack.c.b16 %v2262, %v2258
    %v2983 = vpack.c.b16 %v2263, %v2259
    %v2984 = vpack.c.b16 %v2268, %v2264
    %v2985 = vpack.c.b16 %v2269, %v2265
    %v2986 = vpack.c.b16 %v2270, %v2266
    %v2987 = vpack.c.b16 %v2271, %v2267
    %v2988 = vpack.c.b16 %v2276, %v2272
    %v2989 = vpack.c.b16 %v2277, %v2273
    %v2990 = vpack.c.b16 %v2278, %v2274
    %v2991 = vpack.c.b16 %v2279, %v2275
    %v2992 = vpack.c.b16 %v2284, %v2280
    %v2993 = vpack.c.b16 %v2285, %v2281
    %v2994 = vpack.c.b16 %v2286, %v2282
    %v2995 = vpack.c.b16 %v2287, %v2283
    %v2996 = vpack.c.b16 %v2292, %v2288
    %v2997 = vpack.c.b16 %v2293, %v2289
    %v2998 = vpack.c.b16 %v2294, %v2290
    %v2999 = vpack.c.b16 %v2295, %v2291
    %v3000 = vpack.c.b16 %v2300, %v2296
    %v3001 = vpack.c.b16 %v2301, %v2297
    %v3002 = vpack.c.b16 %v2302, %v2298
    %v3003 = vpack.c.b16 %v2303, %v2299
    %v3004 = vpack.c.b16 %v2308, %v2304
    %v3005 = vpack.c.b16 %v2309, %v2305
    %v3006 = vpack.c.b16 %v2310, %v2306
    %v3007 = vpack.c.b16 %v2311, %v2307
    %v3008 = vpack.c.b16 %v2316, %v2312
    %v3009 = vpack.c.b16 %v2317, %v2313
    %v3010 = vpack.c.b16 %v2318, %v2314
    %v3011 = vpack.c.b16 %v2319, %v2315
    %v3012 = vpack.c.b16 %v2324, %v2320
    %v3013 = vpack.c.b16 %v2325, %v2321
    %v3014 = vpack.c.b16 %v2326, %v2322
    %v3015 = vpack.c.b16 %v2327, %v2323
    %v3016 = vpack.c.b16 %v2332, %v2328
    %v3017 = vpack.c.b16 %v2333, %v2329
    %v3018 = vpack.c.b16 %v2334, %v2330
    %v3019 = vpack.c.b16 %v2335, %v2331
    %v3020 = vpack.c.b16 %v2340, %v2336
    %v3021 = vpack.c.b16 %v2341, %v2337
    %v3022 = vpack.c.b16 %v2342, %v2338
    %v3023 = vpack.c.b16 %v2343, %v2339
    %v3024 = vpack.c.b16 %v2348, %v2344
    %v3025 = vpack.c.b16 %v2349, %v2345
    %v3026 = vpack.c.b16 %v2350, %v2346
    %v3027 = vpack.c.b16 %v2351, %v2347
    %v3028 = vpack.c.b16 %v2356, %v2352
    %v3029 = vpack.c.b16 %v2357, %v2353
    %v3030 = vpack.c.b16 %v2358, %v2354
    %v3031 = vpack.c.b16 %v2359, %v2355
    %v3032 = vpack.c.b16 %v2364, %v2360
    %v3033 = vpack.c.b16 %v2365, %v2361
    %v3034 = vpack.c.b16 %v2366, %v2362
    %v3035 = vpack.c.b16 %v2367, %v2363
    %v3036 = vpack.c.b16 %v2372, %v2368
    %v3037 = vpack.c.b16 %v2373, %v2369
    %v3038 = vpack.c.b16 %v2374, %v2370
    %v3039 = vpack.c.b16 %v2375, %v2371
    %v3040 = vpack.c.b16 %v2380, %v2376
    %v3041 = vpack.c.b16 %v2381, %v2377
    %v3042 = vpack.c.b16 %v2382, %v2378
    %v3043 = vpack.c.b16 %v2383, %v2379
    %v3044 = vpack.c.b16 %v2388, %v2384
    %v3045 = vpack.c.b16 %v2389, %v2385
    %v3046 = vpack.c.b16 %v2390, %v2386
    %v3047 = vpack.c.b16 %v2391, %v2387
    %v3048 = vpack.c.b16 %v2396, %v2392
    %v3049 = vpack.c.b16 %v2397, %v2393
    %v3050 = vpack.c.b16 %v2398, %v2394
    %v3051 = vpack.c.b16 %v2399, %v2395
    %v3052 = vpack.c.b16 %v2404, %v2400
    %v3053 = vpack.c.b16 %v2405, %v2401
    %v3054 = vpack.c.b16 %v2406, %v2402
    %v3055 = vpack.c.b16 %v2407, %v2403
    %v3056 = vpack.c.b16 %v2412, %v2408
    %v3057 = vpack.c.b16 %v2413, %v2409
    %v3058 = vpack.c.b16 %v2414, %v2410
    %v3059 = vpack.c.b16 %v2415, %v2411
    %v3060 = vpack.c.b16 %v2420, %v2416
    %v3061 = vpack.c.b16 %v2421, %v2417
    %v3062 = vpack.c.b16 %v2422, %v2418
    %v3063 = vpack.c.b16 %v2423, %v2419
    %v3064 = vpack.c.b16 %v2428, %v2424
    %v3065 = vpack.c.b16 %v2429, %v2425
    %v3066 = vpack.c.b16 %v2430, %v2426
    %v3067 = vpack.c.b16 %v2431, %v2427
    %v3068 = vpack.c.b16 %v2436, %v2432
    %v3069 = vpack.c.b16 %v2437, %v2433
    %v3070 = vpack.c.b16 %v2438, %v2434
    %v3071 = vpack.c.b16 %v2439, %v2435
    %v3072 = vpack.c.b16 %v2444, %v2440
    %v3073 = vpack.c.b16 %v2445, %v2441
    %v3074 = vpack.c.b16 %v2446, %v2442
    %v3075 = vpack.c.b16 %v2447, %v2443
    %v3076 = vpack.c.b16 %v2452, %v2448
    %v3077 = vpack.c.b16 %v2453, %v2449
    %v3078 = vpack.c.b16 %v2454, %v2450
    %v3079 = vpack.c.b16 %v2455, %v2451
    %v3080 = vpack.c.b16 %v2460, %v2456
    %v3081 = vpack.c.b16 %v2461, %v2457
    %v3082 = vpack.c.b16 %v2462, %v2458
    %v3083 = vpack.c.b16 %v2463, %v2459
    %v3084 = vpack.c.b16 %v2468, %v2464
    %v3085 = vpack.c.b16 %v2469, %v2465
    %v3086 = vpack.c.b16 %v2470, %v2466
    %v3087 = vpack.c.b16 %v2471, %v2467
    %v3088 = vpack.c.b16 %v2476, %v2472
    %v3089 = vpack.c.b16 %v2477, %v2473
    %v3090 = vpack.c.b16 %v2478, %v2474
    %v3091 = vpack.c.b16 %v2479, %v2475
    %v3092 = vpack.c.b16 %v2484, %v2480
    %v3093 = vpack.c.b16 %v2485, %v2481
    %v3094 = vpack.c.b16 %v2486, %v2482
    %v3095 = vpack.c.b16 %v2487, %v2483
    %v3096 = vpack.c.b16 %v2492, %v2488
    %v3097 = vpack.c.b16 %v2493, %v2489
    %v3098 = vpack.c.b16 %v2494, %v2490
    %v3099 = vpack.c.b16 %v2495, %v2491
    %v3100 = vpack.c.b16 %v2500, %v2496
    %v3101 = vpack.c.b16 %v2501, %v2497
    %v3102 = vpack.c.b16 %v2502, %v2498
    %v3103 = vpack.c.b16 %v2503, %v2499
    %v3104 = vpack.c.b16 %v2508, %v2504
    %v3105 = vpack.c.b16 %v2509, %v2505
    %v3106 = vpack.c.b16 %v2510, %v2506
    %v3107 = vpack.c.b16 %v2511, %v2507
    %v3108 = vpack.c.b16 %v2516, %v2512
    %v3109 = vpack.c.b16 %v2517, %v2513
    %v3110 = vpack.c.b16 %v2518, %v2514
    %v3111 = vpack.c.b16 %v2519, %v2515
    %v3112 = vpack.c.b16 %v2524, %v2520
    %v3113 = vpack.c.b16 %v2525, %v2521
    %v3114 = vpack.c.b16 %v2526, %v2522
    %v3115 = vpack.c.b16 %v2527, %v2523
    %v3116 = vpack.c.b16 %v2532, %v2528
    %v3117 = vpack.c.b16 %v2533, %v2529
    %v3118 = vpack.c.b16 %v2534, %v2530
    %v3119 = vpack.c.b16 %v2535, %v2531
    %v3120 = vpack.c.b16 %v2540, %v2536
    %v3121 = vpack.c.b16 %v2541, %v2537
    %v3122 = vpack.c.b16 %v2542, %v2538
    %v3123 = vpack.c.b16 %v2543, %v2539
    %v3124 = vpack.c.b16 %v2548, %v2544
    %v3125 = vpack.c.b16 %v2549, %v2545
    %v3126 = vpack.c.b16 %v2550, %v2546
    %v3127 = vpack.c.b16 %v2551, %v2547
    %v3128 = vpack.c.b16 %v2556, %v2552
    %v3129 = vpack.c.b16 %v2557, %v2553
    %v3130 = vpack.c.b16 %v2558, %v2554
    %v3131 = vpack.c.b16 %v2559, %v2555
    %v3132 = vpack.c.b16 %v2564, %v2560
    %v3133 = vpack.c.b16 %v2565, %v2561
    %v3134 = vpack.c.b16 %v2566, %v2562
    %v3135 = vpack.c.b16 %v2567, %v2563
    %v3136 = vpack.c.b16 %v2572, %v2568
    %v3137 = vpack.c.b16 %v2573, %v2569
    %v3138 = vpack.c.b16 %v2574, %v2570
    %v3139 = vpack.c.b16 %v2575, %v2571
    %v3140 = vpack.c.b16 %v2580, %v2576
    %v3141 = vpack.c.b16 %v2581, %v2577
    %v3142 = vpack.c.b16 %v2582, %v2578
    %v3143 = vpack.c.b16 %v2583, %v2579
    %v3144 = vpack.c.b16 %v2588, %v2584
    %v3145 = vpack.c.b16 %v2589, %v2585
    %v3146 = vpack.c.b16 %v2590, %v2586
    %v3147 = vpack.c.b16 %v2591, %v2587
    %v3148 = vpack.c.b16 %v2596, %v2592
    %v3149 = vpack.c.b16 %v2597, %v2593
    %v3150 = vpack.c.b16 %v2598, %v2594
    %v3151 = vpack.c.b16 %v2599, %v2595
    %v3152 = vpack.c.b16 %v2604, %v2600
    %v3153 = vpack.c.b16 %v2605, %v2601
    %v3154 = vpack.c.b16 %v2606, %v2602
    %v3155 = vpack.c.b16 %v2607, %v2603
    %v3156 = vpack.c.b16 %v2612, %v2608
    %v3157 = vpack.c.b16 %v2613, %v2609
    %v3158 = vpack.c.b16 %v2614, %v2610
    %v3159 = vpack.c.b16 %v2615, %v2611
    %v3160 = vpack.c.b16 %v2620, %v2616
    %v3161 = vpack.c.b16 %v2621, %v2617
    %v3162 = vpack.c.b16 %v2622, %v2618
    %v3163 = vpack.c.b16 %v2623, %v2619
    %v3164 = vpack.c.b16 %v2628, %v2624
    %v3165 = vpack.c.b16 %v2629, %v2625
    %v3166 = vpack.c.b16 %v2630, %v2626
    %v3167 = vpack.c.b16 %v2631, %v2627
    %v3168 = vpack.c.b16 %v2636, %v2632
    %v3169 = vpack.c.b16 %v2637, %v2633
    %v3170 = vpack.c.b16 %v2638, %v2634
    %v3171 = vpack.c.b16 %v2639, %v2635
    %v3172 = vpack.c.b16 %v2644, %v2640
    %v3173 = vpack.c.b16 %v2645, %v2641
    %v3174 = vpack.c.b16 %v2646, %v2642
    %v3175 = vpack.c.b16 %v2647, %v2643
    %v3176 = vpack.c.b16 %v2652, %v2648
    %v3177 = vpack.c.b16 %v2653, %v2649
    %v3178 = vpack.c.b16 %v2654, %v2650
    %v3179 = vpack.c.b16 %v2655, %v2651
    %v3180 = vpack.c.b16 %v2660, %v2656
    %v3181 = vpack.c.b16 %v2661, %v2657
    %v3182 = vpack.c.b16 %v2662, %v2658
    %v3183 = vpack.c.b16 %v2663, %v2659
    %v3184 = vpack.c.b16 %v2668, %v2664
    %v3185 = vpack.c.b16 %v2669, %v2665
    %v3186 = vpack.c.b16 %v2670, %v2666
    %v3187 = vpack.c.b16 %v2671, %v2667
    %v3188 = vpack.c.b16 %v2676, %v2672
    %v3189 = vpack.c.b16 %v2677, %v2673
    %v3190 = vpack.c.b16 %v2678, %v2674
    %v3191 = vpack.c.b16 %v2679, %v2675
    %v3192 = vpack.c.b16 %v2684, %v2680
    %v3193 = vpack.c.b16 %v2685, %v2681
    %v3194 = vpack.c.b16 %v2686, %v2682
    %v3195 = vpack.c.b16 %v2687, %v2683
    %v3196 = vpack.c.b16 %v2692, %v2688
    %v3197 = vpack.c.b16 %v2693, %v2689
    %v3198 = vpack.c.b16 %v2694, %v2690
    %v3199 = vpack.c.b16 %v2695, %v2691
    %v3200 = vpack.c.b16 %v2700, %v2696
    %v3201 = vpack.c.b16 %v2701, %v2697
    %v3202 = vpack.c.b16 %v2702, %v2698
    %v3203 = vpack.c.b16 %v2703, %v2699
    %v3204 = vpack.c.b16 %v2708, %v2704
    %v3205 = vpack.c.b16 %v2709, %v2705
    %v3206 = vpack.c.b16 %v2710, %v2706
    %v3207 = vpack.c.b16 %v2711, %v2707
    %v3208 = vpack.c.b16 %v2716, %v2712
    %v3209 = vpack.c.b16 %v2717, %v2713
    %v3210 = vpack.c.b16 %v2718, %v2714
    %v3211 = vpack.c.b16 %v2719, %v2715
    %v3212 = vpack.c.b16 %v2724, %v2720
    %v3213 = vpack.c.b16 %v2725, %v2721
    %v3214 = vpack.c.b16 %v2726, %v2722
    %v3215 = vpack.c.b16 %v2727, %v2723
    %v3216 = vpack.c.b16 %v2732, %v2728
    %v3217 = vpack.c.b16 %v2733, %v2729
    %v3218 = vpack.c.b16 %v2734, %v2730
    %v3219 = vpack.c.b16 %v2735, %v2731
    %v3220 = vpack.c.b16 %v2740, %v2736
    %v3221 = vpack.c.b16 %v2741, %v2737
    %v3222 = vpack.c.b16 %v2742, %v2738
    %v3223 = vpack.c.b16 %v2743, %v2739
    %v3224 = vpack.c.b16 %v2748, %v2744
    %v3225 = vpack.c.b16 %v2749, %v2745
    %v3226 = vpack.c.b16 %v2750, %v2746
    %v3227 = vpack.c.b16 %v2751, %v2747
    %v3228 = vpack.c.b16 %v2756, %v2752
    %v3229 = vpack.c.b16 %v2757, %v2753
    %v3230 = vpack.c.b16 %v2758, %v2754
    %v3231 = vpack.c.b16 %v2759, %v2755
    %v3232 = vpack.c.b16 %v2764, %v2760
    %v3233 = vpack.c.b16 %v2765, %v2761
    %v3234 = vpack.c.b16 %v2766, %v2762
    %v3235 = vpack.c.b16 %v2767, %v2763
    %v3236 = vpack.c.b16 %v2772, %v2768
    %v3237 = vpack.c.b16 %v2773, %v2769
    %v3238 = vpack.c.b16 %v2774, %v2770
    %v3239 = vpack.c.b16 %v2775, %v2771
    %v3240 = vpack.c.b16 %v2780, %v2776
    %v3241 = vpack.c.b16 %v2781, %v2777
    %v3242 = vpack.c.b16 %v2782, %v2778
    %v3243 = vpack.c.b16 %v2783, %v2779
    %v3244 = vpack.c.b16 %v2788, %v2784
    %v3245 = vpack.c.b16 %v2789, %v2785
    %v3246 = vpack.c.b16 %v2790, %v2786
    %v3247 = vpack.c.b16 %v2791, %v2787
    %v3248 = vpack.c.b16 %v2796, %v2792
    %v3249 = vpack.c.b16 %v2797, %v2793
    %v3250 = vpack.c.b16 %v2798, %v2794
    %v3251 = vpack.c.b16 %v2799, %v2795
    %v3252 = vpack.c.b16 %v2804, %v2800
    %v3253 = vpack.c.b16 %v2805, %v2801
    %v3254 = vpack.c.b16 %v2806, %v2802
    %v3255 = vpack.c.b16 %v2807, %v2803
    %3704 = vmatpush.bf16.msra.mxu0 %v2836
    %3705 = vmatpush.bf16.msra.mxu0 %v2832
    %3706 = vmatpush.bf16.msra.mxu0 %v2828
    %3707 = vmatpush.bf16.msra.mxu0 %v2824
    %3708 = vmatpush.bf16.msra.mxu0 %v2820
    %3709 = vmatpush.bf16.msra.mxu0 %v2816
    %3710 = vmatpush.bf16.msra.mxu0 %v2812
    %3711 = vmatpush.bf16.msra.mxu0 %v2808
    %3712 = vmatmul.bf16.gmra.mxu0 %v1408
    %v3713 = vpop.f32.mrf.mxu0
    %v3714 = vadd.f32 %v1316, %v3713
    %v3715 = vpop.f32.mrf.mxu0
    %v3716 = vadd.f32 %v1316, %v3715
    %3717 = vmatmul.bf16.gmra.mxu0 %v1422
    %v3718 = vpop.f32.mrf.mxu0
    %v3719 = vadd.f32 %v1316, %v3718
    %v3720 = vpop.f32.mrf.mxu0
    %v3721 = vadd.f32 %v1316, %v3720
    %3722 = vdwg.mxu0
    %3723 = vmatpush.bf16.msra.mxu0 %v2868
    %3724 = vmatpush.bf16.msra.mxu0 %v2864
    %3725 = vmatpush.bf16.msra.mxu0 %v2860
    %3726 = vmatpush.bf16.msra.mxu0 %v2856
    %3727 = vmatpush.bf16.msra.mxu0 %v2852
    %3728 = vmatpush.bf16.msra.mxu0 %v2848
    %3729 = vmatpush.bf16.msra.mxu0 %v2844
    %3730 = vmatpush.bf16.msra.mxu0 %v2840
    %3731 = vmatmul.bf16.gmra.mxu0 %v1409
    %v3732 = vpop.f32.mrf.mxu0
    %v3733 = vadd.f32 %v3714, %v3732
    %v3734 = vpop.f32.mrf.mxu0
    %v3735 = vadd.f32 %v3716, %v3734
    %3736 = vmatmul.bf16.gmra.mxu0 %v1423
    %v3737 = vpop.f32.mrf.mxu0
    %v3738 = vadd.f32 %v3719, %v3737
    %v3739 = vpop.f32.mrf.mxu0
    %v3740 = vadd.f32 %v3721, %v3739
    %3741 = vdwg.mxu0
    %3742 = vmatpush.bf16.msra.mxu0 %v2900
    %3743 = vmatpush.bf16.msra.mxu0 %v2896
    %3744 = vmatpush.bf16.msra.mxu0 %v2892
    %3745 = vmatpush.bf16.msra.mxu0 %v2888
    %3746 = vmatpush.bf16.msra.mxu0 %v2884
    %3747 = vmatpush.bf16.msra.mxu0 %v2880
    %3748 = vmatpush.bf16.msra.mxu0 %v2876
    %3749 = vmatpush.bf16.msra.mxu0 %v2872
    %3750 = vmatmul.bf16.gmra.mxu0 %v1410
    %v3751 = vpop.f32.mrf.mxu0
    %v3752 = vadd.f32 %v3733, %v3751
    %v3753 = vpop.f32.mrf.mxu0
    %v3754 = vadd.f32 %v3735, %v3753
    %3755 = vmatmul.bf16.gmra.mxu0 %v1424
    %v3756 = vpop.f32.mrf.mxu0
    %v3757 = vadd.f32 %v3738, %v3756
    %v3758 = vpop.f32.mrf.mxu0
    %v3759 = vadd.f32 %v3740, %v3758
    %3760 = vdwg.mxu0
    %3761 = vmatpush.bf16.msra.mxu0 %v2932
    %3762 = vmatpush.bf16.msra.mxu0 %v2928
    %3763 = vmatpush.bf16.msra.mxu0 %v2924
    %3764 = vmatpush.bf16.msra.mxu0 %v2920
    %3765 = vmatpush.bf16.msra.mxu0 %v2916
    %3766 = vmatpush.bf16.msra.mxu0 %v2912
    %3767 = vmatpush.bf16.msra.mxu0 %v2908
    %3768 = vmatpush.bf16.msra.mxu0 %v2904
    %3769 = vmatmul.bf16.gmra.mxu0 %v1411
    %v3770 = vpop.f32.mrf.mxu0
    %v3771 = vadd.f32 %v3752, %v3770
    %v3772 = vpop.f32.mrf.mxu0
    %v3773 = vadd.f32 %v3754, %v3772
    %3774 = vmatmul.bf16.gmra.mxu0 %v1425
    %v3775 = vpop.f32.mrf.mxu0
    %v3776 = vadd.f32 %v3757, %v3775
    %v3777 = vpop.f32.mrf.mxu0
    %v3778 = vadd.f32 %v3759, %v3777
    %3779 = vdwg.mxu0
    %3780 = vmatpush.bf16.msra.mxu0 %v2964
    %3781 = vmatpush.bf16.msra.mxu0 %v2960
    %3782 = vmatpush.bf16.msra.mxu0 %v2956
    %3783 = vmatpush.bf16.msra.mxu0 %v2952
    %3784 = vmatpush.bf16.msra.mxu0 %v2948
    %3785 = vmatpush.bf16.msra.mxu0 %v2944
    %3786 = vmatpush.bf16.msra.mxu0 %v2940
    %3787 = vmatpush.bf16.msra.mxu0 %v2936
    %3788 = vmatmul.bf16.gmra.mxu0 %v1412
    %v3789 = vpop.f32.mrf.mxu0
    %v3790 = vadd.f32 %v3771, %v3789
    %v3791 = vpop.f32.mrf.mxu0
    %v3792 = vadd.f32 %v3773, %v3791
    %3793 = vmatmul.bf16.gmra.mxu0 %v1426
    %v3794 = vpop.f32.mrf.mxu0
    %v3795 = vadd.f32 %v3776, %v3794
    %v3796 = vpop.f32.mrf.mxu0
    %v3797 = vadd.f32 %v3778, %v3796
    %3798 = vdwg.mxu0
    %3799 = vmatpush.bf16.msra.mxu0 %v2996
    %3800 = vmatpush.bf16.msra.mxu0 %v2992
    %3801 = vmatpush.bf16.msra.mxu0 %v2988
    %3802 = vmatpush.bf16.msra.mxu0 %v2984
    %3803 = vmatpush.bf16.msra.mxu0 %v2980
    %3804 = vmatpush.bf16.msra.mxu0 %v2976
    %3805 = vmatpush.bf16.msra.mxu0 %v2972
    %3806 = vmatpush.bf16.msra.mxu0 %v2968
    %3807 = vmatmul.bf16.gmra.mxu0 %v1413
    %v3808 = vpop.f32.mrf.mxu0
    %v3809 = vadd.f32 %v3790, %v3808
    %v3810 = vpop.f32.mrf.mxu0
    %v3811 = vadd.f32 %v3792, %v3810
    %3812 = vmatmul.bf16.gmra.mxu0 %v1427
    %v3813 = vpop.f32.mrf.mxu0
    %v3814 = vadd.f32 %v3795, %v3813
    %v3815 = vpop.f32.mrf.mxu0
    %v3816 = vadd.f32 %v3797, %v3815
    %3817 = vdwg.mxu0
    %3818 = vmatpush.bf16.msra.mxu0 %v3028
    %3819 = vmatpush.bf16.msra.mxu0 %v3024
    %3820 = vmatpush.bf16.msra.mxu0 %v3020
    %3821 = vmatpush.bf16.msra.mxu0 %v3016
    %3822 = vmatpush.bf16.msra.mxu0 %v3012
    %3823 = vmatpush.bf16.msra.mxu0 %v3008
    %3824 = vmatpush.bf16.msra.mxu0 %v3004
    %3825 = vmatpush.bf16.msra.mxu0 %v3000
    %3826 = vmatmul.bf16.gmra.mxu0 %v1414
    %v3827 = vpop.f32.mrf.mxu0
    %v3828 = vadd.f32 %v3809, %v3827
    %v3829 = vpop.f32.mrf.mxu0
    %v3830 = vadd.f32 %v3811, %v3829
    %3831 = vmatmul.bf16.gmra.mxu0 %v1428
    %v3832 = vpop.f32.mrf.mxu0
    %v3833 = vadd.f32 %v3814, %v3832
    %v3834 = vpop.f32.mrf.mxu0
    %v3835 = vadd.f32 %v3816, %v3834
    %3836 = vdwg.mxu0
    %3837 = vmatpush.bf16.msra.mxu0 %v3060
    %3838 = vmatpush.bf16.msra.mxu0 %v3056
    %3839 = vmatpush.bf16.msra.mxu0 %v3052
    %3840 = vmatpush.bf16.msra.mxu0 %v3048
    %3841 = vmatpush.bf16.msra.mxu0 %v3044
    %3842 = vmatpush.bf16.msra.mxu0 %v3040
    %3843 = vmatpush.bf16.msra.mxu0 %v3036
    %3844 = vmatpush.bf16.msra.mxu0 %v3032
    %3845 = vmatmul.bf16.gmra.mxu0 %v1415
    %v3846 = vpop.f32.mrf.mxu0
    %v3847 = vadd.f32 %v3828, %v3846
    %v3848 = vpop.f32.mrf.mxu0
    %v3849 = vadd.f32 %v3830, %v3848
    %3850 = vmatmul.bf16.gmra.mxu0 %v1429
    %v3851 = vpop.f32.mrf.mxu0
    %v3852 = vadd.f32 %v3833, %v3851
    %v3853 = vpop.f32.mrf.mxu0
    %v3854 = vadd.f32 %v3835, %v3853
    %3855 = vdwg.mxu0
    %3856 = vmatpush.bf16.msra.mxu0 %v3092
    %3857 = vmatpush.bf16.msra.mxu0 %v3088
    %3858 = vmatpush.bf16.msra.mxu0 %v3084
    %3859 = vmatpush.bf16.msra.mxu0 %v3080
    %3860 = vmatpush.bf16.msra.mxu0 %v3076
    %3861 = vmatpush.bf16.msra.mxu0 %v3072
    %3862 = vmatpush.bf16.msra.mxu0 %v3068
    %3863 = vmatpush.bf16.msra.mxu0 %v3064
    %3864 = vmatmul.bf16.gmra.mxu0 %v1416
    %v3865 = vpop.f32.mrf.mxu0
    %v3866 = vadd.f32 %v3847, %v3865
    %v3867 = vpop.f32.mrf.mxu0
    %v3868 = vadd.f32 %v3849, %v3867
    %3869 = vmatmul.bf16.gmra.mxu0 %v1430
    %v3870 = vpop.f32.mrf.mxu0
    %v3871 = vadd.f32 %v3852, %v3870
    %v3872 = vpop.f32.mrf.mxu0
    %v3873 = vadd.f32 %v3854, %v3872
    %3874 = vdwg.mxu0
    %3875 = vmatpush.bf16.msra.mxu0 %v3124
    %3876 = vmatpush.bf16.msra.mxu0 %v3120
    %3877 = vmatpush.bf16.msra.mxu0 %v3116
    %3878 = vmatpush.bf16.msra.mxu0 %v3112
    %3879 = vmatpush.bf16.msra.mxu0 %v3108
    %3880 = vmatpush.bf16.msra.mxu0 %v3104
    %3881 = vmatpush.bf16.msra.mxu0 %v3100
    %3882 = vmatpush.bf16.msra.mxu0 %v3096
    %3883 = vmatmul.bf16.gmra.mxu0 %v1417
    %v3884 = vpop.f32.mrf.mxu0
    %v3885 = vadd.f32 %v3866, %v3884
    %v3886 = vpop.f32.mrf.mxu0
    %v3887 = vadd.f32 %v3868, %v3886
    %3888 = vmatmul.bf16.gmra.mxu0 %v1431
    %v3889 = vpop.f32.mrf.mxu0
    %v3890 = vadd.f32 %v3871, %v3889
    %v3891 = vpop.f32.mrf.mxu0
    %v3892 = vadd.f32 %v3873, %v3891
    %3893 = vdwg.mxu0
    %3894 = vmatpush.bf16.msra.mxu0 %v3156
    %3895 = vmatpush.bf16.msra.mxu0 %v3152
    %3896 = vmatpush.bf16.msra.mxu0 %v3148
    %3897 = vmatpush.bf16.msra.mxu0 %v3144
    %3898 = vmatpush.bf16.msra.mxu0 %v3140
    %3899 = vmatpush.bf16.msra.mxu0 %v3136
    %3900 = vmatpush.bf16.msra.mxu0 %v3132
    %3901 = vmatpush.bf16.msra.mxu0 %v3128
    %3902 = vmatmul.bf16.gmra.mxu0 %v1418
    %v3903 = vpop.f32.mrf.mxu0
    %v3904 = vadd.f32 %v3885, %v3903
    %v3905 = vpop.f32.mrf.mxu0
    %v3906 = vadd.f32 %v3887, %v3905
    %3907 = vmatmul.bf16.gmra.mxu0 %v1432
    %v3908 = vpop.f32.mrf.mxu0
    %v3909 = vadd.f32 %v3890, %v3908
    %v3910 = vpop.f32.mrf.mxu0
    %v3911 = vadd.f32 %v3892, %v3910
    %3912 = vdwg.mxu0
    %3913 = vmatpush.bf16.msra.mxu0 %v3188
    %3914 = vmatpush.bf16.msra.mxu0 %v3184
    %3915 = vmatpush.bf16.msra.mxu0 %v3180
    %3916 = vmatpush.bf16.msra.mxu0 %v3176
    %3917 = vmatpush.bf16.msra.mxu0 %v3172
    %3918 = vmatpush.bf16.msra.mxu0 %v3168
    %3919 = vmatpush.bf16.msra.mxu0 %v3164
    %3920 = vmatpush.bf16.msra.mxu0 %v3160
    %3921 = vmatmul.bf16.gmra.mxu0 %v1419
    %v3922 = vpop.f32.mrf.mxu0
    %v3923 = vadd.f32 %v3904, %v3922
    %v3924 = vpop.f32.mrf.mxu0
    %v3925 = vadd.f32 %v3906, %v3924
    %3926 = vmatmul.bf16.gmra.mxu0 %v1433
    %v3927 = vpop.f32.mrf.mxu0
    %v3928 = vadd.f32 %v3909, %v3927
    %v3929 = vpop.f32.mrf.mxu0
    %v3930 = vadd.f32 %v3911, %v3929
    %3931 = vdwg.mxu0
    %3932 = vmatpush.bf16.msra.mxu0 %v3220
    %3933 = vmatpush.bf16.msra.mxu0 %v3216
    %3934 = vmatpush.bf16.msra.mxu0 %v3212
    %3935 = vmatpush.bf16.msra.mxu0 %v3208
    %3936 = vmatpush.bf16.msra.mxu0 %v3204
    %3937 = vmatpush.bf16.msra.mxu0 %v3200
    %3938 = vmatpush.bf16.msra.mxu0 %v3196
    %3939 = vmatpush.bf16.msra.mxu0 %v3192
    %3940 = vmatmul.bf16.gmra.mxu0 %v1420
    %v3941 = vpop.f32.mrf.mxu0
    %v3942 = vadd.f32 %v3923, %v3941
    %v3943 = vpop.f32.mrf.mxu0
    %v3944 = vadd.f32 %v3925, %v3943
    %3945 = vmatmul.bf16.gmra.mxu0 %v1434
    %v3946 = vpop.f32.mrf.mxu0
    %v3947 = vadd.f32 %v3928, %v3946
    %v3948 = vpop.f32.mrf.mxu0
    %v3949 = vadd.f32 %v3930, %v3948
    %3950 = vdwg.mxu0
    %3951 = vmatpush.bf16.msra.mxu0 %v3252
    %3952 = vmatpush.bf16.msra.mxu0 %v3248
    %3953 = vmatpush.bf16.msra.mxu0 %v3244
    %3954 = vmatpush.bf16.msra.mxu0 %v3240
    %3955 = vmatpush.bf16.msra.mxu0 %v3236
    %3956 = vmatpush.bf16.msra.mxu0 %v3232
    %3957 = vmatpush.bf16.msra.mxu0 %v3228
    %3958 = vmatpush.bf16.msra.mxu0 %v3224
    %3959 = vmatmul.bf16.gmra.mxu0 %v1421
    %v3960 = vpop.f32.mrf.mxu0
    %v3961 = vadd.f32 %v3942, %v3960
    %v3962 = vpop.f32.mrf.mxu0
    %v3963 = vadd.f32 %v3944, %v3962
    %3964 = vmatmul.bf16.gmra.mxu0 %v1435
    %v3965 = vpop.f32.mrf.mxu0
    %v3966 = vadd.f32 %v3947, %v3965
    %v3967 = vpop.f32.mrf.mxu0
    %v3968 = vadd.f32 %v3949, %v3967
    %3969 = vdwg.mxu0
    %3970 = vmatpush.bf16.msra.mxu0 %v2837
    %3971 = vmatpush.bf16.msra.mxu0 %v2833
    %3972 = vmatpush.bf16.msra.mxu0 %v2829
    %3973 = vmatpush.bf16.msra.mxu0 %v2825
    %3974 = vmatpush.bf16.msra.mxu0 %v2821
    %3975 = vmatpush.bf16.msra.mxu0 %v2817
    %3976 = vmatpush.bf16.msra.mxu0 %v2813
    %3977 = vmatpush.bf16.msra.mxu0 %v2809
    %3978 = vmatmul.bf16.gmra.mxu0 %v1408
    %v3979 = vpop.f32.mrf.mxu0
    %v3980 = vadd.f32 %v1317, %v3979
    %v3981 = vpop.f32.mrf.mxu0
    %v3982 = vadd.f32 %v1317, %v3981
    %3983 = vmatmul.bf16.gmra.mxu0 %v1422
    %v3984 = vpop.f32.mrf.mxu0
    %v3985 = vadd.f32 %v1317, %v3984
    %v3986 = vpop.f32.mrf.mxu0
    %v3987 = vadd.f32 %v1317, %v3986
    %3988 = vdwg.mxu0
    %3989 = vmatpush.bf16.msra.mxu0 %v2869
    %3990 = vmatpush.bf16.msra.mxu0 %v2865
    %3991 = vmatpush.bf16.msra.mxu0 %v2861
    %3992 = vmatpush.bf16.msra.mxu0 %v2857
    %3993 = vmatpush.bf16.msra.mxu0 %v2853
    %3994 = vmatpush.bf16.msra.mxu0 %v2849
    %3995 = vmatpush.bf16.msra.mxu0 %v2845
    %3996 = vmatpush.bf16.msra.mxu0 %v2841
    %3997 = vmatmul.bf16.gmra.mxu0 %v1409
    %v3998 = vpop.f32.mrf.mxu0
    %v3999 = vadd.f32 %v3980, %v3998
    %v4000 = vpop.f32.mrf.mxu0
    %v4001 = vadd.f32 %v3982, %v4000
    %4002 = vmatmul.bf16.gmra.mxu0 %v1423
    %v4003 = vpop.f32.mrf.mxu0
    %v4004 = vadd.f32 %v3985, %v4003
    %v4005 = vpop.f32.mrf.mxu0
    %v4006 = vadd.f32 %v3987, %v4005
    %4007 = vdwg.mxu0
    %4008 = vmatpush.bf16.msra.mxu0 %v2901
    %4009 = vmatpush.bf16.msra.mxu0 %v2897
    %4010 = vmatpush.bf16.msra.mxu0 %v2893
    %4011 = vmatpush.bf16.msra.mxu0 %v2889
    %4012 = vmatpush.bf16.msra.mxu0 %v2885
    %4013 = vmatpush.bf16.msra.mxu0 %v2881
    %4014 = vmatpush.bf16.msra.mxu0 %v2877
    %4015 = vmatpush.bf16.msra.mxu0 %v2873
    %4016 = vmatmul.bf16.gmra.mxu0 %v1410
    %v4017 = vpop.f32.mrf.mxu0
    %v4018 = vadd.f32 %v3999, %v4017
    %v4019 = vpop.f32.mrf.mxu0
    %v4020 = vadd.f32 %v4001, %v4019
    %4021 = vmatmul.bf16.gmra.mxu0 %v1424
    %v4022 = vpop.f32.mrf.mxu0
    %v4023 = vadd.f32 %v4004, %v4022
    %v4024 = vpop.f32.mrf.mxu0
    %v4025 = vadd.f32 %v4006, %v4024
    %4026 = vdwg.mxu0
    %4027 = vmatpush.bf16.msra.mxu0 %v2933
    %4028 = vmatpush.bf16.msra.mxu0 %v2929
    %4029 = vmatpush.bf16.msra.mxu0 %v2925
    %4030 = vmatpush.bf16.msra.mxu0 %v2921
    %4031 = vmatpush.bf16.msra.mxu0 %v2917
    %4032 = vmatpush.bf16.msra.mxu0 %v2913
    %4033 = vmatpush.bf16.msra.mxu0 %v2909
    %4034 = vmatpush.bf16.msra.mxu0 %v2905
    %4035 = vmatmul.bf16.gmra.mxu0 %v1411
    %v4036 = vpop.f32.mrf.mxu0
    %v4037 = vadd.f32 %v4018, %v4036
    %v4038 = vpop.f32.mrf.mxu0
    %v4039 = vadd.f32 %v4020, %v4038
    %4040 = vmatmul.bf16.gmra.mxu0 %v1425
    %v4041 = vpop.f32.mrf.mxu0
    %v4042 = vadd.f32 %v4023, %v4041
    %v4043 = vpop.f32.mrf.mxu0
    %v4044 = vadd.f32 %v4025, %v4043
    %4045 = vdwg.mxu0
    %4046 = vmatpush.bf16.msra.mxu0 %v2965
    %4047 = vmatpush.bf16.msra.mxu0 %v2961
    %4048 = vmatpush.bf16.msra.mxu0 %v2957
    %4049 = vmatpush.bf16.msra.mxu0 %v2953
    %4050 = vmatpush.bf16.msra.mxu0 %v2949
    %4051 = vmatpush.bf16.msra.mxu0 %v2945
    %4052 = vmatpush.bf16.msra.mxu0 %v2941
    %4053 = vmatpush.bf16.msra.mxu0 %v2937
    %4054 = vmatmul.bf16.gmra.mxu0 %v1412
    %v4055 = vpop.f32.mrf.mxu0
    %v4056 = vadd.f32 %v4037, %v4055
    %v4057 = vpop.f32.mrf.mxu0
    %v4058 = vadd.f32 %v4039, %v4057
    %4059 = vmatmul.bf16.gmra.mxu0 %v1426
    %v4060 = vpop.f32.mrf.mxu0
    %v4061 = vadd.f32 %v4042, %v4060
    %v4062 = vpop.f32.mrf.mxu0
    %v4063 = vadd.f32 %v4044, %v4062
    %4064 = vdwg.mxu0
    %4065 = vmatpush.bf16.msra.mxu0 %v2997
    %4066 = vmatpush.bf16.msra.mxu0 %v2993
    %4067 = vmatpush.bf16.msra.mxu0 %v2989
    %4068 = vmatpush.bf16.msra.mxu0 %v2985
    %4069 = vmatpush.bf16.msra.mxu0 %v2981
    %4070 = vmatpush.bf16.msra.mxu0 %v2977
    %4071 = vmatpush.bf16.msra.mxu0 %v2973
    %4072 = vmatpush.bf16.msra.mxu0 %v2969
    %4073 = vmatmul.bf16.gmra.mxu0 %v1413
    %v4074 = vpop.f32.mrf.mxu0
    %v4075 = vadd.f32 %v4056, %v4074
    %v4076 = vpop.f32.mrf.mxu0
    %v4077 = vadd.f32 %v4058, %v4076
    %4078 = vmatmul.bf16.gmra.mxu0 %v1427
    %v4079 = vpop.f32.mrf.mxu0
    %v4080 = vadd.f32 %v4061, %v4079
    %v4081 = vpop.f32.mrf.mxu0
    %v4082 = vadd.f32 %v4063, %v4081
    %4083 = vdwg.mxu0
    %4084 = vmatpush.bf16.msra.mxu0 %v3029
    %4085 = vmatpush.bf16.msra.mxu0 %v3025
    %4086 = vmatpush.bf16.msra.mxu0 %v3021
    %4087 = vmatpush.bf16.msra.mxu0 %v3017
    %4088 = vmatpush.bf16.msra.mxu0 %v3013
    %4089 = vmatpush.bf16.msra.mxu0 %v3009
    %4090 = vmatpush.bf16.msra.mxu0 %v3005
    %4091 = vmatpush.bf16.msra.mxu0 %v3001
    %4092 = vmatmul.bf16.gmra.mxu0 %v1414
    %v4093 = vpop.f32.mrf.mxu0
    %v4094 = vadd.f32 %v4075, %v4093
    %v4095 = vpop.f32.mrf.mxu0
    %v4096 = vadd.f32 %v4077, %v4095
    %4097 = vmatmul.bf16.gmra.mxu0 %v1428
    %v4098 = vpop.f32.mrf.mxu0
    %v4099 = vadd.f32 %v4080, %v4098
    %v4100 = vpop.f32.mrf.mxu0
    %v4101 = vadd.f32 %v4082, %v4100
    %4102 = vdwg.mxu0
    %4103 = vmatpush.bf16.msra.mxu0 %v3061
    %4104 = vmatpush.bf16.msra.mxu0 %v3057
    %4105 = vmatpush.bf16.msra.mxu0 %v3053
    %4106 = vmatpush.bf16.msra.mxu0 %v3049
    %4107 = vmatpush.bf16.msra.mxu0 %v3045
    %4108 = vmatpush.bf16.msra.mxu0 %v3041
    %4109 = vmatpush.bf16.msra.mxu0 %v3037
    %4110 = vmatpush.bf16.msra.mxu0 %v3033
    %4111 = vmatmul.bf16.gmra.mxu0 %v1415
    %v4112 = vpop.f32.mrf.mxu0
    %v4113 = vadd.f32 %v4094, %v4112
    %v4114 = vpop.f32.mrf.mxu0
    %v4115 = vadd.f32 %v4096, %v4114
    %4116 = vmatmul.bf16.gmra.mxu0 %v1429
    %v4117 = vpop.f32.mrf.mxu0
    %v4118 = vadd.f32 %v4099, %v4117
    %v4119 = vpop.f32.mrf.mxu0
    %v4120 = vadd.f32 %v4101, %v4119
    %4121 = vdwg.mxu0
    %4122 = vmatpush.bf16.msra.mxu0 %v3093
    %4123 = vmatpush.bf16.msra.mxu0 %v3089
    %4124 = vmatpush.bf16.msra.mxu0 %v3085
    %4125 = vmatpush.bf16.msra.mxu0 %v3081
    %4126 = vmatpush.bf16.msra.mxu0 %v3077
    %4127 = vmatpush.bf16.msra.mxu0 %v3073
    %4128 = vmatpush.bf16.msra.mxu0 %v3069
    %4129 = vmatpush.bf16.msra.mxu0 %v3065
    %4130 = vmatmul.bf16.gmra.mxu0 %v1416
    %v4131 = vpop.f32.mrf.mxu0
    %v4132 = vadd.f32 %v4113, %v4131
    %v4133 = vpop.f32.mrf.mxu0
    %v4134 = vadd.f32 %v4115, %v4133
    %4135 = vmatmul.bf16.gmra.mxu0 %v1430
    %v4136 = vpop.f32.mrf.mxu0
    %v4137 = vadd.f32 %v4118, %v4136
    %v4138 = vpop.f32.mrf.mxu0
    %v4139 = vadd.f32 %v4120, %v4138
    %4140 = vdwg.mxu0
    %4141 = vmatpush.bf16.msra.mxu0 %v3125
    %4142 = vmatpush.bf16.msra.mxu0 %v3121
    %4143 = vmatpush.bf16.msra.mxu0 %v3117
    %4144 = vmatpush.bf16.msra.mxu0 %v3113
    %4145 = vmatpush.bf16.msra.mxu0 %v3109
    %4146 = vmatpush.bf16.msra.mxu0 %v3105
    %4147 = vmatpush.bf16.msra.mxu0 %v3101
    %4148 = vmatpush.bf16.msra.mxu0 %v3097
    %4149 = vmatmul.bf16.gmra.mxu0 %v1417
    %v4150 = vpop.f32.mrf.mxu0
    %v4151 = vadd.f32 %v4132, %v4150
    %v4152 = vpop.f32.mrf.mxu0
    %v4153 = vadd.f32 %v4134, %v4152
    %4154 = vmatmul.bf16.gmra.mxu0 %v1431
    %v4155 = vpop.f32.mrf.mxu0
    %v4156 = vadd.f32 %v4137, %v4155
    %v4157 = vpop.f32.mrf.mxu0
    %v4158 = vadd.f32 %v4139, %v4157
    %4159 = vdwg.mxu0
    %4160 = vmatpush.bf16.msra.mxu0 %v3157
    %4161 = vmatpush.bf16.msra.mxu0 %v3153
    %4162 = vmatpush.bf16.msra.mxu0 %v3149
    %4163 = vmatpush.bf16.msra.mxu0 %v3145
    %4164 = vmatpush.bf16.msra.mxu0 %v3141
    %4165 = vmatpush.bf16.msra.mxu0 %v3137
    %4166 = vmatpush.bf16.msra.mxu0 %v3133
    %4167 = vmatpush.bf16.msra.mxu0 %v3129
    %4168 = vmatmul.bf16.gmra.mxu0 %v1418
    %v4169 = vpop.f32.mrf.mxu0
    %v4170 = vadd.f32 %v4151, %v4169
    %v4171 = vpop.f32.mrf.mxu0
    %v4172 = vadd.f32 %v4153, %v4171
    %4173 = vmatmul.bf16.gmra.mxu0 %v1432
    %v4174 = vpop.f32.mrf.mxu0
    %v4175 = vadd.f32 %v4156, %v4174
    %v4176 = vpop.f32.mrf.mxu0
    %v4177 = vadd.f32 %v4158, %v4176
    %4178 = vdwg.mxu0
    %4179 = vmatpush.bf16.msra.mxu0 %v3189
    %4180 = vmatpush.bf16.msra.mxu0 %v3185
    %4181 = vmatpush.bf16.msra.mxu0 %v3181
    %4182 = vmatpush.bf16.msra.mxu0 %v3177
    %4183 = vmatpush.bf16.msra.mxu0 %v3173
    %4184 = vmatpush.bf16.msra.mxu0 %v3169
    %4185 = vmatpush.bf16.msra.mxu0 %v3165
    %4186 = vmatpush.bf16.msra.mxu0 %v3161
    %4187 = vmatmul.bf16.gmra.mxu0 %v1419
    %v4188 = vpop.f32.mrf.mxu0
    %v4189 = vadd.f32 %v4170, %v4188
    %v4190 = vpop.f32.mrf.mxu0
    %v4191 = vadd.f32 %v4172, %v4190
    %4192 = vmatmul.bf16.gmra.mxu0 %v1433
    %v4193 = vpop.f32.mrf.mxu0
    %v4194 = vadd.f32 %v4175, %v4193
    %v4195 = vpop.f32.mrf.mxu0
    %v4196 = vadd.f32 %v4177, %v4195
    %4197 = vdwg.mxu0
    %4198 = vmatpush.bf16.msra.mxu0 %v3221
    %4199 = vmatpush.bf16.msra.mxu0 %v3217
    %4200 = vmatpush.bf16.msra.mxu0 %v3213
    %4201 = vmatpush.bf16.msra.mxu0 %v3209
    %4202 = vmatpush.bf16.msra.mxu0 %v3205
    %4203 = vmatpush.bf16.msra.mxu0 %v3201
    %4204 = vmatpush.bf16.msra.mxu0 %v3197
    %4205 = vmatpush.bf16.msra.mxu0 %v3193
    %4206 = vmatmul.bf16.gmra.mxu0 %v1420
    %v4207 = vpop.f32.mrf.mxu0
    %v4208 = vadd.f32 %v4189, %v4207
    %v4209 = vpop.f32.mrf.mxu0
    %v4210 = vadd.f32 %v4191, %v4209
    %4211 = vmatmul.bf16.gmra.mxu0 %v1434
    %v4212 = vpop.f32.mrf.mxu0
    %v4213 = vadd.f32 %v4194, %v4212
    %v4214 = vpop.f32.mrf.mxu0
    %v4215 = vadd.f32 %v4196, %v4214
    %4216 = vdwg.mxu0
    %4217 = vmatpush.bf16.msra.mxu0 %v3253
    %4218 = vmatpush.bf16.msra.mxu0 %v3249
    %4219 = vmatpush.bf16.msra.mxu0 %v3245
    %4220 = vmatpush.bf16.msra.mxu0 %v3241
    %4221 = vmatpush.bf16.msra.mxu0 %v3237
    %4222 = vmatpush.bf16.msra.mxu0 %v3233
    %4223 = vmatpush.bf16.msra.mxu0 %v3229
    %4224 = vmatpush.bf16.msra.mxu0 %v3225
    %4225 = vmatmul.bf16.gmra.mxu0 %v1421
    %v4226 = vpop.f32.mrf.mxu0
    %v4227 = vadd.f32 %v4208, %v4226
    %v4228 = vpop.f32.mrf.mxu0
    %v4229 = vadd.f32 %v4210, %v4228
    %4230 = vmatmul.bf16.gmra.mxu0 %v1435
    %v4231 = vpop.f32.mrf.mxu0
    %v4232 = vadd.f32 %v4213, %v4231
    %v4233 = vpop.f32.mrf.mxu0
    %v4234 = vadd.f32 %v4215, %v4233
    %4235 = vdwg.mxu0
    %4236 = vmatpush.bf16.msra.mxu0 %v2838
    %4237 = vmatpush.bf16.msra.mxu0 %v2834
    %4238 = vmatpush.bf16.msra.mxu0 %v2830
    %4239 = vmatpush.bf16.msra.mxu0 %v2826
    %4240 = vmatpush.bf16.msra.mxu0 %v2822
    %4241 = vmatpush.bf16.msra.mxu0 %v2818
    %4242 = vmatpush.bf16.msra.mxu0 %v2814
    %4243 = vmatpush.bf16.msra.mxu0 %v2810
    %4244 = vmatmul.bf16.gmra.mxu0 %v1408
    %v4245 = vpop.f32.mrf.mxu0
    %v4246 = vadd.f32 %v1318, %v4245
    %v4247 = vpop.f32.mrf.mxu0
    %v4248 = vadd.f32 %v1318, %v4247
    %4249 = vmatmul.bf16.gmra.mxu0 %v1422
    %v4250 = vpop.f32.mrf.mxu0
    %v4251 = vadd.f32 %v1318, %v4250
    %v4252 = vpop.f32.mrf.mxu0
    %v4253 = vadd.f32 %v1318, %v4252
    %4254 = vdwg.mxu0
    %4255 = vmatpush.bf16.msra.mxu0 %v2870
    %4256 = vmatpush.bf16.msra.mxu0 %v2866
    %4257 = vmatpush.bf16.msra.mxu0 %v2862
    %4258 = vmatpush.bf16.msra.mxu0 %v2858
    %4259 = vmatpush.bf16.msra.mxu0 %v2854
    %4260 = vmatpush.bf16.msra.mxu0 %v2850
    %4261 = vmatpush.bf16.msra.mxu0 %v2846
    %4262 = vmatpush.bf16.msra.mxu0 %v2842
    %4263 = vmatmul.bf16.gmra.mxu0 %v1409
    %v4264 = vpop.f32.mrf.mxu0
    %v4265 = vadd.f32 %v4246, %v4264
    %v4266 = vpop.f32.mrf.mxu0
    %v4267 = vadd.f32 %v4248, %v4266
    %4268 = vmatmul.bf16.gmra.mxu0 %v1423
    %v4269 = vpop.f32.mrf.mxu0
    %v4270 = vadd.f32 %v4251, %v4269
    %v4271 = vpop.f32.mrf.mxu0
    %v4272 = vadd.f32 %v4253, %v4271
    %4273 = vdwg.mxu0
    %4274 = vmatpush.bf16.msra.mxu0 %v2902
    %4275 = vmatpush.bf16.msra.mxu0 %v2898
    %4276 = vmatpush.bf16.msra.mxu0 %v2894
    %4277 = vmatpush.bf16.msra.mxu0 %v2890
    %4278 = vmatpush.bf16.msra.mxu0 %v2886
    %4279 = vmatpush.bf16.msra.mxu0 %v2882
    %4280 = vmatpush.bf16.msra.mxu0 %v2878
    %4281 = vmatpush.bf16.msra.mxu0 %v2874
    %4282 = vmatmul.bf16.gmra.mxu0 %v1410
    %v4283 = vpop.f32.mrf.mxu0
    %v4284 = vadd.f32 %v4265, %v4283
    %v4285 = vpop.f32.mrf.mxu0
    %v4286 = vadd.f32 %v4267, %v4285
    %4287 = vmatmul.bf16.gmra.mxu0 %v1424
    %v4288 = vpop.f32.mrf.mxu0
    %v4289 = vadd.f32 %v4270, %v4288
    %v4290 = vpop.f32.mrf.mxu0
    %v4291 = vadd.f32 %v4272, %v4290
    %4292 = vdwg.mxu0
    %4293 = vmatpush.bf16.msra.mxu0 %v2934
    %4294 = vmatpush.bf16.msra.mxu0 %v2930
    %4295 = vmatpush.bf16.msra.mxu0 %v2926
    %4296 = vmatpush.bf16.msra.mxu0 %v2922
    %4297 = vmatpush.bf16.msra.mxu0 %v2918
    %4298 = vmatpush.bf16.msra.mxu0 %v2914
    %4299 = vmatpush.bf16.msra.mxu0 %v2910
    %4300 = vmatpush.bf16.msra.mxu0 %v2906
    %4301 = vmatmul.bf16.gmra.mxu0 %v1411
    %v4302 = vpop.f32.mrf.mxu0
    %v4303 = vadd.f32 %v4284, %v4302
    %v4304 = vpop.f32.mrf.mxu0
    %v4305 = vadd.f32 %v4286, %v4304
    %4306 = vmatmul.bf16.gmra.mxu0 %v1425
    %v4307 = vpop.f32.mrf.mxu0
    %v4308 = vadd.f32 %v4289, %v4307
    %v4309 = vpop.f32.mrf.mxu0
    %v4310 = vadd.f32 %v4291, %v4309
    %4311 = vdwg.mxu0
    %4312 = vmatpush.bf16.msra.mxu0 %v2966
    %4313 = vmatpush.bf16.msra.mxu0 %v2962
    %4314 = vmatpush.bf16.msra.mxu0 %v2958
    %4315 = vmatpush.bf16.msra.mxu0 %v2954
    %4316 = vmatpush.bf16.msra.mxu0 %v2950
    %4317 = vmatpush.bf16.msra.mxu0 %v2946
    %4318 = vmatpush.bf16.msra.mxu0 %v2942
    %4319 = vmatpush.bf16.msra.mxu0 %v2938
    %4320 = vmatmul.bf16.gmra.mxu0 %v1412
    %v4321 = vpop.f32.mrf.mxu0
    %v4322 = vadd.f32 %v4303, %v4321
    %v4323 = vpop.f32.mrf.mxu0
    %v4324 = vadd.f32 %v4305, %v4323
    %4325 = vmatmul.bf16.gmra.mxu0 %v1426
    %v4326 = vpop.f32.mrf.mxu0
    %v4327 = vadd.f32 %v4308, %v4326
    %v4328 = vpop.f32.mrf.mxu0
    %v4329 = vadd.f32 %v4310, %v4328
    %4330 = vdwg.mxu0
    %4331 = vmatpush.bf16.msra.mxu0 %v2998
    %4332 = vmatpush.bf16.msra.mxu0 %v2994
    %4333 = vmatpush.bf16.msra.mxu0 %v2990
    %4334 = vmatpush.bf16.msra.mxu0 %v2986
    %4335 = vmatpush.bf16.msra.mxu0 %v2982
    %4336 = vmatpush.bf16.msra.mxu0 %v2978
    %4337 = vmatpush.bf16.msra.mxu0 %v2974
    %4338 = vmatpush.bf16.msra.mxu0 %v2970
    %4339 = vmatmul.bf16.gmra.mxu0 %v1413
    %v4340 = vpop.f32.mrf.mxu0
    %v4341 = vadd.f32 %v4322, %v4340
    %v4342 = vpop.f32.mrf.mxu0
    %v4343 = vadd.f32 %v4324, %v4342
    %4344 = vmatmul.bf16.gmra.mxu0 %v1427
    %v4345 = vpop.f32.mrf.mxu0
    %v4346 = vadd.f32 %v4327, %v4345
    %v4347 = vpop.f32.mrf.mxu0
    %v4348 = vadd.f32 %v4329, %v4347
    %4349 = vdwg.mxu0
    %4350 = vmatpush.bf16.msra.mxu0 %v3030
    %4351 = vmatpush.bf16.msra.mxu0 %v3026
    %4352 = vmatpush.bf16.msra.mxu0 %v3022
    %4353 = vmatpush.bf16.msra.mxu0 %v3018
    %4354 = vmatpush.bf16.msra.mxu0 %v3014
    %4355 = vmatpush.bf16.msra.mxu0 %v3010
    %4356 = vmatpush.bf16.msra.mxu0 %v3006
    %4357 = vmatpush.bf16.msra.mxu0 %v3002
    %4358 = vmatmul.bf16.gmra.mxu0 %v1414
    %v4359 = vpop.f32.mrf.mxu0
    %v4360 = vadd.f32 %v4341, %v4359
    %v4361 = vpop.f32.mrf.mxu0
    %v4362 = vadd.f32 %v4343, %v4361
    %4363 = vmatmul.bf16.gmra.mxu0 %v1428
    %v4364 = vpop.f32.mrf.mxu0
    %v4365 = vadd.f32 %v4346, %v4364
    %v4366 = vpop.f32.mrf.mxu0
    %v4367 = vadd.f32 %v4348, %v4366
    %4368 = vdwg.mxu0
    %4369 = vmatpush.bf16.msra.mxu0 %v3062
    %4370 = vmatpush.bf16.msra.mxu0 %v3058
    %4371 = vmatpush.bf16.msra.mxu0 %v3054
    %4372 = vmatpush.bf16.msra.mxu0 %v3050
    %4373 = vmatpush.bf16.msra.mxu0 %v3046
    %4374 = vmatpush.bf16.msra.mxu0 %v3042
    %4375 = vmatpush.bf16.msra.mxu0 %v3038
    %4376 = vmatpush.bf16.msra.mxu0 %v3034
    %4377 = vmatmul.bf16.gmra.mxu0 %v1415
    %v4378 = vpop.f32.mrf.mxu0
    %v4379 = vadd.f32 %v4360, %v4378
    %v4380 = vpop.f32.mrf.mxu0
    %v4381 = vadd.f32 %v4362, %v4380
    %4382 = vmatmul.bf16.gmra.mxu0 %v1429
    %v4383 = vpop.f32.mrf.mxu0
    %v4384 = vadd.f32 %v4365, %v4383
    %v4385 = vpop.f32.mrf.mxu0
    %v4386 = vadd.f32 %v4367, %v4385
    %4387 = vdwg.mxu0
    %4388 = vmatpush.bf16.msra.mxu0 %v3094
    %4389 = vmatpush.bf16.msra.mxu0 %v3090
    %4390 = vmatpush.bf16.msra.mxu0 %v3086
    %4391 = vmatpush.bf16.msra.mxu0 %v3082
    %4392 = vmatpush.bf16.msra.mxu0 %v3078
    %4393 = vmatpush.bf16.msra.mxu0 %v3074
    %4394 = vmatpush.bf16.msra.mxu0 %v3070
    %4395 = vmatpush.bf16.msra.mxu0 %v3066
    %4396 = vmatmul.bf16.gmra.mxu0 %v1416
    %v4397 = vpop.f32.mrf.mxu0
    %v4398 = vadd.f32 %v4379, %v4397
    %v4399 = vpop.f32.mrf.mxu0
    %v4400 = vadd.f32 %v4381, %v4399
    %4401 = vmatmul.bf16.gmra.mxu0 %v1430
    %v4402 = vpop.f32.mrf.mxu0
    %v4403 = vadd.f32 %v4384, %v4402
    %v4404 = vpop.f32.mrf.mxu0
    %v4405 = vadd.f32 %v4386, %v4404
    %4406 = vdwg.mxu0
    %4407 = vmatpush.bf16.msra.mxu0 %v3126
    %4408 = vmatpush.bf16.msra.mxu0 %v3122
    %4409 = vmatpush.bf16.msra.mxu0 %v3118
    %4410 = vmatpush.bf16.msra.mxu0 %v3114
    %4411 = vmatpush.bf16.msra.mxu0 %v3110
    %4412 = vmatpush.bf16.msra.mxu0 %v3106
    %4413 = vmatpush.bf16.msra.mxu0 %v3102
    %4414 = vmatpush.bf16.msra.mxu0 %v3098
    %4415 = vmatmul.bf16.gmra.mxu0 %v1417
    %v4416 = vpop.f32.mrf.mxu0
    %v4417 = vadd.f32 %v4398, %v4416
    %v4418 = vpop.f32.mrf.mxu0
    %v4419 = vadd.f32 %v4400, %v4418
    %4420 = vmatmul.bf16.gmra.mxu0 %v1431
    %v4421 = vpop.f32.mrf.mxu0
    %v4422 = vadd.f32 %v4403, %v4421
    %v4423 = vpop.f32.mrf.mxu0
    %v4424 = vadd.f32 %v4405, %v4423
    %4425 = vdwg.mxu0
    %4426 = vmatpush.bf16.msra.mxu0 %v3158
    %4427 = vmatpush.bf16.msra.mxu0 %v3154
    %4428 = vmatpush.bf16.msra.mxu0 %v3150
    %4429 = vmatpush.bf16.msra.mxu0 %v3146
    %4430 = vmatpush.bf16.msra.mxu0 %v3142
    %4431 = vmatpush.bf16.msra.mxu0 %v3138
    %4432 = vmatpush.bf16.msra.mxu0 %v3134
    %4433 = vmatpush.bf16.msra.mxu0 %v3130
    %4434 = vmatmul.bf16.gmra.mxu0 %v1418
    %v4435 = vpop.f32.mrf.mxu0
    %v4436 = vadd.f32 %v4417, %v4435
    %v4437 = vpop.f32.mrf.mxu0
    %v4438 = vadd.f32 %v4419, %v4437
    %4439 = vmatmul.bf16.gmra.mxu0 %v1432
    %v4440 = vpop.f32.mrf.mxu0
    %v4441 = vadd.f32 %v4422, %v4440
    %v4442 = vpop.f32.mrf.mxu0
    %v4443 = vadd.f32 %v4424, %v4442
    %4444 = vdwg.mxu0
    %4445 = vmatpush.bf16.msra.mxu0 %v3190
    %4446 = vmatpush.bf16.msra.mxu0 %v3186
    %4447 = vmatpush.bf16.msra.mxu0 %v3182
    %4448 = vmatpush.bf16.msra.mxu0 %v3178
    %4449 = vmatpush.bf16.msra.mxu0 %v3174
    %4450 = vmatpush.bf16.msra.mxu0 %v3170
    %4451 = vmatpush.bf16.msra.mxu0 %v3166
    %4452 = vmatpush.bf16.msra.mxu0 %v3162
    %4453 = vmatmul.bf16.gmra.mxu0 %v1419
    %v4454 = vpop.f32.mrf.mxu0
    %v4455 = vadd.f32 %v4436, %v4454
    %v4456 = vpop.f32.mrf.mxu0
    %v4457 = vadd.f32 %v4438, %v4456
    %4458 = vmatmul.bf16.gmra.mxu0 %v1433
    %v4459 = vpop.f32.mrf.mxu0
    %v4460 = vadd.f32 %v4441, %v4459
    %v4461 = vpop.f32.mrf.mxu0
    %v4462 = vadd.f32 %v4443, %v4461
    %4463 = vdwg.mxu0
    %4464 = vmatpush.bf16.msra.mxu0 %v3222
    %4465 = vmatpush.bf16.msra.mxu0 %v3218
    %4466 = vmatpush.bf16.msra.mxu0 %v3214
    %4467 = vmatpush.bf16.msra.mxu0 %v3210
    %4468 = vmatpush.bf16.msra.mxu0 %v3206
    %4469 = vmatpush.bf16.msra.mxu0 %v3202
    %4470 = vmatpush.bf16.msra.mxu0 %v3198
    %4471 = vmatpush.bf16.msra.mxu0 %v3194
    %4472 = vmatmul.bf16.gmra.mxu0 %v1420
    %v4473 = vpop.f32.mrf.mxu0
    %v4474 = vadd.f32 %v4455, %v4473
    %v4475 = vpop.f32.mrf.mxu0
    %v4476 = vadd.f32 %v4457, %v4475
    %4477 = vmatmul.bf16.gmra.mxu0 %v1434
    %v4478 = vpop.f32.mrf.mxu0
    %v4479 = vadd.f32 %v4460, %v4478
    %v4480 = vpop.f32.mrf.mxu0
    %v4481 = vadd.f32 %v4462, %v4480
    %4482 = vdwg.mxu0
    %4483 = vmatpush.bf16.msra.mxu0 %v3254
    %4484 = vmatpush.bf16.msra.mxu0 %v3250
    %4485 = vmatpush.bf16.msra.mxu0 %v3246
    %4486 = vmatpush.bf16.msra.mxu0 %v3242
    %4487 = vmatpush.bf16.msra.mxu0 %v3238
    %4488 = vmatpush.bf16.msra.mxu0 %v3234
    %4489 = vmatpush.bf16.msra.mxu0 %v3230
    %4490 = vmatpush.bf16.msra.mxu0 %v3226
    %4491 = vmatmul.bf16.gmra.mxu0 %v1421
    %v4492 = vpop.f32.mrf.mxu0
    %v4493 = vadd.f32 %v4474, %v4492
    %v4494 = vpop.f32.mrf.mxu0
    %v4495 = vadd.f32 %v4476, %v4494
    %4496 = vmatmul.bf16.gmra.mxu0 %v1435
    %v4497 = vpop.f32.mrf.mxu0
    %v4498 = vadd.f32 %v4479, %v4497
    %v4499 = vpop.f32.mrf.mxu0
    %v4500 = vadd.f32 %v4481, %v4499
    %4501 = vdwg.mxu0
    %4502 = vmatpush.bf16.msra.mxu0 %v2839
    %4503 = vmatpush.bf16.msra.mxu0 %v2835
    %4504 = vmatpush.bf16.msra.mxu0 %v2831
    %4505 = vmatpush.bf16.msra.mxu0 %v2827
    %4506 = vmatpush.bf16.msra.mxu0 %v2823
    %4507 = vmatpush.bf16.msra.mxu0 %v2819
    %4508 = vmatpush.bf16.msra.mxu0 %v2815
    %4509 = vmatpush.bf16.msra.mxu0 %v2811
    %4510 = vmatmul.bf16.gmra.mxu0 %v1408
    %v4511 = vpop.f32.mrf.mxu0
    %v4512 = vadd.f32 %v1319, %v4511
    %v4513 = vpop.f32.mrf.mxu0
    %v4514 = vadd.f32 %v1319, %v4513
    %4515 = vmatmul.bf16.gmra.mxu0 %v1422
    %v4516 = vpop.f32.mrf.mxu0
    %v4517 = vadd.f32 %v1319, %v4516
    %v4518 = vpop.f32.mrf.mxu0
    %v4519 = vadd.f32 %v1319, %v4518
    %4520 = vdwg.mxu0
    %4521 = vmatpush.bf16.msra.mxu0 %v2871
    %4522 = vmatpush.bf16.msra.mxu0 %v2867
    %4523 = vmatpush.bf16.msra.mxu0 %v2863
    %4524 = vmatpush.bf16.msra.mxu0 %v2859
    %4525 = vmatpush.bf16.msra.mxu0 %v2855
    %4526 = vmatpush.bf16.msra.mxu0 %v2851
    %4527 = vmatpush.bf16.msra.mxu0 %v2847
    %4528 = vmatpush.bf16.msra.mxu0 %v2843
    %4529 = vmatmul.bf16.gmra.mxu0 %v1409
    %v4530 = vpop.f32.mrf.mxu0
    %v4531 = vadd.f32 %v4512, %v4530
    %v4532 = vpop.f32.mrf.mxu0
    %v4533 = vadd.f32 %v4514, %v4532
    %4534 = vmatmul.bf16.gmra.mxu0 %v1423
    %v4535 = vpop.f32.mrf.mxu0
    %v4536 = vadd.f32 %v4517, %v4535
    %v4537 = vpop.f32.mrf.mxu0
    %v4538 = vadd.f32 %v4519, %v4537
    %4539 = vdwg.mxu0
    %4540 = vmatpush.bf16.msra.mxu0 %v2903
    %4541 = vmatpush.bf16.msra.mxu0 %v2899
    %4542 = vmatpush.bf16.msra.mxu0 %v2895
    %4543 = vmatpush.bf16.msra.mxu0 %v2891
    %4544 = vmatpush.bf16.msra.mxu0 %v2887
    %4545 = vmatpush.bf16.msra.mxu0 %v2883
    %4546 = vmatpush.bf16.msra.mxu0 %v2879
    %4547 = vmatpush.bf16.msra.mxu0 %v2875
    %4548 = vmatmul.bf16.gmra.mxu0 %v1410
    %v4549 = vpop.f32.mrf.mxu0
    %v4550 = vadd.f32 %v4531, %v4549
    %v4551 = vpop.f32.mrf.mxu0
    %v4552 = vadd.f32 %v4533, %v4551
    %4553 = vmatmul.bf16.gmra.mxu0 %v1424
    %v4554 = vpop.f32.mrf.mxu0
    %v4555 = vadd.f32 %v4536, %v4554
    %v4556 = vpop.f32.mrf.mxu0
    %v4557 = vadd.f32 %v4538, %v4556
    %4558 = vdwg.mxu0
    %4559 = vmatpush.bf16.msra.mxu0 %v2935
    %4560 = vmatpush.bf16.msra.mxu0 %v2931
    %4561 = vmatpush.bf16.msra.mxu0 %v2927
    %4562 = vmatpush.bf16.msra.mxu0 %v2923
    %4563 = vmatpush.bf16.msra.mxu0 %v2919
    %4564 = vmatpush.bf16.msra.mxu0 %v2915
    %4565 = vmatpush.bf16.msra.mxu0 %v2911
    %4566 = vmatpush.bf16.msra.mxu0 %v2907
    %4567 = vmatmul.bf16.gmra.mxu0 %v1411
    %v4568 = vpop.f32.mrf.mxu0
    %v4569 = vadd.f32 %v4550, %v4568
    %v4570 = vpop.f32.mrf.mxu0
    %v4571 = vadd.f32 %v4552, %v4570
    %4572 = vmatmul.bf16.gmra.mxu0 %v1425
    %v4573 = vpop.f32.mrf.mxu0
    %v4574 = vadd.f32 %v4555, %v4573
    %v4575 = vpop.f32.mrf.mxu0
    %v4576 = vadd.f32 %v4557, %v4575
    %4577 = vdwg.mxu0
    %4578 = vmatpush.bf16.msra.mxu0 %v2967
    %4579 = vmatpush.bf16.msra.mxu0 %v2963
    %4580 = vmatpush.bf16.msra.mxu0 %v2959
    %4581 = vmatpush.bf16.msra.mxu0 %v2955
    %4582 = vmatpush.bf16.msra.mxu0 %v2951
    %4583 = vmatpush.bf16.msra.mxu0 %v2947
    %4584 = vmatpush.bf16.msra.mxu0 %v2943
    %4585 = vmatpush.bf16.msra.mxu0 %v2939
    %4586 = vmatmul.bf16.gmra.mxu0 %v1412
    %v4587 = vpop.f32.mrf.mxu0
    %v4588 = vadd.f32 %v4569, %v4587
    %v4589 = vpop.f32.mrf.mxu0
    %v4590 = vadd.f32 %v4571, %v4589
    %4591 = vmatmul.bf16.gmra.mxu0 %v1426
    %v4592 = vpop.f32.mrf.mxu0
    %v4593 = vadd.f32 %v4574, %v4592
    %v4594 = vpop.f32.mrf.mxu0
    %v4595 = vadd.f32 %v4576, %v4594
    %4596 = vdwg.mxu0
    %4597 = vmatpush.bf16.msra.mxu0 %v2999
    %4598 = vmatpush.bf16.msra.mxu0 %v2995
    %4599 = vmatpush.bf16.msra.mxu0 %v2991
    %4600 = vmatpush.bf16.msra.mxu0 %v2987
    %4601 = vmatpush.bf16.msra.mxu0 %v2983
    %4602 = vmatpush.bf16.msra.mxu0 %v2979
    %4603 = vmatpush.bf16.msra.mxu0 %v2975
    %4604 = vmatpush.bf16.msra.mxu0 %v2971
    %4605 = vmatmul.bf16.gmra.mxu0 %v1413
    %v4606 = vpop.f32.mrf.mxu0
    %v4607 = vadd.f32 %v4588, %v4606
    %v4608 = vpop.f32.mrf.mxu0
    %v4609 = vadd.f32 %v4590, %v4608
    %4610 = vmatmul.bf16.gmra.mxu0 %v1427
    %v4611 = vpop.f32.mrf.mxu0
    %v4612 = vadd.f32 %v4593, %v4611
    %v4613 = vpop.f32.mrf.mxu0
    %v4614 = vadd.f32 %v4595, %v4613
    %4615 = vdwg.mxu0
    %4616 = vmatpush.bf16.msra.mxu0 %v3031
    %4617 = vmatpush.bf16.msra.mxu0 %v3027
    %4618 = vmatpush.bf16.msra.mxu0 %v3023
    %4619 = vmatpush.bf16.msra.mxu0 %v3019
    %4620 = vmatpush.bf16.msra.mxu0 %v3015
    %4621 = vmatpush.bf16.msra.mxu0 %v3011
    %4622 = vmatpush.bf16.msra.mxu0 %v3007
    %4623 = vmatpush.bf16.msra.mxu0 %v3003
    %4624 = vmatmul.bf16.gmra.mxu0 %v1414
    %v4625 = vpop.f32.mrf.mxu0
    %v4626 = vadd.f32 %v4607, %v4625
    %v4627 = vpop.f32.mrf.mxu0
    %v4628 = vadd.f32 %v4609, %v4627
    %4629 = vmatmul.bf16.gmra.mxu0 %v1428
    %v4630 = vpop.f32.mrf.mxu0
    %v4631 = vadd.f32 %v4612, %v4630
    %v4632 = vpop.f32.mrf.mxu0
    %v4633 = vadd.f32 %v4614, %v4632
    %4634 = vdwg.mxu0
    %4635 = vmatpush.bf16.msra.mxu0 %v3063
    %4636 = vmatpush.bf16.msra.mxu0 %v3059
    %4637 = vmatpush.bf16.msra.mxu0 %v3055
    %4638 = vmatpush.bf16.msra.mxu0 %v3051
    %4639 = vmatpush.bf16.msra.mxu0 %v3047
    %4640 = vmatpush.bf16.msra.mxu0 %v3043
    %4641 = vmatpush.bf16.msra.mxu0 %v3039
    %4642 = vmatpush.bf16.msra.mxu0 %v3035
    %4643 = vmatmul.bf16.gmra.mxu0 %v1415
    %v4644 = vpop.f32.mrf.mxu0
    %v4645 = vadd.f32 %v4626, %v4644
    %v4646 = vpop.f32.mrf.mxu0
    %v4647 = vadd.f32 %v4628, %v4646
    %4648 = vmatmul.bf16.gmra.mxu0 %v1429
    %v4649 = vpop.f32.mrf.mxu0
    %v4650 = vadd.f32 %v4631, %v4649
    %v4651 = vpop.f32.mrf.mxu0
    %v4652 = vadd.f32 %v4633, %v4651
    %4653 = vdwg.mxu0
    %4654 = vmatpush.bf16.msra.mxu0 %v3095
    %4655 = vmatpush.bf16.msra.mxu0 %v3091
    %4656 = vmatpush.bf16.msra.mxu0 %v3087
    %4657 = vmatpush.bf16.msra.mxu0 %v3083
    %4658 = vmatpush.bf16.msra.mxu0 %v3079
    %4659 = vmatpush.bf16.msra.mxu0 %v3075
    %4660 = vmatpush.bf16.msra.mxu0 %v3071
    %4661 = vmatpush.bf16.msra.mxu0 %v3067
    %4662 = vmatmul.bf16.gmra.mxu0 %v1416
    %v4663 = vpop.f32.mrf.mxu0
    %v4664 = vadd.f32 %v4645, %v4663
    %v4665 = vpop.f32.mrf.mxu0
    %v4666 = vadd.f32 %v4647, %v4665
    %4667 = vmatmul.bf16.gmra.mxu0 %v1430
    %v4668 = vpop.f32.mrf.mxu0
    %v4669 = vadd.f32 %v4650, %v4668
    %v4670 = vpop.f32.mrf.mxu0
    %v4671 = vadd.f32 %v4652, %v4670
    %4672 = vdwg.mxu0
    %4673 = vmatpush.bf16.msra.mxu0 %v3127
    %4674 = vmatpush.bf16.msra.mxu0 %v3123
    %4675 = vmatpush.bf16.msra.mxu0 %v3119
    %4676 = vmatpush.bf16.msra.mxu0 %v3115
    %4677 = vmatpush.bf16.msra.mxu0 %v3111
    %4678 = vmatpush.bf16.msra.mxu0 %v3107
    %4679 = vmatpush.bf16.msra.mxu0 %v3103
    %4680 = vmatpush.bf16.msra.mxu0 %v3099
    %4681 = vmatmul.bf16.gmra.mxu0 %v1417
    %v4682 = vpop.f32.mrf.mxu0
    %v4683 = vadd.f32 %v4664, %v4682
    %v4684 = vpop.f32.mrf.mxu0
    %v4685 = vadd.f32 %v4666, %v4684
    %4686 = vmatmul.bf16.gmra.mxu0 %v1431
    %v4687 = vpop.f32.mrf.mxu0
    %v4688 = vadd.f32 %v4669, %v4687
    %v4689 = vpop.f32.mrf.mxu0
    %v4690 = vadd.f32 %v4671, %v4689
    %4691 = vdwg.mxu0
    %4692 = vmatpush.bf16.msra.mxu0 %v3159
    %4693 = vmatpush.bf16.msra.mxu0 %v3155
    %4694 = vmatpush.bf16.msra.mxu0 %v3151
    %4695 = vmatpush.bf16.msra.mxu0 %v3147
    %4696 = vmatpush.bf16.msra.mxu0 %v3143
    %4697 = vmatpush.bf16.msra.mxu0 %v3139
    %4698 = vmatpush.bf16.msra.mxu0 %v3135
    %4699 = vmatpush.bf16.msra.mxu0 %v3131
    %4700 = vmatmul.bf16.gmra.mxu0 %v1418
    %v4701 = vpop.f32.mrf.mxu0
    %v4702 = vadd.f32 %v4683, %v4701
    %v4703 = vpop.f32.mrf.mxu0
    %v4704 = vadd.f32 %v4685, %v4703
    %4705 = vmatmul.bf16.gmra.mxu0 %v1432
    %v4706 = vpop.f32.mrf.mxu0
    %v4707 = vadd.f32 %v4688, %v4706
    %v4708 = vpop.f32.mrf.mxu0
    %v4709 = vadd.f32 %v4690, %v4708
    %4710 = vdwg.mxu0
    %4711 = vmatpush.bf16.msra.mxu0 %v3191
    %4712 = vmatpush.bf16.msra.mxu0 %v3187
    %4713 = vmatpush.bf16.msra.mxu0 %v3183
    %4714 = vmatpush.bf16.msra.mxu0 %v3179
    %4715 = vmatpush.bf16.msra.mxu0 %v3175
    %4716 = vmatpush.bf16.msra.mxu0 %v3171
    %4717 = vmatpush.bf16.msra.mxu0 %v3167
    %4718 = vmatpush.bf16.msra.mxu0 %v3163
    %4719 = vmatmul.bf16.gmra.mxu0 %v1419
    %v4720 = vpop.f32.mrf.mxu0
    %v4721 = vadd.f32 %v4702, %v4720
    %v4722 = vpop.f32.mrf.mxu0
    %v4723 = vadd.f32 %v4704, %v4722
    %4724 = vmatmul.bf16.gmra.mxu0 %v1433
    %v4725 = vpop.f32.mrf.mxu0
    %v4726 = vadd.f32 %v4707, %v4725
    %v4727 = vpop.f32.mrf.mxu0
    %v4728 = vadd.f32 %v4709, %v4727
    %4729 = vdwg.mxu0
    %4730 = vmatpush.bf16.msra.mxu0 %v3223
    %4731 = vmatpush.bf16.msra.mxu0 %v3219
    %4732 = vmatpush.bf16.msra.mxu0 %v3215
    %4733 = vmatpush.bf16.msra.mxu0 %v3211
    %4734 = vmatpush.bf16.msra.mxu0 %v3207
    %4735 = vmatpush.bf16.msra.mxu0 %v3203
    %4736 = vmatpush.bf16.msra.mxu0 %v3199
    %4737 = vmatpush.bf16.msra.mxu0 %v3195
    %4738 = vmatmul.bf16.gmra.mxu0 %v1420
    %v4739 = vpop.f32.mrf.mxu0
    %v4740 = vadd.f32 %v4721, %v4739
    %v4741 = vpop.f32.mrf.mxu0
    %v4742 = vadd.f32 %v4723, %v4741
    %4743 = vmatmul.bf16.gmra.mxu0 %v1434
    %v4744 = vpop.f32.mrf.mxu0
    %v4745 = vadd.f32 %v4726, %v4744
    %v4746 = vpop.f32.mrf.mxu0
    %v4747 = vadd.f32 %v4728, %v4746
    %4748 = vdwg.mxu0
    %4749 = vmatpush.bf16.msra.mxu0 %v3255
    %4750 = vmatpush.bf16.msra.mxu0 %v3251
    %4751 = vmatpush.bf16.msra.mxu0 %v3247
    %4752 = vmatpush.bf16.msra.mxu0 %v3243
    %4753 = vmatpush.bf16.msra.mxu0 %v3239
    %4754 = vmatpush.bf16.msra.mxu0 %v3235
    %4755 = vmatpush.bf16.msra.mxu0 %v3231
    %4756 = vmatpush.bf16.msra.mxu0 %v3227
    %4757 = vmatmul.bf16.gmra.mxu0 %v1421
    %v4758 = vpop.f32.mrf.mxu0
    %v4759 = vadd.f32 %v4740, %v4758
    %v4760 = vpop.f32.mrf.mxu0
    %v4761 = vadd.f32 %v4742, %v4760
    %4762 = vmatmul.bf16.gmra.mxu0 %v1435
    %v4763 = vpop.f32.mrf.mxu0
    %v4764 = vadd.f32 %v4745, %v4763
    %v4765 = vpop.f32.mrf.mxu0
    %v4766 = vadd.f32 %v4747, %v4765
    %4767 = vdwg.mxu0
    %4768 = vst [vmem:[%s4] sm:$0xff] %v3961
    %4769 = vst [vmem:[%s4 + $0x8] sm:$0xff] %v4227
    %4770 = vst [vmem:[%s4 + $0x10] sm:$0xff] %v4493
    %4771 = vst [vmem:[%s4 + $0x18] sm:$0xff] %v4759
    %4772 = vst [vmem:[%s4 + $0x20] sm:$0xff] %v3963
    %4773 = vst [vmem:[%s4 + $0x28] sm:$0xff] %v4229
    %4774 = vst [vmem:[%s4 + $0x30] sm:$0xff] %v4495
    %4775 = vst [vmem:[%s4 + $0x38] sm:$0xff] %v4761
    %4776 = vst [vmem:[%s4 + $0x40] sm:$0xff] %v3966
    %4777 = vst [vmem:[%s4 + $0x48] sm:$0xff] %v4232
    %4778 = vst [vmem:[%s4 + $0x50] sm:$0xff] %v4498
    %4779 = vst [vmem:[%s4 + $0x58] sm:$0xff] %v4764
    %4780 = vst [vmem:[%s4 + $0x60] sm:$0xff] %v3968
    %4781 = vst [vmem:[%s4 + $0x68] sm:$0xff] %v4234
    %4782 = vst [vmem:[%s4 + $0x70] sm:$0xff] %v4500
    %4783 = vst [vmem:[%s4 + $0x78] sm:$0xff] %v4766
    // Predicated region
    $region14: #{model_forward.2} parent=1 // pred_check
      _
    $region15: #{model_forward.2} parent=1 // pred_check_branch
      %4785 = sbr.rel (0) target = $region17
    $region16: #{model_forward.2} parent=1 // pred_region
      _
    $region17: #{model_forward.2} parent=1 // pred_fallthru
      _
    // Predicated region
    $region18: #{model_forward.2} parent=1 // pred_check
      _
    $region19: #{model_forward.2} parent=1 // pred_check_branch
      %4787 = sbr.rel (0) target = $region21
    $region20: #{model_forward.2} parent=1 // pred_region
      _
    $region21: #{model_forward.2} parent=1 // pred_fallthru
      _

</llo_original>
